<compile_context>
chip_gen: v7x
topology: tpu7x:2x2x1
jax: 0.10.0
libtpu: 0.0.40
codegen_flags: <defaults>
</compile_context>

<pallas_src>
import math
from functools import partial

import jax
import jax.numpy as jnp
from jax import lax
from jax.experimental import pallas as pl
from jax.experimental.pallas import tpu as pltpu

# ---------------- model config (small, consistent with ModelArgs) -------------
DIM = 64
N_HEADS = 4
N_KV_HEADS = 2               # exercises repeat_kv (n_rep = 2)
HEAD_DIM = DIM // N_HEADS    # 16
N_LAYERS = 2
VOCAB = 256
MULTIPLE_OF = 32
MAX_SEQ = 16
NORM_EPS = 1e-5
N_REP = N_HEADS // N_KV_HEADS

BATCH = 2
SEQ = 8

Q_DIM = N_HEADS * HEAD_DIM       # 64
KV_DIM = N_KV_HEADS * HEAD_DIM   # 32
QKV_DIM = Q_DIM + 2 * KV_DIM     # 128 (lane-dense fused projection width)


def _ffn_hidden(dim, multiple_of):
    hidden = 4 * dim
    hidden = int(2 * hidden / 3)
    return multiple_of * ((hidden + multiple_of - 1) // multiple_of)


HIDDEN = _ffn_hidden(DIM, MULTIPLE_OF)  # 192


# ---------------- in-kernel helpers -------------------------------------------
def _rmsnorm(x, w, eps):
    # x: (M, D) f32, w: (1, D) f32
    ms = jnp.mean(x * x, axis=-1, keepdims=True)
    return x * lax.rsqrt(ms + eps) * w


def _rope_fused(x, cos, sina, sinb):
    # x: (M, W) f32 with interleaved (real, imag) pairs along lanes; heads are
    # concatenated along lanes.  sinA is zero at odd lane indices and sinB is
    # zero at even lane indices, so the circular wrap of the lane rolls across
    # head (and slab) boundaries is multiplied by exactly zero.
    #   out[i] = x[i]*cos[i] + x[i+1]*sinA[i] + x[i-1]*sinB[i]
    w = x.shape[-1]
    left = pltpu.roll(x, w - 1, axis=1)    # left[i]  = x[(i + 1) mod w]
    right = pltpu.roll(x, 1, axis=1)       # right[i] = x[(i - 1) mod w]
    return x * cos + left * sina + right * sinb


# ---------------- fused whole-model kernel -------------------------------------
def fused_transformer_kernel(
        x_ref, cosq_ref, sinaq_ref, sinbq_ref, cosk_ref, sinak_ref, sinbk_ref,
        mask_ref,
        anorm_ref, wqkv_ref, wo_ref,
        fnorm_ref, w1_ref, w2_ref, w3_ref,
        onorm_ref, wout_ref,
        logits_ref,
        *, n_layers, n_heads, n_kv_heads, head_dim, eps, batch, seq):
    n_rep = n_heads // n_kv_heads
    q_dim = n_heads * head_dim
    kv_dim = n_kv_heads * head_dim

    h = x_ref[...]                               # (M, D) f32 residual stream
    mask = mask_ref[...]                         # (M, M) block-diag causal additive
    cosq, sinaq, sinbq = cosq_ref[...], sinaq_ref[...], sinbq_ref[...]
    cosk, sinak, sinbk = cosk_ref[...], sinak_ref[...], sinbk_ref[...]

    for l in range(n_layers):                    # fully unrolled, weights VMEM-resident
        # ---------------- attention sub-block ----------------
        xb = _rmsnorm(h, anorm_ref[l], eps).astype(jnp.bfloat16)
        # single lane-dense fused QKV projection: (M, D) x (D, 128) -> (M, 128)
        qkv = jnp.dot(xb, wqkv_ref[l], preferred_element_type=jnp.float32)
        # RoPE in the fused-lane layout (q pre-scaled by 1/sqrt(hd) via wq)
        q = _rope_fused(qkv[:, :q_dim], cosq, sinaq, sinbq)                 # (M, 64)
        k = _rope_fused(qkv[:, q_dim:q_dim + kv_dim], cosk, sinak, sinbk)   # (M, 32)
        v = qkv[:, q_dim + kv_dim:]                                         # (M, 32)

        qb = q.astype(jnp.bfloat16)
        kb = k.astype(jnp.bfloat16)
        vb = v.astype(jnp.bfloat16)
        k_heads = [kb[:, j * head_dim:(j + 1) * head_dim] for j in range(n_kv_heads)]
        v_heads = [vb[:, j * head_dim:(j + 1) * head_dim] for j in range(n_kv_heads)]

        o_parts = []
        for hh in range(n_heads):
            j = hh // n_rep                       # GQA repeat_interleave of kv heads
            qh = qb[:, hh * head_dim:(hh + 1) * head_dim]
            s = lax.dot_general(qh, k_heads[j], (((1,), (1,)), ((), ())),
                                preferred_element_type=jnp.float32)         # (M, M)
            s = s + mask
            s = s - jnp.max(s, axis=-1, keepdims=True)
            p = jnp.exp(s)
            p = p * pl.reciprocal(jnp.sum(p, axis=-1, keepdims=True), approx=True)
            o_parts.append(jnp.dot(p.astype(jnp.bfloat16), v_heads[j],
                                   preferred_element_type=jnp.float32))     # (M, hd)
        o = jnp.concatenate(o_parts, axis=-1).astype(jnp.bfloat16)          # (M, 64)
        # fused output projection: (M, H*hd) x (H*hd, D)
        h = h + jnp.dot(o, wo_ref[l], preferred_element_type=jnp.float32)

        # ---------------- SwiGLU feed-forward sub-block ----------------
        hb = _rmsnorm(h, fnorm_ref[l], eps).astype(jnp.bfloat16)
        a = jnp.dot(hb, w1_ref[l], preferred_element_type=jnp.float32)      # (M, HIDDEN)
        g = jnp.dot(hb, w3_ref[l], preferred_element_type=jnp.float32)      # (M, HIDDEN)
        ff_in = (a * jax.nn.sigmoid(a) * g).astype(jnp.bfloat16)
        h = h + jnp.dot(ff_in, w2_ref[l], preferred_element_type=jnp.float32)

    # ------- final RMSNorm + tied logits, last position of each sequence only -------
    last = jnp.concatenate(
        [h[b * seq + seq - 1: b * seq + seq, :] for b in range(batch)], axis=0)  # (B, D)
    hf = _rmsnorm(last, onorm_ref[...], eps).astype(jnp.bfloat16)
    logits_ref[...] = jnp.dot(hf, wout_ref[...],
                              preferred_element_type=jnp.float32)            # (B, V)


def run_fused(h0, cosq, sinaq, sinbq, cosk, sinak, sinbk, mask, params, *, batch, seq):
    kernel = partial(fused_transformer_kernel,
                     n_layers=N_LAYERS, n_heads=N_HEADS, n_kv_heads=N_KV_HEADS,
                     head_dim=HEAD_DIM, eps=NORM_EPS, batch=batch, seq=seq)
    args = (h0, cosq, sinaq, sinbq, cosk, sinak, sinbk, mask,
            params["attn_norm"], params["wqkv"], params["wo"],
            params["ffn_norm"], params["w1"], params["w2"], params["w3"],
            params["norm"], params["wout"])
    vocab = params["wout"].shape[1]
    return pl.pallas_call(
        kernel,
        out_shape=jax.ShapeDtypeStruct((batch, vocab), jnp.float32),
        in_specs=[pl.BlockSpec(memory_space=pltpu.MemorySpace.VMEM) for _ in args],
        out_specs=pl.BlockSpec(memory_space=pltpu.MemorySpace.VMEM),
    )(*args)


# ---------------- glue: params, freqs, full forward ----------------------------
def precompute_freqs_cis(head_dim, end, theta=10000.0):
    inv = 1.0 / (theta ** (jnp.arange(0, head_dim, 2)[: head_dim // 2]
                           .astype(jnp.float32) / head_dim))
    t = jnp.arange(end, dtype=jnp.float32)
    freqs = jnp.outer(t, inv)
    return jnp.cos(freqs), jnp.sin(freqs)


def init_params(key):
    std = 0.02
    std_res = 0.02 / math.sqrt(2 * N_LAYERS)   # wo / w3 per reference init
    keys = jax.random.split(key, 8)

    def nrm(k, shape, s):
        return s * jax.random.normal(k, shape, jnp.float32)

    tok_emb = nrm(keys[0], (VOCAB, DIM), std)
    # fused QKV weight in kernel layout; attention 1/sqrt(head_dim) folded into wq
    wq = nrm(keys[1], (N_LAYERS, DIM, Q_DIM), std) * (1.0 / math.sqrt(HEAD_DIM))
    wk = nrm(keys[2], (N_LAYERS, DIM, KV_DIM), std)
    wv = nrm(keys[3], (N_LAYERS, DIM, KV_DIM), std)
    return dict(
        tok_emb=tok_emb,                                    # (V, D) f32, for gather
        wout=tok_emb.T.astype(jnp.bfloat16),                # tied, pre-transposed (D, V)
        norm=jnp.ones((1, DIM), jnp.float32),
        attn_norm=jnp.ones((N_LAYERS, 1, DIM), jnp.float32),
        ffn_norm=jnp.ones((N_LAYERS, 1, DIM), jnp.float32),
        wqkv=jnp.concatenate([wq, wk, wv], axis=-1).astype(jnp.bfloat16),  # (L, D, 128)
        wo=nrm(keys[4], (N_LAYERS, Q_DIM, DIM), std_res).astype(jnp.bfloat16),
        w1=nrm(keys[5], (N_LAYERS, DIM, HIDDEN), std).astype(jnp.bfloat16),
        w2=nrm(keys[6], (N_LAYERS, HIDDEN, DIM), std).astype(jnp.bfloat16),
        w3=nrm(keys[7], (N_LAYERS, DIM, HIDDEN), std_res).astype(jnp.bfloat16),
    )


@jax.jit
def transformer_forward(tokens, params, freqs_cos, freqs_sin):
    B, S = tokens.shape
    M = B * S
    # TODO(synk): token-embedding gather kept as plain-JAX glue; an in-kernel
    # gather over a 256x64 table has no clean small-Pallas advantage.
    h0 = jnp.take(params["tok_emb"], tokens.reshape(-1), axis=0)   # (M, D) f32

    # RoPE tables in fused-lane layout: interleaved cos and sign/parity-folded
    # sin tables, tiled to (M, H*hd) for q and (M, KV*hd) for k.
    cos = freqs_cos[:S]                                     # (S, hd/2)
    sin = freqs_sin[:S]
    zero = jnp.zeros_like(sin)
    cos_i = jnp.repeat(cos, 2, axis=-1)                               # [c0,c0,c1,c1,...]
    sina = jnp.stack([-sin, zero], axis=-1).reshape(S, HEAD_DIM)      # [-s0,0,-s1,0,...]
    sinb = jnp.stack([zero, sin], axis=-1).reshape(S, HEAD_DIM)       # [0,s0,0,s1,...]
    cosq = jnp.tile(cos_i, (B, N_HEADS))
    sinaq = jnp.tile(sina, (B, N_HEADS))
    sinbq = jnp.tile(sinb, (B, N_HEADS))
    cosk = jnp.tile(cos_i, (B, N_KV_HEADS))
    sinak = jnp.tile(sina, (B, N_KV_HEADS))
    sinbk = jnp.tile(sinb, (B, N_KV_HEADS))

    # block-diagonal causal additive mask for the merged-batch attention
    # (fine at B=2/S=8; use a true batched/grid attention once B*S grows).
    r = jnp.arange(M)
    allowed = ((r[:, None] // S) == (r[None, :] // S)) & (r[:, None] >= r[None, :])
    mask = jnp.where(allowed, 0.0, -1e30).astype(jnp.float32)         # (M, M)

    logits = run_fused(h0, cosq, sinaq, sinbq, cosk, sinak, sinbk, mask, params,
                       batch=B, seq=S)                                # (B, V)
    # inference path: logits for the last position only (targets=None in torch)
    return logits[:, None, :]                                         # (B, 1, V)


if __name__ == "__main__":
    key = jax.random.PRNGKey(0)
    k_params, k_tok = jax.random.split(key)

    params = init_params(k_params)
    freqs_cos, freqs_sin = precompute_freqs_cis(HEAD_DIM, MAX_SEQ)
    tokens = jax.random.randint(k_tok, (BATCH, SEQ), 0, VOCAB, dtype=jnp.int32)

    logits = transformer_forward(tokens, params, freqs_cos, freqs_sin)
    logits = jax.block_until_ready(logits)
    assert logits.shape == (BATCH, 1, VOCAB)
    assert bool(jnp.all(jnp.isfinite(logits)))
    print("KERNEL_OK")
</pallas_src>

<mosaic_0001>
module attributes {stable_mosaic.version = 11 : i64} {
  func.func @fused_transformer_kernel(%arg0: memref<16x64xf32, #tpu.memory_space<vmem>>, %arg1: memref<16x64xf32, #tpu.memory_space<vmem>>, %arg2: memref<16x64xf32, #tpu.memory_space<vmem>>, %arg3: memref<16x64xf32, #tpu.memory_space<vmem>>, %arg4: memref<16x32xf32, #tpu.memory_space<vmem>>, %arg5: memref<16x32xf32, #tpu.memory_space<vmem>>, %arg6: memref<16x32xf32, #tpu.memory_space<vmem>>, %arg7: memref<16x16xf32, #tpu.memory_space<vmem>>, %arg8: memref<2x1x64xf32, #tpu.memory_space<vmem>>, %arg9: memref<2x64x128xbf16, #tpu.memory_space<vmem>>, %arg10: memref<2x64x64xbf16, #tpu.memory_space<vmem>>, %arg11: memref<2x1x64xf32, #tpu.memory_space<vmem>>, %arg12: memref<2x64x192xbf16, #tpu.memory_space<vmem>>, %arg13: memref<2x192x64xbf16, #tpu.memory_space<vmem>>, %arg14: memref<2x64x192xbf16, #tpu.memory_space<vmem>>, %arg15: memref<1x64xf32, #tpu.memory_space<vmem>>, %arg16: memref<64x256xbf16, #tpu.memory_space<vmem>>, %arg17: memref<2x256xf32, #tpu.memory_space<vmem>>) attributes {dimension_semantics = [], scalar_prefetch = 0 : i64, scratch_operands = 0 : i64, tpu.core_type = #tpu.core_type<tc>} {
    %c0 = arith.constant 0 : index
    %c0_0 = arith.constant 0 : index
    %0 = vector.load %arg0[%c0, %c0_0] : memref<16x64xf32, #tpu.memory_space<vmem>>, vector<16x64xf32>
    %c0_1 = arith.constant 0 : index
    %c0_2 = arith.constant 0 : index
    %1 = vector.load %arg7[%c0_1, %c0_2] : memref<16x16xf32, #tpu.memory_space<vmem>>, vector<16x16xf32>
    %c0_3 = arith.constant 0 : index
    %c0_4 = arith.constant 0 : index
    %2 = vector.load %arg1[%c0_3, %c0_4] : memref<16x64xf32, #tpu.memory_space<vmem>>, vector<16x64xf32>
    %c0_5 = arith.constant 0 : index
    %c0_6 = arith.constant 0 : index
    %3 = vector.load %arg2[%c0_5, %c0_6] : memref<16x64xf32, #tpu.memory_space<vmem>>, vector<16x64xf32>
    %c0_7 = arith.constant 0 : index
    %c0_8 = arith.constant 0 : index
    %4 = vector.load %arg3[%c0_7, %c0_8] : memref<16x64xf32, #tpu.memory_space<vmem>>, vector<16x64xf32>
    %c0_9 = arith.constant 0 : index
    %c0_10 = arith.constant 0 : index
    %5 = vector.load %arg4[%c0_9, %c0_10] : memref<16x32xf32, #tpu.memory_space<vmem>>, vector<16x32xf32>
    %c0_11 = arith.constant 0 : index
    %c0_12 = arith.constant 0 : index
    %6 = vector.load %arg5[%c0_11, %c0_12] : memref<16x32xf32, #tpu.memory_space<vmem>>, vector<16x32xf32>
    %c0_13 = arith.constant 0 : index
    %c0_14 = arith.constant 0 : index
    %7 = vector.load %arg6[%c0_13, %c0_14] : memref<16x32xf32, #tpu.memory_space<vmem>>, vector<16x32xf32>
    %c0_15 = arith.constant 0 : index
    %c0_16 = arith.constant 0 : index
    %c0_17 = arith.constant 0 : index
    %8 = vector.load %arg8[%c0_15, %c0_16, %c0_17] : memref<2x1x64xf32, #tpu.memory_space<vmem>>, vector<1x1x64xf32>
    %9 = vector.shape_cast %8 : vector<1x1x64xf32> to vector<1x64xf32>
    %10 = arith.mulf %0, %0 : vector<16x64xf32>
    %cst = arith.constant dense<0.000000e+00> : vector<16xf32>
    %11 = vector.multi_reduction <add>, %10, %cst [1] : vector<16x64xf32> to vector<16xf32>
    %12 = vector.shape_cast %11 : vector<16xf32> to vector<16x1xf32>
    %cst_18 = arith.constant 6.400000e+01 : f32
    %13 = vector.broadcast %cst_18 : f32 to vector<16x1xf32>
    %14 = arith.divf %12, %13 : vector<16x1xf32>
    %cst_19 = arith.constant 9.99999974E-6 : f32
    %15 = vector.broadcast %cst_19 : f32 to vector<16x1xf32>
    %16 = arith.addf %14, %15 : vector<16x1xf32>
    %17 = math.rsqrt %16 : vector<16x1xf32>
    %18 = vector.broadcast %17 : vector<16x1xf32> to vector<16x64xf32>
    %19 = arith.mulf %0, %18 : vector<16x64xf32>
    %20 = vector.broadcast %9 : vector<1x64xf32> to vector<16x64xf32>
    %21 = arith.mulf %19, %20 : vector<16x64xf32>
    %22 = arith.truncf %21 : vector<16x64xf32> to vector<16x64xbf16>
    %c0_20 = arith.constant 0 : index
    %c0_21 = arith.constant 0 : index
    %c0_22 = arith.constant 0 : index
    %23 = vector.load %arg9[%c0_20, %c0_21, %c0_22] : memref<2x64x128xbf16, #tpu.memory_space<vmem>>, vector<1x64x128xbf16>
    %24 = vector.shape_cast %23 : vector<1x64x128xbf16> to vector<64x128xbf16>
    %cst_23 = arith.constant dense<0.000000e+00> : vector<16x128xf32>
    %25 = tpu.matmul %22, %24, %cst_23 {dimension_numbers = #tpu.dot_dimension_numbers<[1], [0], [0], [1], [0, 0, 1, 1], [], []>} : vector<16x64xbf16>, vector<64x128xbf16>, vector<16x128xf32> -> vector<16x128xf32>
    %26 = vector.extract_strided_slice %25 {offsets = [0, 0], sizes = [16, 64], strides = [1, 1]} : vector<16x128xf32> to vector<16x64xf32>
    %c63_i32 = arith.constant 63 : i32
    %27 = tpu.dynamic_rotate %26 by %c63_i32 dim 1 : vector<16x64xf32>, i32 -> vector<16x64xf32>
    %c1_i32 = arith.constant 1 : i32
    %28 = tpu.dynamic_rotate %26 by %c1_i32 dim 1 : vector<16x64xf32>, i32 -> vector<16x64xf32>
    %29 = arith.mulf %26, %2 : vector<16x64xf32>
    %30 = arith.mulf %27, %3 : vector<16x64xf32>
    %31 = arith.addf %29, %30 : vector<16x64xf32>
    %32 = arith.mulf %28, %4 : vector<16x64xf32>
    %33 = arith.addf %31, %32 : vector<16x64xf32>
    %34 = vector.extract_strided_slice %25 {offsets = [0, 64], sizes = [16, 32], strides = [1, 1]} : vector<16x128xf32> to vector<16x32xf32>
    %c31_i32 = arith.constant 31 : i32
    %35 = tpu.dynamic_rotate %34 by %c31_i32 dim 1 : vector<16x32xf32>, i32 -> vector<16x32xf32>
    %c1_i32_24 = arith.constant 1 : i32
    %36 = tpu.dynamic_rotate %34 by %c1_i32_24 dim 1 : vector<16x32xf32>, i32 -> vector<16x32xf32>
    %37 = arith.mulf %34, %5 : vector<16x32xf32>
    %38 = arith.mulf %35, %6 : vector<16x32xf32>
    %39 = arith.addf %37, %38 : vector<16x32xf32>
    %40 = arith.mulf %36, %7 : vector<16x32xf32>
    %41 = arith.addf %39, %40 : vector<16x32xf32>
    %42 = vector.extract_strided_slice %25 {offsets = [0, 96], sizes = [16, 32], strides = [1, 1]} : vector<16x128xf32> to vector<16x32xf32>
    %43 = arith.truncf %33 : vector<16x64xf32> to vector<16x64xbf16>
    %44 = arith.truncf %41 : vector<16x32xf32> to vector<16x32xbf16>
    %45 = arith.truncf %42 : vector<16x32xf32> to vector<16x32xbf16>
    %46 = vector.extract_strided_slice %44 {offsets = [0, 0], sizes = [16, 16], strides = [1, 1]} : vector<16x32xbf16> to vector<16x16xbf16>
    %47 = vector.extract_strided_slice %44 {offsets = [0, 16], sizes = [16, 16], strides = [1, 1]} : vector<16x32xbf16> to vector<16x16xbf16>
    %48 = vector.extract_strided_slice %45 {offsets = [0, 0], sizes = [16, 16], strides = [1, 1]} : vector<16x32xbf16> to vector<16x16xbf16>
    %49 = vector.extract_strided_slice %45 {offsets = [0, 16], sizes = [16, 16], strides = [1, 1]} : vector<16x32xbf16> to vector<16x16xbf16>
    %50 = vector.extract_strided_slice %43 {offsets = [0, 0], sizes = [16, 16], strides = [1, 1]} : vector<16x64xbf16> to vector<16x16xbf16>
    %cst_25 = arith.constant dense<0.000000e+00> : vector<16x16xf32>
    %51 = tpu.matmul %50, %46, %cst_25 {dimension_numbers = #tpu.dot_dimension_numbers<[1], [1], [0], [0], [0, 0, 1, 0], [], []>} : vector<16x16xbf16>, vector<16x16xbf16>, vector<16x16xf32> -> vector<16x16xf32>
    %52 = arith.addf %51, %1 : vector<16x16xf32>
    %cst_26 = arith.constant dense<0xFF800000> : vector<16xf32>
    %53 = vector.multi_reduction <maximumf>, %52, %cst_26 [1] : vector<16x16xf32> to vector<16xf32>
    %54 = vector.shape_cast %53 : vector<16xf32> to vector<16x1xf32>
    %55 = vector.broadcast %54 : vector<16x1xf32> to vector<16x16xf32>
    %56 = arith.subf %52, %55 : vector<16x16xf32>
    %57 = math.exp %56 : vector<16x16xf32>
    %cst_27 = arith.constant dense<0.000000e+00> : vector<16xf32>
    %58 = vector.multi_reduction <add>, %57, %cst_27 [1] : vector<16x16xf32> to vector<16xf32>
    %59 = vector.shape_cast %58 : vector<16xf32> to vector<16x1xf32>
    %60 = tpu.reciprocal %59 {approx = true} : vector<16x1xf32> -> vector<16x1xf32>
    %61 = vector.broadcast %60 : vector<16x1xf32> to vector<16x16xf32>
    %62 = arith.mulf %57, %61 : vector<16x16xf32>
    %63 = arith.truncf %62 : vector<16x16xf32> to vector<16x16xbf16>
    %cst_28 = arith.constant dense<0.000000e+00> : vector<16x16xf32>
    %64 = tpu.matmul %63, %48, %cst_28 {dimension_numbers = #tpu.dot_dimension_numbers<[1], [0], [0], [1], [0, 0, 1, 1], [], []>} : vector<16x16xbf16>, vector<16x16xbf16>, vector<16x16xf32> -> vector<16x16xf32>
    %65 = vector.extract_strided_slice %43 {offsets = [0, 16], sizes = [16, 16], strides = [1, 1]} : vector<16x64xbf16> to vector<16x16xbf16>
    %cst_29 = arith.constant dense<0.000000e+00> : vector<16x16xf32>
    %66 = tpu.matmul %65, %46, %cst_29 {dimension_numbers = #tpu.dot_dimension_numbers<[1], [1], [0], [0], [0, 0, 1, 0], [], []>} : vector<16x16xbf16>, vector<16x16xbf16>, vector<16x16xf32> -> vector<16x16xf32>
    %67 = arith.addf %66, %1 : vector<16x16xf32>
    %cst_30 = arith.constant dense<0xFF800000> : vector<16xf32>
    %68 = vector.multi_reduction <maximumf>, %67, %cst_30 [1] : vector<16x16xf32> to vector<16xf32>
    %69 = vector.shape_cast %68 : vector<16xf32> to vector<16x1xf32>
    %70 = vector.broadcast %69 : vector<16x1xf32> to vector<16x16xf32>
    %71 = arith.subf %67, %70 : vector<16x16xf32>
    %72 = math.exp %71 : vector<16x16xf32>
    %cst_31 = arith.constant dense<0.000000e+00> : vector<16xf32>
    %73 = vector.multi_reduction <add>, %72, %cst_31 [1] : vector<16x16xf32> to vector<16xf32>
    %74 = vector.shape_cast %73 : vector<16xf32> to vector<16x1xf32>
    %75 = tpu.reciprocal %74 {approx = true} : vector<16x1xf32> -> vector<16x1xf32>
    %76 = vector.broadcast %75 : vector<16x1xf32> to vector<16x16xf32>
    %77 = arith.mulf %72, %76 : vector<16x16xf32>
    %78 = arith.truncf %77 : vector<16x16xf32> to vector<16x16xbf16>
    %cst_32 = arith.constant dense<0.000000e+00> : vector<16x16xf32>
    %79 = tpu.matmul %78, %48, %cst_32 {dimension_numbers = #tpu.dot_dimension_numbers<[1], [0], [0], [1], [0, 0, 1, 1], [], []>} : vector<16x16xbf16>, vector<16x16xbf16>, vector<16x16xf32> -> vector<16x16xf32>
    %80 = vector.extract_strided_slice %43 {offsets = [0, 32], sizes = [16, 16], strides = [1, 1]} : vector<16x64xbf16> to vector<16x16xbf16>
    %cst_33 = arith.constant dense<0.000000e+00> : vector<16x16xf32>
    %81 = tpu.matmul %80, %47, %cst_33 {dimension_numbers = #tpu.dot_dimension_numbers<[1], [1], [0], [0], [0, 0, 1, 0], [], []>} : vector<16x16xbf16>, vector<16x16xbf16>, vector<16x16xf32> -> vector<16x16xf32>
    %82 = arith.addf %81, %1 : vector<16x16xf32>
    %cst_34 = arith.constant dense<0xFF800000> : vector<16xf32>
    %83 = vector.multi_reduction <maximumf>, %82, %cst_34 [1] : vector<16x16xf32> to vector<16xf32>
    %84 = vector.shape_cast %83 : vector<16xf32> to vector<16x1xf32>
    %85 = vector.broadcast %84 : vector<16x1xf32> to vector<16x16xf32>
    %86 = arith.subf %82, %85 : vector<16x16xf32>
    %87 = math.exp %86 : vector<16x16xf32>
    %cst_35 = arith.constant dense<0.000000e+00> : vector<16xf32>
    %88 = vector.multi_reduction <add>, %87, %cst_35 [1] : vector<16x16xf32> to vector<16xf32>
    %89 = vector.shape_cast %88 : vector<16xf32> to vector<16x1xf32>
    %90 = tpu.reciprocal %89 {approx = true} : vector<16x1xf32> -> vector<16x1xf32>
    %91 = vector.broadcast %90 : vector<16x1xf32> to vector<16x16xf32>
    %92 = arith.mulf %87, %91 : vector<16x16xf32>
    %93 = arith.truncf %92 : vector<16x16xf32> to vector<16x16xbf16>
    %cst_36 = arith.constant dense<0.000000e+00> : vector<16x16xf32>
    %94 = tpu.matmul %93, %49, %cst_36 {dimension_numbers = #tpu.dot_dimension_numbers<[1], [0], [0], [1], [0, 0, 1, 1], [], []>} : vector<16x16xbf16>, vector<16x16xbf16>, vector<16x16xf32> -> vector<16x16xf32>
    %95 = vector.extract_strided_slice %43 {offsets = [0, 48], sizes = [16, 16], strides = [1, 1]} : vector<16x64xbf16> to vector<16x16xbf16>
    %cst_37 = arith.constant dense<0.000000e+00> : vector<16x16xf32>
    %96 = tpu.matmul %95, %47, %cst_37 {dimension_numbers = #tpu.dot_dimension_numbers<[1], [1], [0], [0], [0, 0, 1, 0], [], []>} : vector<16x16xbf16>, vector<16x16xbf16>, vector<16x16xf32> -> vector<16x16xf32>
    %97 = arith.addf %96, %1 : vector<16x16xf32>
    %cst_38 = arith.constant dense<0xFF800000> : vector<16xf32>
    %98 = vector.multi_reduction <maximumf>, %97, %cst_38 [1] : vector<16x16xf32> to vector<16xf32>
    %99 = vector.shape_cast %98 : vector<16xf32> to vector<16x1xf32>
    %100 = vector.broadcast %99 : vector<16x1xf32> to vector<16x16xf32>
    %101 = arith.subf %97, %100 : vector<16x16xf32>
    %102 = math.exp %101 : vector<16x16xf32>
    %cst_39 = arith.constant dense<0.000000e+00> : vector<16xf32>
    %103 = vector.multi_reduction <add>, %102, %cst_39 [1] : vector<16x16xf32> to vector<16xf32>
    %104 = vector.shape_cast %103 : vector<16xf32> to vector<16x1xf32>
    %105 = tpu.reciprocal %104 {approx = true} : vector<16x1xf32> -> vector<16x1xf32>
    %106 = vector.broadcast %105 : vector<16x1xf32> to vector<16x16xf32>
    %107 = arith.mulf %102, %106 : vector<16x16xf32>
    %108 = arith.truncf %107 : vector<16x16xf32> to vector<16x16xbf16>
    %cst_40 = arith.constant dense<0.000000e+00> : vector<16x16xf32>
    %109 = tpu.matmul %108, %49, %cst_40 {dimension_numbers = #tpu.dot_dimension_numbers<[1], [0], [0], [1], [0, 0, 1, 1], [], []>} : vector<16x16xbf16>, vector<16x16xbf16>, vector<16x16xf32> -> vector<16x16xf32>
    %110 = tpu.concatenate %64, %79, %94, %109 in 1 : vector<16x16xf32>, vector<16x16xf32>, vector<16x16xf32>, vector<16x16xf32> -> vector<16x64xf32>
    %111 = arith.truncf %110 : vector<16x64xf32> to vector<16x64xbf16>
    %c0_41 = arith.constant 0 : index
    %c0_42 = arith.constant 0 : index
    %c0_43 = arith.constant 0 : index
    %112 = vector.load %arg10[%c0_41, %c0_42, %c0_43] : memref<2x64x64xbf16, #tpu.memory_space<vmem>>, vector<1x64x64xbf16>
    %113 = vector.shape_cast %112 : vector<1x64x64xbf16> to vector<64x64xbf16>
    %cst_44 = arith.constant dense<0.000000e+00> : vector<16x64xf32>
    %114 = tpu.matmul %111, %113, %cst_44 {dimension_numbers = #tpu.dot_dimension_numbers<[1], [0], [0], [1], [0, 0, 1, 1], [], []>} : vector<16x64xbf16>, vector<64x64xbf16>, vector<16x64xf32> -> vector<16x64xf32>
    %115 = arith.addf %0, %114 : vector<16x64xf32>
    %c0_45 = arith.constant 0 : index
    %c0_46 = arith.constant 0 : index
    %c0_47 = arith.constant 0 : index
    %116 = vector.load %arg11[%c0_45, %c0_46, %c0_47] : memref<2x1x64xf32, #tpu.memory_space<vmem>>, vector<1x1x64xf32>
    %117 = vector.shape_cast %116 : vector<1x1x64xf32> to vector<1x64xf32>
    %118 = arith.mulf %115, %115 : vector<16x64xf32>
    %cst_48 = arith.constant dense<0.000000e+00> : vector<16xf32>
    %119 = vector.multi_reduction <add>, %118, %cst_48 [1] : vector<16x64xf32> to vector<16xf32>
    %120 = vector.shape_cast %119 : vector<16xf32> to vector<16x1xf32>
    %cst_49 = arith.constant 6.400000e+01 : f32
    %121 = vector.broadcast %cst_49 : f32 to vector<16x1xf32>
    %122 = arith.divf %120, %121 : vector<16x1xf32>
    %cst_50 = arith.constant 9.99999974E-6 : f32
    %123 = vector.broadcast %cst_50 : f32 to vector<16x1xf32>
    %124 = arith.addf %122, %123 : vector<16x1xf32>
    %125 = math.rsqrt %124 : vector<16x1xf32>
    %126 = vector.broadcast %125 : vector<16x1xf32> to vector<16x64xf32>
    %127 = arith.mulf %115, %126 : vector<16x64xf32>
    %128 = vector.broadcast %117 : vector<1x64xf32> to vector<16x64xf32>
    %129 = arith.mulf %127, %128 : vector<16x64xf32>
    %130 = arith.truncf %129 : vector<16x64xf32> to vector<16x64xbf16>
    %c0_51 = arith.constant 0 : index
    %c0_52 = arith.constant 0 : index
    %c0_53 = arith.constant 0 : index
    %131 = vector.load %arg12[%c0_51, %c0_52, %c0_53] : memref<2x64x192xbf16, #tpu.memory_space<vmem>>, vector<1x64x192xbf16>
    %132 = vector.shape_cast %131 : vector<1x64x192xbf16> to vector<64x192xbf16>
    %cst_54 = arith.constant dense<0.000000e+00> : vector<16x192xf32>
    %133 = tpu.matmul %130, %132, %cst_54 {dimension_numbers = #tpu.dot_dimension_numbers<[1], [0], [0], [1], [0, 0, 1, 1], [], []>} : vector<16x64xbf16>, vector<64x192xbf16>, vector<16x192xf32> -> vector<16x192xf32>
    %c0_55 = arith.constant 0 : index
    %c0_56 = arith.constant 0 : index
    %c0_57 = arith.constant 0 : index
    %134 = vector.load %arg14[%c0_55, %c0_56, %c0_57] : memref<2x64x192xbf16, #tpu.memory_space<vmem>>, vector<1x64x192xbf16>
    %135 = vector.shape_cast %134 : vector<1x64x192xbf16> to vector<64x192xbf16>
    %cst_58 = arith.constant dense<0.000000e+00> : vector<16x192xf32>
    %136 = tpu.matmul %130, %135, %cst_58 {dimension_numbers = #tpu.dot_dimension_numbers<[1], [0], [0], [1], [0, 0, 1, 1], [], []>} : vector<16x64xbf16>, vector<64x192xbf16>, vector<16x192xf32> -> vector<16x192xf32>
    %137 = arith.negf %133 : vector<16x192xf32>
    %138 = math.exp %137 : vector<16x192xf32>
    %cst_59 = arith.constant 1.000000e+00 : f32
    %139 = vector.broadcast %cst_59 : f32 to vector<16x192xf32>
    %140 = arith.addf %139, %138 : vector<16x192xf32>
    %141 = arith.divf %139, %140 : vector<16x192xf32>
    %142 = arith.mulf %133, %141 : vector<16x192xf32>
    %143 = arith.mulf %142, %136 : vector<16x192xf32>
    %144 = arith.truncf %143 : vector<16x192xf32> to vector<16x192xbf16>
    %c0_60 = arith.constant 0 : index
    %c0_61 = arith.constant 0 : index
    %c0_62 = arith.constant 0 : index
    %145 = vector.load %arg13[%c0_60, %c0_61, %c0_62] : memref<2x192x64xbf16, #tpu.memory_space<vmem>>, vector<1x192x64xbf16>
    %146 = vector.shape_cast %145 : vector<1x192x64xbf16> to vector<192x64xbf16>
    %cst_63 = arith.constant dense<0.000000e+00> : vector<16x64xf32>
    %147 = tpu.matmul %144, %146, %cst_63 {dimension_numbers = #tpu.dot_dimension_numbers<[1], [0], [0], [1], [0, 0, 1, 1], [], []>} : vector<16x192xbf16>, vector<192x64xbf16>, vector<16x64xf32> -> vector<16x64xf32>
    %148 = arith.addf %115, %147 : vector<16x64xf32>
    %c1 = arith.constant 1 : index
    %c0_64 = arith.constant 0 : index
    %c0_65 = arith.constant 0 : index
    %149 = vector.load %arg8[%c1, %c0_64, %c0_65] : memref<2x1x64xf32, #tpu.memory_space<vmem>>, vector<1x1x64xf32>
    %150 = vector.shape_cast %149 : vector<1x1x64xf32> to vector<1x64xf32>
    %151 = arith.mulf %148, %148 : vector<16x64xf32>
    %cst_66 = arith.constant dense<0.000000e+00> : vector<16xf32>
    %152 = vector.multi_reduction <add>, %151, %cst_66 [1] : vector<16x64xf32> to vector<16xf32>
    %153 = vector.shape_cast %152 : vector<16xf32> to vector<16x1xf32>
    %cst_67 = arith.constant 6.400000e+01 : f32
    %154 = vector.broadcast %cst_67 : f32 to vector<16x1xf32>
    %155 = arith.divf %153, %154 : vector<16x1xf32>
    %cst_68 = arith.constant 9.99999974E-6 : f32
    %156 = vector.broadcast %cst_68 : f32 to vector<16x1xf32>
    %157 = arith.addf %155, %156 : vector<16x1xf32>
    %158 = math.rsqrt %157 : vector<16x1xf32>
    %159 = vector.broadcast %158 : vector<16x1xf32> to vector<16x64xf32>
    %160 = arith.mulf %148, %159 : vector<16x64xf32>
    %161 = vector.broadcast %150 : vector<1x64xf32> to vector<16x64xf32>
    %162 = arith.mulf %160, %161 : vector<16x64xf32>
    %163 = arith.truncf %162 : vector<16x64xf32> to vector<16x64xbf16>
    %c1_69 = arith.constant 1 : index
    %c0_70 = arith.constant 0 : index
    %c0_71 = arith.constant 0 : index
    %164 = vector.load %arg9[%c1_69, %c0_70, %c0_71] : memref<2x64x128xbf16, #tpu.memory_space<vmem>>, vector<1x64x128xbf16>
    %165 = vector.shape_cast %164 : vector<1x64x128xbf16> to vector<64x128xbf16>
    %cst_72 = arith.constant dense<0.000000e+00> : vector<16x128xf32>
    %166 = tpu.matmul %163, %165, %cst_72 {dimension_numbers = #tpu.dot_dimension_numbers<[1], [0], [0], [1], [0, 0, 1, 1], [], []>} : vector<16x64xbf16>, vector<64x128xbf16>, vector<16x128xf32> -> vector<16x128xf32>
    %167 = vector.extract_strided_slice %166 {offsets = [0, 0], sizes = [16, 64], strides = [1, 1]} : vector<16x128xf32> to vector<16x64xf32>
    %c63_i32_73 = arith.constant 63 : i32
    %168 = tpu.dynamic_rotate %167 by %c63_i32_73 dim 1 : vector<16x64xf32>, i32 -> vector<16x64xf32>
    %c1_i32_74 = arith.constant 1 : i32
    %169 = tpu.dynamic_rotate %167 by %c1_i32_74 dim 1 : vector<16x64xf32>, i32 -> vector<16x64xf32>
    %170 = arith.mulf %167, %2 : vector<16x64xf32>
    %171 = arith.mulf %168, %3 : vector<16x64xf32>
    %172 = arith.addf %170, %171 : vector<16x64xf32>
    %173 = arith.mulf %169, %4 : vector<16x64xf32>
    %174 = arith.addf %172, %173 : vector<16x64xf32>
    %175 = vector.extract_strided_slice %166 {offsets = [0, 64], sizes = [16, 32], strides = [1, 1]} : vector<16x128xf32> to vector<16x32xf32>
    %c31_i32_75 = arith.constant 31 : i32
    %176 = tpu.dynamic_rotate %175 by %c31_i32_75 dim 1 : vector<16x32xf32>, i32 -> vector<16x32xf32>
    %c1_i32_76 = arith.constant 1 : i32
    %177 = tpu.dynamic_rotate %175 by %c1_i32_76 dim 1 : vector<16x32xf32>, i32 -> vector<16x32xf32>
    %178 = arith.mulf %175, %5 : vector<16x32xf32>
    %179 = arith.mulf %176, %6 : vector<16x32xf32>
    %180 = arith.addf %178, %179 : vector<16x32xf32>
    %181 = arith.mulf %177, %7 : vector<16x32xf32>
    %182 = arith.addf %180, %181 : vector<16x32xf32>
    %183 = vector.extract_strided_slice %166 {offsets = [0, 96], sizes = [16, 32], strides = [1, 1]} : vector<16x128xf32> to vector<16x32xf32>
    %184 = arith.truncf %174 : vector<16x64xf32> to vector<16x64xbf16>
    %185 = arith.truncf %182 : vector<16x32xf32> to vector<16x32xbf16>
    %186 = arith.truncf %183 : vector<16x32xf32> to vector<16x32xbf16>
    %187 = vector.extract_strided_slice %185 {offsets = [0, 0], sizes = [16, 16], strides = [1, 1]} : vector<16x32xbf16> to vector<16x16xbf16>
    %188 = vector.extract_strided_slice %185 {offsets = [0, 16], sizes = [16, 16], strides = [1, 1]} : vector<16x32xbf16> to vector<16x16xbf16>
    %189 = vector.extract_strided_slice %186 {offsets = [0, 0], sizes = [16, 16], strides = [1, 1]} : vector<16x32xbf16> to vector<16x16xbf16>
    %190 = vector.extract_strided_slice %186 {offsets = [0, 16], sizes = [16, 16], strides = [1, 1]} : vector<16x32xbf16> to vector<16x16xbf16>
    %191 = vector.extract_strided_slice %184 {offsets = [0, 0], sizes = [16, 16], strides = [1, 1]} : vector<16x64xbf16> to vector<16x16xbf16>
    %cst_77 = arith.constant dense<0.000000e+00> : vector<16x16xf32>
    %192 = tpu.matmul %191, %187, %cst_77 {dimension_numbers = #tpu.dot_dimension_numbers<[1], [1], [0], [0], [0, 0, 1, 0], [], []>} : vector<16x16xbf16>, vector<16x16xbf16>, vector<16x16xf32> -> vector<16x16xf32>
    %193 = arith.addf %192, %1 : vector<16x16xf32>
    %cst_78 = arith.constant dense<0xFF800000> : vector<16xf32>
    %194 = vector.multi_reduction <maximumf>, %193, %cst_78 [1] : vector<16x16xf32> to vector<16xf32>
    %195 = vector.shape_cast %194 : vector<16xf32> to vector<16x1xf32>
    %196 = vector.broadcast %195 : vector<16x1xf32> to vector<16x16xf32>
    %197 = arith.subf %193, %196 : vector<16x16xf32>
    %198 = math.exp %197 : vector<16x16xf32>
    %cst_79 = arith.constant dense<0.000000e+00> : vector<16xf32>
    %199 = vector.multi_reduction <add>, %198, %cst_79 [1] : vector<16x16xf32> to vector<16xf32>
    %200 = vector.shape_cast %199 : vector<16xf32> to vector<16x1xf32>
    %201 = tpu.reciprocal %200 {approx = true} : vector<16x1xf32> -> vector<16x1xf32>
    %202 = vector.broadcast %201 : vector<16x1xf32> to vector<16x16xf32>
    %203 = arith.mulf %198, %202 : vector<16x16xf32>
    %204 = arith.truncf %203 : vector<16x16xf32> to vector<16x16xbf16>
    %cst_80 = arith.constant dense<0.000000e+00> : vector<16x16xf32>
    %205 = tpu.matmul %204, %189, %cst_80 {dimension_numbers = #tpu.dot_dimension_numbers<[1], [0], [0], [1], [0, 0, 1, 1], [], []>} : vector<16x16xbf16>, vector<16x16xbf16>, vector<16x16xf32> -> vector<16x16xf32>
    %206 = vector.extract_strided_slice %184 {offsets = [0, 16], sizes = [16, 16], strides = [1, 1]} : vector<16x64xbf16> to vector<16x16xbf16>
    %cst_81 = arith.constant dense<0.000000e+00> : vector<16x16xf32>
    %207 = tpu.matmul %206, %187, %cst_81 {dimension_numbers = #tpu.dot_dimension_numbers<[1], [1], [0], [0], [0, 0, 1, 0], [], []>} : vector<16x16xbf16>, vector<16x16xbf16>, vector<16x16xf32> -> vector<16x16xf32>
    %208 = arith.addf %207, %1 : vector<16x16xf32>
    %cst_82 = arith.constant dense<0xFF800000> : vector<16xf32>
    %209 = vector.multi_reduction <maximumf>, %208, %cst_82 [1] : vector<16x16xf32> to vector<16xf32>
    %210 = vector.shape_cast %209 : vector<16xf32> to vector<16x1xf32>
    %211 = vector.broadcast %210 : vector<16x1xf32> to vector<16x16xf32>
    %212 = arith.subf %208, %211 : vector<16x16xf32>
    %213 = math.exp %212 : vector<16x16xf32>
    %cst_83 = arith.constant dense<0.000000e+00> : vector<16xf32>
    %214 = vector.multi_reduction <add>, %213, %cst_83 [1] : vector<16x16xf32> to vector<16xf32>
    %215 = vector.shape_cast %214 : vector<16xf32> to vector<16x1xf32>
    %216 = tpu.reciprocal %215 {approx = true} : vector<16x1xf32> -> vector<16x1xf32>
    %217 = vector.broadcast %216 : vector<16x1xf32> to vector<16x16xf32>
    %218 = arith.mulf %213, %217 : vector<16x16xf32>
    %219 = arith.truncf %218 : vector<16x16xf32> to vector<16x16xbf16>
    %cst_84 = arith.constant dense<0.000000e+00> : vector<16x16xf32>
    %220 = tpu.matmul %219, %189, %cst_84 {dimension_numbers = #tpu.dot_dimension_numbers<[1], [0], [0], [1], [0, 0, 1, 1], [], []>} : vector<16x16xbf16>, vector<16x16xbf16>, vector<16x16xf32> -> vector<16x16xf32>
    %221 = vector.extract_strided_slice %184 {offsets = [0, 32], sizes = [16, 16], strides = [1, 1]} : vector<16x64xbf16> to vector<16x16xbf16>
    %cst_85 = arith.constant dense<0.000000e+00> : vector<16x16xf32>
    %222 = tpu.matmul %221, %188, %cst_85 {dimension_numbers = #tpu.dot_dimension_numbers<[1], [1], [0], [0], [0, 0, 1, 0], [], []>} : vector<16x16xbf16>, vector<16x16xbf16>, vector<16x16xf32> -> vector<16x16xf32>
    %223 = arith.addf %222, %1 : vector<16x16xf32>
    %cst_86 = arith.constant dense<0xFF800000> : vector<16xf32>
    %224 = vector.multi_reduction <maximumf>, %223, %cst_86 [1] : vector<16x16xf32> to vector<16xf32>
    %225 = vector.shape_cast %224 : vector<16xf32> to vector<16x1xf32>
    %226 = vector.broadcast %225 : vector<16x1xf32> to vector<16x16xf32>
    %227 = arith.subf %223, %226 : vector<16x16xf32>
    %228 = math.exp %227 : vector<16x16xf32>
    %cst_87 = arith.constant dense<0.000000e+00> : vector<16xf32>
    %229 = vector.multi_reduction <add>, %228, %cst_87 [1] : vector<16x16xf32> to vector<16xf32>
    %230 = vector.shape_cast %229 : vector<16xf32> to vector<16x1xf32>
    %231 = tpu.reciprocal %230 {approx = true} : vector<16x1xf32> -> vector<16x1xf32>
    %232 = vector.broadcast %231 : vector<16x1xf32> to vector<16x16xf32>
    %233 = arith.mulf %228, %232 : vector<16x16xf32>
    %234 = arith.truncf %233 : vector<16x16xf32> to vector<16x16xbf16>
    %cst_88 = arith.constant dense<0.000000e+00> : vector<16x16xf32>
    %235 = tpu.matmul %234, %190, %cst_88 {dimension_numbers = #tpu.dot_dimension_numbers<[1], [0], [0], [1], [0, 0, 1, 1], [], []>} : vector<16x16xbf16>, vector<16x16xbf16>, vector<16x16xf32> -> vector<16x16xf32>
    %236 = vector.extract_strided_slice %184 {offsets = [0, 48], sizes = [16, 16], strides = [1, 1]} : vector<16x64xbf16> to vector<16x16xbf16>
    %cst_89 = arith.constant dense<0.000000e+00> : vector<16x16xf32>
    %237 = tpu.matmul %236, %188, %cst_89 {dimension_numbers = #tpu.dot_dimension_numbers<[1], [1], [0], [0], [0, 0, 1, 0], [], []>} : vector<16x16xbf16>, vector<16x16xbf16>, vector<16x16xf32> -> vector<16x16xf32>
    %238 = arith.addf %237, %1 : vector<16x16xf32>
    %cst_90 = arith.constant dense<0xFF800000> : vector<16xf32>
    %239 = vector.multi_reduction <maximumf>, %238, %cst_90 [1] : vector<16x16xf32> to vector<16xf32>
    %240 = vector.shape_cast %239 : vector<16xf32> to vector<16x1xf32>
    %241 = vector.broadcast %240 : vector<16x1xf32> to vector<16x16xf32>
    %242 = arith.subf %238, %241 : vector<16x16xf32>
    %243 = math.exp %242 : vector<16x16xf32>
    %cst_91 = arith.constant dense<0.000000e+00> : vector<16xf32>
    %244 = vector.multi_reduction <add>, %243, %cst_91 [1] : vector<16x16xf32> to vector<16xf32>
    %245 = vector.shape_cast %244 : vector<16xf32> to vector<16x1xf32>
    %246 = tpu.reciprocal %245 {approx = true} : vector<16x1xf32> -> vector<16x1xf32>
    %247 = vector.broadcast %246 : vector<16x1xf32> to vector<16x16xf32>
    %248 = arith.mulf %243, %247 : vector<16x16xf32>
    %249 = arith.truncf %248 : vector<16x16xf32> to vector<16x16xbf16>
    %cst_92 = arith.constant dense<0.000000e+00> : vector<16x16xf32>
    %250 = tpu.matmul %249, %190, %cst_92 {dimension_numbers = #tpu.dot_dimension_numbers<[1], [0], [0], [1], [0, 0, 1, 1], [], []>} : vector<16x16xbf16>, vector<16x16xbf16>, vector<16x16xf32> -> vector<16x16xf32>
    %251 = tpu.concatenate %205, %220, %235, %250 in 1 : vector<16x16xf32>, vector<16x16xf32>, vector<16x16xf32>, vector<16x16xf32> -> vector<16x64xf32>
    %252 = arith.truncf %251 : vector<16x64xf32> to vector<16x64xbf16>
    %c1_93 = arith.constant 1 : index
    %c0_94 = arith.constant 0 : index
    %c0_95 = arith.constant 0 : index
    %253 = vector.load %arg10[%c1_93, %c0_94, %c0_95] : memref<2x64x64xbf16, #tpu.memory_space<vmem>>, vector<1x64x64xbf16>
    %254 = vector.shape_cast %253 : vector<1x64x64xbf16> to vector<64x64xbf16>
    %cst_96 = arith.constant dense<0.000000e+00> : vector<16x64xf32>
    %255 = tpu.matmul %252, %254, %cst_96 {dimension_numbers = #tpu.dot_dimension_numbers<[1], [0], [0], [1], [0, 0, 1, 1], [], []>} : vector<16x64xbf16>, vector<64x64xbf16>, vector<16x64xf32> -> vector<16x64xf32>
    %256 = arith.addf %148, %255 : vector<16x64xf32>
    %c1_97 = arith.constant 1 : index
    %c0_98 = arith.constant 0 : index
    %c0_99 = arith.constant 0 : index
    %257 = vector.load %arg11[%c1_97, %c0_98, %c0_99] : memref<2x1x64xf32, #tpu.memory_space<vmem>>, vector<1x1x64xf32>
    %258 = vector.shape_cast %257 : vector<1x1x64xf32> to vector<1x64xf32>
    %259 = arith.mulf %256, %256 : vector<16x64xf32>
    %cst_100 = arith.constant dense<0.000000e+00> : vector<16xf32>
    %260 = vector.multi_reduction <add>, %259, %cst_100 [1] : vector<16x64xf32> to vector<16xf32>
    %261 = vector.shape_cast %260 : vector<16xf32> to vector<16x1xf32>
    %cst_101 = arith.constant 6.400000e+01 : f32
    %262 = vector.broadcast %cst_101 : f32 to vector<16x1xf32>
    %263 = arith.divf %261, %262 : vector<16x1xf32>
    %cst_102 = arith.constant 9.99999974E-6 : f32
    %264 = vector.broadcast %cst_102 : f32 to vector<16x1xf32>
    %265 = arith.addf %263, %264 : vector<16x1xf32>
    %266 = math.rsqrt %265 : vector<16x1xf32>
    %267 = vector.broadcast %266 : vector<16x1xf32> to vector<16x64xf32>
    %268 = arith.mulf %256, %267 : vector<16x64xf32>
    %269 = vector.broadcast %258 : vector<1x64xf32> to vector<16x64xf32>
    %270 = arith.mulf %268, %269 : vector<16x64xf32>
    %271 = arith.truncf %270 : vector<16x64xf32> to vector<16x64xbf16>
    %c1_103 = arith.constant 1 : index
    %c0_104 = arith.constant 0 : index
    %c0_105 = arith.constant 0 : index
    %272 = vector.load %arg12[%c1_103, %c0_104, %c0_105] : memref<2x64x192xbf16, #tpu.memory_space<vmem>>, vector<1x64x192xbf16>
    %273 = vector.shape_cast %272 : vector<1x64x192xbf16> to vector<64x192xbf16>
    %cst_106 = arith.constant dense<0.000000e+00> : vector<16x192xf32>
    %274 = tpu.matmul %271, %273, %cst_106 {dimension_numbers = #tpu.dot_dimension_numbers<[1], [0], [0], [1], [0, 0, 1, 1], [], []>} : vector<16x64xbf16>, vector<64x192xbf16>, vector<16x192xf32> -> vector<16x192xf32>
    %c1_107 = arith.constant 1 : index
    %c0_108 = arith.constant 0 : index
    %c0_109 = arith.constant 0 : index
    %275 = vector.load %arg14[%c1_107, %c0_108, %c0_109] : memref<2x64x192xbf16, #tpu.memory_space<vmem>>, vector<1x64x192xbf16>
    %276 = vector.shape_cast %275 : vector<1x64x192xbf16> to vector<64x192xbf16>
    %cst_110 = arith.constant dense<0.000000e+00> : vector<16x192xf32>
    %277 = tpu.matmul %271, %276, %cst_110 {dimension_numbers = #tpu.dot_dimension_numbers<[1], [0], [0], [1], [0, 0, 1, 1], [], []>} : vector<16x64xbf16>, vector<64x192xbf16>, vector<16x192xf32> -> vector<16x192xf32>
    %278 = arith.negf %274 : vector<16x192xf32>
    %279 = math.exp %278 : vector<16x192xf32>
    %cst_111 = arith.constant 1.000000e+00 : f32
    %280 = vector.broadcast %cst_111 : f32 to vector<16x192xf32>
    %281 = arith.addf %280, %279 : vector<16x192xf32>
    %282 = arith.divf %280, %281 : vector<16x192xf32>
    %283 = arith.mulf %274, %282 : vector<16x192xf32>
    %284 = arith.mulf %283, %277 : vector<16x192xf32>
    %285 = arith.truncf %284 : vector<16x192xf32> to vector<16x192xbf16>
    %c1_112 = arith.constant 1 : index
    %c0_113 = arith.constant 0 : index
    %c0_114 = arith.constant 0 : index
    %286 = vector.load %arg13[%c1_112, %c0_113, %c0_114] : memref<2x192x64xbf16, #tpu.memory_space<vmem>>, vector<1x192x64xbf16>
    %287 = vector.shape_cast %286 : vector<1x192x64xbf16> to vector<192x64xbf16>
    %cst_115 = arith.constant dense<0.000000e+00> : vector<16x64xf32>
    %288 = tpu.matmul %285, %287, %cst_115 {dimension_numbers = #tpu.dot_dimension_numbers<[1], [0], [0], [1], [0, 0, 1, 1], [], []>} : vector<16x192xbf16>, vector<192x64xbf16>, vector<16x64xf32> -> vector<16x64xf32>
    %289 = arith.addf %256, %288 : vector<16x64xf32>
    %290 = vector.extract_strided_slice %289 {offsets = [7, 0], sizes = [1, 64], strides = [1, 1]} : vector<16x64xf32> to vector<1x64xf32>
    %291 = vector.extract_strided_slice %289 {offsets = [15, 0], sizes = [1, 64], strides = [1, 1]} : vector<16x64xf32> to vector<1x64xf32>
    %292 = tpu.concatenate %290, %291 in 0 : vector<1x64xf32>, vector<1x64xf32> -> vector<2x64xf32>
    %c0_116 = arith.constant 0 : index
    %c0_117 = arith.constant 0 : index
    %293 = vector.load %arg15[%c0_116, %c0_117] : memref<1x64xf32, #tpu.memory_space<vmem>>, vector<1x64xf32>
    %294 = arith.mulf %292, %292 : vector<2x64xf32>
    %cst_118 = arith.constant dense<0.000000e+00> : vector<2xf32>
    %295 = vector.multi_reduction <add>, %294, %cst_118 [1] : vector<2x64xf32> to vector<2xf32>
    %296 = vector.shape_cast %295 : vector<2xf32> to vector<2x1xf32>
    %cst_119 = arith.constant 6.400000e+01 : f32
    %297 = vector.broadcast %cst_119 : f32 to vector<2x1xf32>
    %298 = arith.divf %296, %297 : vector<2x1xf32>
    %cst_120 = arith.constant 9.99999974E-6 : f32
    %299 = vector.broadcast %cst_120 : f32 to vector<2x1xf32>
    %300 = arith.addf %298, %299 : vector<2x1xf32>
    %301 = math.rsqrt %300 : vector<2x1xf32>
    %302 = vector.broadcast %301 : vector<2x1xf32> to vector<2x64xf32>
    %303 = arith.mulf %292, %302 : vector<2x64xf32>
    %304 = vector.broadcast %293 : vector<1x64xf32> to vector<2x64xf32>
    %305 = arith.mulf %303, %304 : vector<2x64xf32>
    %306 = arith.truncf %305 : vector<2x64xf32> to vector<2x64xbf16>
    %c0_121 = arith.constant 0 : index
    %c0_122 = arith.constant 0 : index
    %307 = vector.load %arg16[%c0_121, %c0_122] : memref<64x256xbf16, #tpu.memory_space<vmem>>, vector<64x256xbf16>
    %cst_123 = arith.constant dense<0.000000e+00> : vector<2x256xf32>
    %308 = tpu.matmul %306, %307, %cst_123 {dimension_numbers = #tpu.dot_dimension_numbers<[1], [0], [0], [1], [0, 0, 1, 1], [], []>} : vector<2x64xbf16>, vector<64x256xbf16>, vector<2x256xf32> -> vector<2x256xf32>
    %c0_124 = arith.constant 0 : index
    %c0_125 = arith.constant 0 : index
    %309 = vector.load %arg17[%c0_124, %c0_125] : memref<2x256xf32, #tpu.memory_space<vmem>>, vector<2x256xf32>
    tpu.vector_store %arg17[%c0_124, %c0_125], %308 {strides = array<i32>} : memref<2x256xf32, #tpu.memory_space<vmem>>, vector<2x256xf32>,
    return
  }
}

</mosaic_0001>

<llo_original>
// kernel: tile.26
$region0: #{tile.26}
  #allocation0 [shape = 's32[1]{0}', space=sflag, size = 0x4, scoped, tag = 'scoped memory for tile.26']
  %s0 = inlined_call_operand.vmem [shape: f32[8,16], index: 0, kind: input, shape index: {}]
  %s1 = inlined_call_operand.vmem [shape: f32[2,8,4,16], index: 1, kind: output, shape index: {}]
  // Predicated region
  $region2: #{tile.26} parent=0 // pred_check
    _
  $region3: #{tile.26} parent=0 // pred_check_branch
    %3 = sbr.rel (0) target = $region5
  $region4: #{tile.26} parent=0 // pred_region
    _
  $region5: #{tile.26} parent=0 // pred_fallthru
    _
  %v4 = vld [vmem:[%s0] ss:$0 sm:$0xff]
  %5 = vst [vmem:[%s1] sm:$0xf] %v4
  %s6 = scalar_lea.vmem %s1, 32
  %7 = vst [vmem:[%s6] sm:$0xf] %v4
  %s8 = scalar_lea.vmem %s0, 1
  %v9 = vld [vmem:[%s8] ss:$0 sm:$0xff]
  %s10 = scalar_lea.vmem %s1, 4
  %11 = vst [vmem:[%s10] sm:$0xf] %v9
  %s12 = scalar_lea.vmem %s1, 36
  %13 = vst [vmem:[%s12] sm:$0xf] %v9
  %s14 = scalar_lea.vmem %s0, 2
  %v15 = vld [vmem:[%s14] ss:$0 sm:$0xff]
  %s16 = scalar_lea.vmem %s1, 8
  %17 = vst [vmem:[%s16] sm:$0xf] %v15
  %s18 = scalar_lea.vmem %s1, 40
  %19 = vst [vmem:[%s18] sm:$0xf] %v15
  %s20 = scalar_lea.vmem %s0, 3
  %v21 = vld [vmem:[%s20] ss:$0 sm:$0xff]
  %s22 = scalar_lea.vmem %s1, 12
  %23 = vst [vmem:[%s22] sm:$0xf] %v21
  %s24 = scalar_lea.vmem %s1, 44
  %25 = vst [vmem:[%s24] sm:$0xf] %v21
  %s26 = scalar_lea.vmem %s0, 4
  %v27 = vld [vmem:[%s26] ss:$0 sm:$0xff]
  %s28 = scalar_lea.vmem %s1, 16
  %29 = vst [vmem:[%s28] sm:$0xf] %v27
  %s30 = scalar_lea.vmem %s1, 48
  %31 = vst [vmem:[%s30] sm:$0xf] %v27
  %s32 = scalar_lea.vmem %s0, 5
  %v33 = vld [vmem:[%s32] ss:$0 sm:$0xff]
  %s34 = scalar_lea.vmem %s1, 20
  %35 = vst [vmem:[%s34] sm:$0xf] %v33
  %s36 = scalar_lea.vmem %s1, 52
  %37 = vst [vmem:[%s36] sm:$0xf] %v33
  %s38 = scalar_lea.vmem %s0, 6
  %v39 = vld [vmem:[%s38] ss:$0 sm:$0xff]
  %s40 = scalar_lea.vmem %s1, 24
  %41 = vst [vmem:[%s40] sm:$0xf] %v39
  %s42 = scalar_lea.vmem %s1, 56
  %43 = vst [vmem:[%s42] sm:$0xf] %v39
  %s44 = scalar_lea.vmem %s0, 7
  %v45 = vld [vmem:[%s44] ss:$0 sm:$0xff]
  %s46 = scalar_lea.vmem %s1, 28
  %47 = vst [vmem:[%s46] sm:$0xf] %v45
  %s48 = scalar_lea.vmem %s1, 60
  %49 = vst [vmem:[%s48] sm:$0xf] %v45

// kernel: tile.27
$region0: #{tile.27}
  %s0 = inlined_call_operand.vmem [shape: f32[2,8,4,16], index: 0, kind: input, shape index: {}]
  %s1 = inlined_call_operand.vmem [shape: f32[16,64], index: 1, kind: output, shape index: {}]
  $region1: #{tile.27} parent=0
    #allocation0 [shape = 'u8[65536]{0}', space=vmem, size = 0x10000, scoped, tag = 'scoped mem for input reshape']
    %s3 = sshllo.u32 0, 4
    %s4 = smul.addr 4, 15
    %s5 = scalar_lea.vmem %s0, %s4
    %v6 = vld [vmem:[%s5] sm:%s3]
    %s7 = scalar_lea.vmem [#allocation0], 120
    %8 = vst [vmem:[%s7] sm:%s3] %v6
    %s9 = smul.addr 4, 14
    %s10 = scalar_lea.vmem %s0, %s9
    %v11 = vld [vmem:[%s10] sm:%s3]
    %s12 = scalar_lea.vmem [#allocation0], 112
    %13 = vst [vmem:[%s12] sm:%s3] %v11
    %s14 = smul.addr 4, 13
    %s15 = scalar_lea.vmem %s0, %s14
    %v16 = vld [vmem:[%s15] sm:%s3]
    %s17 = scalar_lea.vmem [#allocation0], 104
    %18 = vst [vmem:[%s17] sm:%s3] %v16
    %s19 = smul.addr 4, 12
    %s20 = scalar_lea.vmem %s0, %s19
    %v21 = vld [vmem:[%s20] sm:%s3]
    %s22 = scalar_lea.vmem [#allocation0], 96
    %23 = vst [vmem:[%s22] sm:%s3] %v21
    %s24 = smul.addr 4, 11
    %s25 = scalar_lea.vmem %s0, %s24
    %v26 = vld [vmem:[%s25] sm:%s3]
    %s27 = scalar_lea.vmem [#allocation0], 88
    %28 = vst [vmem:[%s27] sm:%s3] %v26
    %s29 = smul.addr 4, 10
    %s30 = scalar_lea.vmem %s0, %s29
    %v31 = vld [vmem:[%s30] sm:%s3]
    %s32 = scalar_lea.vmem [#allocation0], 80
    %33 = vst [vmem:[%s32] sm:%s3] %v31
    %s34 = smul.addr 4, 9
    %s35 = scalar_lea.vmem %s0, %s34
    %v36 = vld [vmem:[%s35] sm:%s3]
    %s37 = scalar_lea.vmem [#allocation0], 72
    %38 = vst [vmem:[%s37] sm:%s3] %v36
    %s39 = smul.addr 4, 8
    %s40 = scalar_lea.vmem %s0, %s39
    %v41 = vld [vmem:[%s40] sm:%s3]
    %s42 = scalar_lea.vmem [#allocation0], 64
    %43 = vst [vmem:[%s42] sm:%s3] %v41
    %s44 = smul.addr 4, 7
    %s45 = scalar_lea.vmem %s0, %s44
    %v46 = vld [vmem:[%s45] sm:%s3]
    %s47 = scalar_lea.vmem [#allocation0], 56
    %48 = vst [vmem:[%s47] sm:%s3] %v46
    %s49 = smul.addr 4, 6
    %s50 = scalar_lea.vmem %s0, %s49
    %v51 = vld [vmem:[%s50] sm:%s3]
    %s52 = scalar_lea.vmem [#allocation0], 48
    %53 = vst [vmem:[%s52] sm:%s3] %v51
    %s54 = smul.addr 4, 5
    %s55 = scalar_lea.vmem %s0, %s54
    %v56 = vld [vmem:[%s55] sm:%s3]
    %s57 = scalar_lea.vmem [#allocation0], 40
    %58 = vst [vmem:[%s57] sm:%s3] %v56
    %s59 = smul.addr 4, 4
    %s60 = scalar_lea.vmem %s0, %s59
    %v61 = vld [vmem:[%s60] sm:%s3]
    %s62 = scalar_lea.vmem [#allocation0], 32
    %63 = vst [vmem:[%s62] sm:%s3] %v61
    %s64 = smul.addr 4, 3
    %s65 = scalar_lea.vmem %s0, %s64
    %v66 = vld [vmem:[%s65] sm:%s3]
    %s67 = scalar_lea.vmem [#allocation0], 24
    %68 = vst [vmem:[%s67] sm:%s3] %v66
    %s69 = smul.addr 4, 2
    %s70 = scalar_lea.vmem %s0, %s69
    %v71 = vld [vmem:[%s70] sm:%s3]
    %s72 = scalar_lea.vmem [#allocation0], 16
    %73 = vst [vmem:[%s72] sm:%s3] %v71
    %s74 = scalar_lea.vmem %s0, 4
    %v75 = vld [vmem:[%s74] sm:%s3]
    %s76 = scalar_lea.vmem [#allocation0], 8
    %77 = vst [vmem:[%s76] sm:%s3] %v75
    %v78 = vld [vmem:[%s0] sm:%s3]
    %79 = vst [vmem:[#allocation0] sm:%s3] %v78
    %v80 = vld [vmem:[#allocation0] ss:$8 sm:$0xf]
    %v81 = vld [vmem:[#allocation0] ss:$8 sm:$0xf0]
    %vm82 = vcmask 1047556
    %v83 = vsel %vm82, %v81, %v80
    %vm84 = vcmask 130048
    %85 = vst.msk [vmem:[%s1] sm:$0xff] %vm84, %v83
    %s86 = scalar_lea.vmem [#allocation0], 64
    %v87 = vld [vmem:[%s86] ss:$8 sm:$0xf]
    %s88 = scalar_lea.vmem [#allocation0], 64
    %v89 = vld [vmem:[%s88] ss:$8 sm:$0xf0]
    %vm90 = vcmask 1047556
    %v91 = vsel %vm90, %v89, %v87
    %vm92 = vcmask 130048
    %s93 = scalar_lea.vmem %s1, 8
    %94 = vst.msk [vmem:[%s93] sm:$0xff] %vm92, %v91
    %s95 = scalar_lea.vmem [#allocation0], 3
    %v96 = vld [vmem:[%s95] ss:$8 sm:$0xf]
    %s97 = scalar_lea.vmem [#allocation0], 3
    %v98 = vld [vmem:[%s97] ss:$8 sm:$0xf0]
    %vm99 = vcmask 1047556
    %v100 = vsel %vm99, %v98, %v96
    %101 = vrot.lane.b32.xlu0 %v100, 48
    %v102 = vpop.permute.xlu0 %101
    %vm103 = vcmask 523648
    %104 = vst.msk [vmem:[%s1] sm:$0xff] %vm103, %v102
    %s105 = scalar_lea.vmem [#allocation0], 67
    %v106 = vld [vmem:[%s105] ss:$8 sm:$0xf]
    %s107 = scalar_lea.vmem [#allocation0], 67
    %v108 = vld [vmem:[%s107] ss:$8 sm:$0xf0]
    %vm109 = vcmask 1047556
    %v110 = vsel %vm109, %v108, %v106
    %111 = vrot.lane.b32.xlu0 %v110, 48
    %v112 = vpop.permute.xlu0 %111
    %vm113 = vcmask 523648
    %s114 = scalar_lea.vmem %s1, 8
    %115 = vst.msk [vmem:[%s114] sm:$0xff] %vm113, %v112
    %s116 = scalar_lea.vmem [#allocation0], 2
    %v117 = vld [vmem:[%s116] ss:$8 sm:$0xf]
    %s118 = scalar_lea.vmem [#allocation0], 2
    %v119 = vld [vmem:[%s118] ss:$8 sm:$0xf0]
    %vm120 = vcmask 1047556
    %v121 = vsel %vm120, %v119, %v117
    %122 = vrot.lane.b32.xlu0 %v121, 32
    %v123 = vpop.permute.xlu0 %122
    %vm124 = vcmask 392448
    %125 = vst.msk [vmem:[%s1] sm:$0xff] %vm124, %v123
    %s126 = scalar_lea.vmem [#allocation0], 66
    %v127 = vld [vmem:[%s126] ss:$8 sm:$0xf]
    %s128 = scalar_lea.vmem [#allocation0], 66
    %v129 = vld [vmem:[%s128] ss:$8 sm:$0xf0]
    %vm130 = vcmask 1047556
    %v131 = vsel %vm130, %v129, %v127
    %132 = vrot.lane.b32.xlu0 %v131, 32
    %v133 = vpop.permute.xlu0 %132
    %vm134 = vcmask 392448
    %s135 = scalar_lea.vmem %s1, 8
    %136 = vst.msk [vmem:[%s135] sm:$0xff] %vm134, %v133
    %s137 = scalar_lea.vmem [#allocation0], 1
    %v138 = vld [vmem:[%s137] ss:$8 sm:$0xf]
    %s139 = scalar_lea.vmem [#allocation0], 1
    %v140 = vld [vmem:[%s139] ss:$8 sm:$0xf0]
    %vm141 = vcmask 1047556
    %v142 = vsel %vm141, %v140, %v138
    %143 = vrot.lane.b32.xlu0 %v142, 16
    %v144 = vpop.permute.xlu0 %143
    %vm145 = vcmask 261248
    %146 = vst.msk [vmem:[%s1] sm:$0xff] %vm145, %v144
    %s147 = scalar_lea.vmem [#allocation0], 65
    %v148 = vld [vmem:[%s147] ss:$8 sm:$0xf]
    %s149 = scalar_lea.vmem [#allocation0], 65
    %v150 = vld [vmem:[%s149] ss:$8 sm:$0xf0]
    %vm151 = vcmask 1047556
    %v152 = vsel %vm151, %v150, %v148
    %153 = vrot.lane.b32.xlu0 %v152, 16
    %v154 = vpop.permute.xlu0 %153
    %vm155 = vcmask 261248
    %s156 = scalar_lea.vmem %s1, 8
    %157 = vst.msk [vmem:[%s156] sm:$0xff] %vm155, %v154

// kernel: tile.38
$region0: #{tile.38}
  #allocation0 [shape = 's32[1]{0}', space=sflag, size = 0x4, scoped, tag = 'scoped memory for tile.38']
  %s0 = inlined_call_operand.vmem [shape: f32[8,16], index: 0, kind: input, shape index: {}]
  %s1 = inlined_call_operand.vmem [shape: f32[2,8,2,16], index: 1, kind: output, shape index: {}]
  // Predicated region
  $region2: #{tile.38} parent=0 // pred_check
    _
  $region3: #{tile.38} parent=0 // pred_check_branch
    %3 = sbr.rel (0) target = $region5
  $region4: #{tile.38} parent=0 // pred_region
    _
  $region5: #{tile.38} parent=0 // pred_fallthru
    _
  %v4 = vld [vmem:[%s0] ss:$0 sm:$0xff]
  %5 = vst [vmem:[%s1] sm:$0x3] %v4
  %s6 = scalar_lea.vmem %s1, 16
  %7 = vst [vmem:[%s6] sm:$0x3] %v4
  %s8 = scalar_lea.vmem %s0, 1
  %v9 = vld [vmem:[%s8] ss:$0 sm:$0xff]
  %s10 = scalar_lea.vmem %s1, 2
  %11 = vst [vmem:[%s10] sm:$0x3] %v9
  %s12 = scalar_lea.vmem %s1, 18
  %13 = vst [vmem:[%s12] sm:$0x3] %v9
  %s14 = scalar_lea.vmem %s0, 2
  %v15 = vld [vmem:[%s14] ss:$0 sm:$0xff]
  %s16 = scalar_lea.vmem %s1, 4
  %17 = vst [vmem:[%s16] sm:$0x3] %v15
  %s18 = scalar_lea.vmem %s1, 20
  %19 = vst [vmem:[%s18] sm:$0x3] %v15
  %s20 = scalar_lea.vmem %s0, 3
  %v21 = vld [vmem:[%s20] ss:$0 sm:$0xff]
  %s22 = scalar_lea.vmem %s1, 6
  %23 = vst [vmem:[%s22] sm:$0x3] %v21
  %s24 = scalar_lea.vmem %s1, 22
  %25 = vst [vmem:[%s24] sm:$0x3] %v21
  %s26 = scalar_lea.vmem %s0, 4
  %v27 = vld [vmem:[%s26] ss:$0 sm:$0xff]
  %s28 = scalar_lea.vmem %s1, 8
  %29 = vst [vmem:[%s28] sm:$0x3] %v27
  %s30 = scalar_lea.vmem %s1, 24
  %31 = vst [vmem:[%s30] sm:$0x3] %v27
  %s32 = scalar_lea.vmem %s0, 5
  %v33 = vld [vmem:[%s32] ss:$0 sm:$0xff]
  %s34 = scalar_lea.vmem %s1, 10
  %35 = vst [vmem:[%s34] sm:$0x3] %v33
  %s36 = scalar_lea.vmem %s1, 26
  %37 = vst [vmem:[%s36] sm:$0x3] %v33
  %s38 = scalar_lea.vmem %s0, 6
  %v39 = vld [vmem:[%s38] ss:$0 sm:$0xff]
  %s40 = scalar_lea.vmem %s1, 12
  %41 = vst [vmem:[%s40] sm:$0x3] %v39
  %s42 = scalar_lea.vmem %s1, 28
  %43 = vst [vmem:[%s42] sm:$0x3] %v39
  %s44 = scalar_lea.vmem %s0, 7
  %v45 = vld [vmem:[%s44] ss:$0 sm:$0xff]
  %s46 = scalar_lea.vmem %s1, 14
  %47 = vst [vmem:[%s46] sm:$0x3] %v45
  %s48 = scalar_lea.vmem %s1, 30
  %49 = vst [vmem:[%s48] sm:$0x3] %v45

// kernel: tile.39
$region0: #{tile.39}
  %s0 = inlined_call_operand.vmem [shape: f32[2,8,2,16], index: 0, kind: input, shape index: {}]
  %s1 = inlined_call_operand.vmem [shape: f32[16,32], index: 1, kind: output, shape index: {}]
  $region1: #{tile.39} parent=0
    #allocation0 [shape = 'u8[65536]{0}', space=vmem, size = 0x10000, scoped, tag = 'scoped mem for input reshape']
    %s3 = sshllo.u32 0, 2
    %s4 = smul.addr 2, 15
    %s5 = scalar_lea.vmem %s0, %s4
    %v6 = vld [vmem:[%s5] sm:%s3]
    %s7 = scalar_lea.vmem [#allocation0], 120
    %8 = vst [vmem:[%s7] sm:%s3] %v6
    %s9 = smul.addr 2, 14
    %s10 = scalar_lea.vmem %s0, %s9
    %v11 = vld [vmem:[%s10] sm:%s3]
    %s12 = scalar_lea.vmem [#allocation0], 112
    %13 = vst [vmem:[%s12] sm:%s3] %v11
    %s14 = smul.addr 2, 13
    %s15 = scalar_lea.vmem %s0, %s14
    %v16 = vld [vmem:[%s15] sm:%s3]
    %s17 = scalar_lea.vmem [#allocation0], 104
    %18 = vst [vmem:[%s17] sm:%s3] %v16
    %s19 = smul.addr 2, 12
    %s20 = scalar_lea.vmem %s0, %s19
    %v21 = vld [vmem:[%s20] sm:%s3]
    %s22 = scalar_lea.vmem [#allocation0], 96
    %23 = vst [vmem:[%s22] sm:%s3] %v21
    %s24 = smul.addr 2, 11
    %s25 = scalar_lea.vmem %s0, %s24
    %v26 = vld [vmem:[%s25] sm:%s3]
    %s27 = scalar_lea.vmem [#allocation0], 88
    %28 = vst [vmem:[%s27] sm:%s3] %v26
    %s29 = smul.addr 2, 10
    %s30 = scalar_lea.vmem %s0, %s29
    %v31 = vld [vmem:[%s30] sm:%s3]
    %s32 = scalar_lea.vmem [#allocation0], 80
    %33 = vst [vmem:[%s32] sm:%s3] %v31
    %s34 = smul.addr 2, 9
    %s35 = scalar_lea.vmem %s0, %s34
    %v36 = vld [vmem:[%s35] sm:%s3]
    %s37 = scalar_lea.vmem [#allocation0], 72
    %38 = vst [vmem:[%s37] sm:%s3] %v36
    %s39 = smul.addr 2, 8
    %s40 = scalar_lea.vmem %s0, %s39
    %v41 = vld [vmem:[%s40] sm:%s3]
    %s42 = scalar_lea.vmem [#allocation0], 64
    %43 = vst [vmem:[%s42] sm:%s3] %v41
    %s44 = smul.addr 2, 7
    %s45 = scalar_lea.vmem %s0, %s44
    %v46 = vld [vmem:[%s45] sm:%s3]
    %s47 = scalar_lea.vmem [#allocation0], 56
    %48 = vst [vmem:[%s47] sm:%s3] %v46
    %s49 = smul.addr 2, 6
    %s50 = scalar_lea.vmem %s0, %s49
    %v51 = vld [vmem:[%s50] sm:%s3]
    %s52 = scalar_lea.vmem [#allocation0], 48
    %53 = vst [vmem:[%s52] sm:%s3] %v51
    %s54 = smul.addr 2, 5
    %s55 = scalar_lea.vmem %s0, %s54
    %v56 = vld [vmem:[%s55] sm:%s3]
    %s57 = scalar_lea.vmem [#allocation0], 40
    %58 = vst [vmem:[%s57] sm:%s3] %v56
    %s59 = smul.addr 2, 4
    %s60 = scalar_lea.vmem %s0, %s59
    %v61 = vld [vmem:[%s60] sm:%s3]
    %s62 = scalar_lea.vmem [#allocation0], 32
    %63 = vst [vmem:[%s62] sm:%s3] %v61
    %s64 = smul.addr 2, 3
    %s65 = scalar_lea.vmem %s0, %s64
    %v66 = vld [vmem:[%s65] sm:%s3]
    %s67 = scalar_lea.vmem [#allocation0], 24
    %68 = vst [vmem:[%s67] sm:%s3] %v66
    %s69 = smul.addr 2, 2
    %s70 = scalar_lea.vmem %s0, %s69
    %v71 = vld [vmem:[%s70] sm:%s3]
    %s72 = scalar_lea.vmem [#allocation0], 16
    %73 = vst [vmem:[%s72] sm:%s3] %v71
    %s74 = scalar_lea.vmem %s0, 2
    %v75 = vld [vmem:[%s74] sm:%s3]
    %s76 = scalar_lea.vmem [#allocation0], 8
    %77 = vst [vmem:[%s76] sm:%s3] %v75
    %v78 = vld [vmem:[%s0] sm:%s3]
    %79 = vst [vmem:[#allocation0] sm:%s3] %v78
    %v80 = vld [vmem:[#allocation0] ss:$8 sm:$0xf]
    %v81 = vld [vmem:[#allocation0] ss:$8 sm:$0xf0]
    %vm82 = vcmask 1047556
    %v83 = vsel %vm82, %v81, %v80
    %vm84 = vcmask 130048
    %85 = vst.msk [vmem:[%s1] sm:$0xff] %vm84, %v83
    %s86 = scalar_lea.vmem [#allocation0], 64
    %v87 = vld [vmem:[%s86] ss:$8 sm:$0xf]
    %s88 = scalar_lea.vmem [#allocation0], 64
    %v89 = vld [vmem:[%s88] ss:$8 sm:$0xf0]
    %vm90 = vcmask 1047556
    %v91 = vsel %vm90, %v89, %v87
    %vm92 = vcmask 130048
    %s93 = scalar_lea.vmem %s1, 8
    %94 = vst.msk [vmem:[%s93] sm:$0xff] %vm92, %v91
    %s95 = scalar_lea.vmem [#allocation0], 1
    %v96 = vld [vmem:[%s95] ss:$8 sm:$0xf]
    %s97 = scalar_lea.vmem [#allocation0], 1
    %v98 = vld [vmem:[%s97] ss:$8 sm:$0xf0]
    %vm99 = vcmask 1047556
    %v100 = vsel %vm99, %v98, %v96
    %101 = vrot.lane.b32.xlu0 %v100, 16
    %v102 = vpop.permute.xlu0 %101
    %vm103 = vcmask 261248
    %104 = vst.msk [vmem:[%s1] sm:$0xff] %vm103, %v102
    %s105 = scalar_lea.vmem [#allocation0], 65
    %v106 = vld [vmem:[%s105] ss:$8 sm:$0xf]
    %s107 = scalar_lea.vmem [#allocation0], 65
    %v108 = vld [vmem:[%s107] ss:$8 sm:$0xf0]
    %vm109 = vcmask 1047556
    %v110 = vsel %vm109, %v108, %v106
    %111 = vrot.lane.b32.xlu0 %v110, 16
    %v112 = vpop.permute.xlu0 %111
    %vm113 = vcmask 261248
    %s114 = scalar_lea.vmem %s1, 8
    %115 = vst.msk [vmem:[%s114] sm:$0xff] %vm113, %v112

// kernel: transformer_forward.1
$region0: #{transformer_forward.1}
  #allocation0 [shape = 'u32[]', space=smem, size = 0x4, offset = 0x4, fixed_abs, tag = 'smem constant byte address 0x4 - core index']
  #allocation1 [shape = 'u32[144,128]{1,0:T(1,128)}', space=vmem, size = 0x12000, scoped, tag = 'internal scratch']
  %s0 = inlined_call_operand.vmem [shape: f32[16,64], index: 0, kind: input, shape index: {}]
  %s1 = inlined_call_operand.vmem [shape: f32[16,64], index: 1, kind: input, shape index: {}]
  %s2 = inlined_call_operand.vmem [shape: f32[16,64], index: 2, kind: input, shape index: {}]
  %s3 = inlined_call_operand.vmem [shape: f32[16,64], index: 3, kind: input, shape index: {}]
  %s4 = inlined_call_operand.vmem [shape: f32[16,32], index: 4, kind: input, shape index: {}]
  %s5 = inlined_call_operand.vmem [shape: f32[16,32], index: 5, kind: input, shape index: {}]
  %s6 = inlined_call_operand.vmem [shape: f32[16,32], index: 6, kind: input, shape index: {}]
  %s7 = inlined_call_operand.vmem [shape: f32[16,16], index: 7, kind: input, shape index: {}]
  %s8 = inlined_call_operand.vmem [shape: f32[2,1,64], index: 8, kind: input, shape index: {}]
  %s9 = inlined_call_operand.vmem [shape: bf16[2,64,128], index: 9, kind: input, shape index: {}]
  %s10 = inlined_call_operand.vmem [shape: bf16[2,64,64], index: 10, kind: input, shape index: {}]
  %s11 = inlined_call_operand.vmem [shape: f32[2,1,64], index: 11, kind: input, shape index: {}]
  %s12 = inlined_call_operand.vmem [shape: bf16[2,64,192], index: 12, kind: input, shape index: {}]
  %s13 = inlined_call_operand.vmem [shape: bf16[2,192,64], index: 13, kind: input, shape index: {}]
  %s14 = inlined_call_operand.vmem [shape: bf16[2,64,192], index: 14, kind: input, shape index: {}]
  %s15 = inlined_call_operand.vmem [shape: f32[1,64], index: 15, kind: input, shape index: {}]
  %s16 = inlined_call_operand.vmem [shape: bf16[64,256], index: 16, kind: input, shape index: {}]
  %s17 = inlined_call_operand.vmem [shape: f32[2,256], index: 17, kind: output, shape index: {}]
  %s18 = sld [smem:[#allocation0]]
  $region78: #{transformer_forward.1} parent=0
    _
  %s20 = ssub.s32 1, %s18
  %s21 = scalar_select 0, %s20, %s18
  // Predicated region
  $region2: #{transformer_forward.1} parent=0 // pred_check
    _
  $region3: #{transformer_forward.1} parent=0 // pred_check_branch
    %23 = sbr.rel (0) target = $region5
  $region4: #{transformer_forward.1} parent=0 // pred_region
    _
  $region5: #{transformer_forward.1} parent=0 // pred_fallthru
    _
  // Predicated region
  $region6: #{transformer_forward.1} parent=0 // pred_check
    _
  $region7: #{transformer_forward.1} parent=0 // pred_check_branch
    %25 = sbr.rel (0) target = $region9
  $region8: #{transformer_forward.1} parent=0 // pred_region
    _
  $region9: #{transformer_forward.1} parent=0 // pred_fallthru
    _
  // Predicated region
  $region10: #{transformer_forward.1} parent=0 // pred_check
    _
  $region11: #{transformer_forward.1} parent=0 // pred_check_branch
    %27 = sbr.rel (0) target = $region13
  $region12: #{transformer_forward.1} parent=0 // pred_region
    _
  $region13: #{transformer_forward.1} parent=0 // pred_fallthru
    _
  // Predicated region
  $region14: #{transformer_forward.1} parent=0 // pred_check
    _
  $region15: #{transformer_forward.1} parent=0 // pred_check_branch
    %29 = sbr.rel (0) target = $region17
  $region16: #{transformer_forward.1} parent=0 // pred_region
    _
  $region17: #{transformer_forward.1} parent=0 // pred_fallthru
    _
  // Predicated region
  $region18: #{transformer_forward.1} parent=0 // pred_check
    _
  $region19: #{transformer_forward.1} parent=0 // pred_check_branch
    %31 = sbr.rel (0) target = $region21
  $region20: #{transformer_forward.1} parent=0 // pred_region
    _
  $region21: #{transformer_forward.1} parent=0 // pred_fallthru
    _
  // Predicated region
  $region22: #{transformer_forward.1} parent=0 // pred_check
    _
  $region23: #{transformer_forward.1} parent=0 // pred_check_branch
    %33 = sbr.rel (0) target = $region25
  $region24: #{transformer_forward.1} parent=0 // pred_region
    _
  $region25: #{transformer_forward.1} parent=0 // pred_fallthru
    _
  // Predicated region
  $region26: #{transformer_forward.1} parent=0 // pred_check
    _
  $region27: #{transformer_forward.1} parent=0 // pred_check_branch
    %35 = sbr.rel (0) target = $region29
  $region28: #{transformer_forward.1} parent=0 // pred_region
    _
  $region29: #{transformer_forward.1} parent=0 // pred_fallthru
    _
  // Predicated region
  $region30: #{transformer_forward.1} parent=0 // pred_check
    _
  $region31: #{transformer_forward.1} parent=0 // pred_check_branch
    %37 = sbr.rel (0) target = $region33
  $region32: #{transformer_forward.1} parent=0 // pred_region
    _
  $region33: #{transformer_forward.1} parent=0 // pred_fallthru
    _
  // Predicated region
  $region34: #{transformer_forward.1} parent=0 // pred_check
    _
  $region35: #{transformer_forward.1} parent=0 // pred_check_branch
    %39 = sbr.rel (0) target = $region37
  $region36: #{transformer_forward.1} parent=0 // pred_region
    _
  $region37: #{transformer_forward.1} parent=0 // pred_fallthru
    _
  // Predicated region
  $region38: #{transformer_forward.1} parent=0 // pred_check
    _
  $region39: #{transformer_forward.1} parent=0 // pred_check_branch
    %41 = sbr.rel (0) target = $region41
  $region40: #{transformer_forward.1} parent=0 // pred_region
    _
  $region41: #{transformer_forward.1} parent=0 // pred_fallthru
    _
  // Predicated region
  $region42: #{transformer_forward.1} parent=0 // pred_check
    _
  $region43: #{transformer_forward.1} parent=0 // pred_check_branch
    %43 = sbr.rel (0) target = $region45
  $region44: #{transformer_forward.1} parent=0 // pred_region
    _
  $region45: #{transformer_forward.1} parent=0 // pred_fallthru
    _
  // Predicated region
  $region46: #{transformer_forward.1} parent=0 // pred_check
    _
  $region47: #{transformer_forward.1} parent=0 // pred_check_branch
    %45 = sbr.rel (0) target = $region49
  $region48: #{transformer_forward.1} parent=0 // pred_region
    _
  $region49: #{transformer_forward.1} parent=0 // pred_fallthru
    _
  // Predicated region
  $region50: #{transformer_forward.1} parent=0 // pred_check
    _
  $region51: #{transformer_forward.1} parent=0 // pred_check_branch
    %47 = sbr.rel (0) target = $region53
  $region52: #{transformer_forward.1} parent=0 // pred_region
    _
  $region53: #{transformer_forward.1} parent=0 // pred_fallthru
    _
  // Predicated region
  $region54: #{transformer_forward.1} parent=0 // pred_check
    _
  $region55: #{transformer_forward.1} parent=0 // pred_check_branch
    %49 = sbr.rel (0) target = $region57
  $region56: #{transformer_forward.1} parent=0 // pred_region
    _
  $region57: #{transformer_forward.1} parent=0 // pred_fallthru
    _
  // Predicated region
  $region58: #{transformer_forward.1} parent=0 // pred_check
    _
  $region59: #{transformer_forward.1} parent=0 // pred_check_branch
    %51 = sbr.rel (0) target = $region61
  $region60: #{transformer_forward.1} parent=0 // pred_region
    _
  $region61: #{transformer_forward.1} parent=0 // pred_fallthru
    _
  // Predicated region
  $region62: #{transformer_forward.1} parent=0 // pred_check
    _
  $region63: #{transformer_forward.1} parent=0 // pred_check_branch
    %53 = sbr.rel (0) target = $region65
  $region64: #{transformer_forward.1} parent=0 // pred_region
    _
  $region65: #{transformer_forward.1} parent=0 // pred_fallthru
    _
  // Predicated region
  $region66: #{transformer_forward.1} parent=0 // pred_check
    _
  $region67: #{transformer_forward.1} parent=0 // pred_check_branch
    %55 = sbr.rel (0) target = $region69
  $region68: #{transformer_forward.1} parent=0 // pred_region
    _
  $region69: #{transformer_forward.1} parent=0 // pred_fallthru
    _
  %v57 = vld [vmem:[%s0] sm:$0xff]
  %v58 = vld [vmem:[%s0 + $0x8] sm:$0xff]
  %v59 = vld [vmem:[%s7] sm:$0xff]
  %v60 = vld [vmem:[%s7 + $0x8] sm:$0xff]
  %v61 = vld [vmem:[%s1] sm:$0xff]
  %v62 = vld [vmem:[%s1 + $0x8] sm:$0xff]
  %v63 = vld [vmem:[%s2] sm:$0xff]
  %v64 = vld [vmem:[%s2 + $0x8] sm:$0xff]
  %v65 = vld [vmem:[%s3] sm:$0xff]
  %v66 = vld [vmem:[%s3 + $0x8] sm:$0xff]
  %v67 = vld [vmem:[%s4] sm:$0xff]
  %v68 = vld [vmem:[%s4 + $0x8] sm:$0xff]
  %v69 = vld [vmem:[%s5] sm:$0xff]
  %v70 = vld [vmem:[%s5 + $0x8] sm:$0xff]
  %v71 = vld [vmem:[%s6] sm:$0xff]
  %v72 = vld [vmem:[%s6 + $0x8] sm:$0xff]
  %v73 = vld [vmem:[%s8] sm:$0x1]
  %v74 = vmul.f32 %v57, %v57
  %v75 = vmul.f32 %v58, %v58
  %vm76 = vcmask 523264
  %v77 = vsel %vm76, %v74, 0.0
  %78 = vadd.xlane.f32.xlu0 %v77
  %v79 = vpop.xlane.xlu0 %78
  %v80 = vsel %vm76, %v75, 0.0
  %81 = vadd.xlane.f32.xlu0 %v80
  %v82 = vpop.xlane.xlu0 %81
  %v83 = vrcp.pop 64.0
  %v84 = vmul.f32 %v79, %v83
  %v85 = vmul.f32 %v82, %v83
  %v86 = vadd.f32 %v84, 1e-05
  %v87 = vadd.f32 %v85, 1e-05
  %v88 = vrsqrt.pop %v86
  %v89 = vrsqrt.pop %v87
  %v90 = vmul.f32 %v57, %v88
  %v91 = vmul.f32 %v58, %v89
  %v93 = vlaneseq
  %v94 = vshrl.u32 %v93, 7
  %v95 = vsub.s32 0, %v94
  %v96 = vrot.slane %v73, %v95
  %v98 = vmul.f32 %v90, %v96
  %v99 = vmul.f32 %v91, %v96
  %v100 = vpack.c.bf16 %v99, %v98
  %v101 = vld [vmem:[%s9] sm:$0xf]
  %v102 = vld [vmem:[%s9 + $0x4] sm:$0xf]
  %v103 = vld [vmem:[%s9 + $0x8] sm:$0xf]
  %v104 = vld [vmem:[%s9 + $0xc] sm:$0xf]
  %v105 = vld [vmem:[%s9 + $0x10] sm:$0xf]
  %v106 = vld [vmem:[%s9 + $0x14] sm:$0xf]
  %v107 = vld [vmem:[%s9 + $0x18] sm:$0xf]
  %v108 = vld [vmem:[%s9 + $0x1c] sm:$0xf]
  %v117 = vunpack.c.l.b16 %v101
  %v118 = vunpack.c.l.b16 %v102
  %v119 = vunpack.c.l.b16 %v103
  %v120 = vunpack.c.l.b16 %v104
  %v121 = vunpack.c.l.b16 %v105
  %v122 = vunpack.c.l.b16 %v106
  %v123 = vunpack.c.l.b16 %v107
  %v124 = vunpack.c.l.b16 %v108
  %v125 = vpack.c.b16 %v118, %v117
  %v126 = vpack.c.b16 %v120, %v119
  %v127 = vpack.c.b16 %v122, %v121
  %v128 = vpack.c.b16 %v124, %v123
  %v134 = vsel %vm76, %v100, 0
  %136 = vmatprep.subr.bf16.mxu0 0
  %137 = vmatpush1.bf16.msra.mxu0 %v125
  %138 = vmatprep.subr.bf16.mxu0 0
  %139 = vmatpush1.bf16.msra.mxu0 %v126
  %140 = vmatprep.subr.bf16.mxu0 0
  %141 = vmatpush1.bf16.msra.mxu0 %v127
  %142 = vmatprep.subr.bf16.mxu0 0
  %143 = vmatpush1.bf16.msra.mxu0 %v128
  %144 = vmatprep.subr.bf16.mxu0 0
  %145 = vmatpush1.bf16.msra.mxu0 0
  %146 = vmatprep.subr.bf16.mxu0 0
  %147 = vmatpush1.bf16.msra.mxu0 0
  %148 = vmatprep.subr.bf16.mxu0 0
  %149 = vmatpush1.bf16.msra.mxu0 0
  %150 = vmatprep.subr.bf16.mxu0 0
  %151 = vmatpush1.bf16.msra.mxu0 0
  %152 = vmatprep.subr.bf16.mxu0 0
  %153 = vmatpush1.bf16.msra.mxu0 0
  %154 = vmatprep.subr.bf16.mxu0 0
  %155 = vmatpush1.bf16.msra.mxu0 0
  %156 = vmatprep.subr.bf16.mxu0 0
  %157 = vmatpush1.bf16.msra.mxu0 0
  %158 = vmatprep.subr.bf16.mxu0 0
  %159 = vmatpush1.bf16.msra.mxu0 0
  %160 = vmatprep.subr.bf16.mxu0 0
  %161 = vmatpush1.bf16.msra.mxu0 0
  %162 = vmatprep.subr.bf16.mxu0 0
  %163 = vmatpush1.bf16.msra.mxu0 0
  %164 = vmatprep.subr.bf16.mxu0 0
  %165 = vmatpush1.bf16.msra.mxu0 0
  %166 = vmatprep.subr.bf16.mxu0 0
  %167 = vmatpush1.bf16.msra.mxu0 0
  %168 = vmatprep.mubr.bf16.mxu0 0
  %169 = vmatmul.mubr.bf16.gmra.mrb[0].mxu0 %v134
  %v170 = vpop.f32.mrb[0].mxu0
  %v171 = vadd.f32 0.0, %v170
  %v172 = vpop.f32.mrb[0].mxu0
  %v173 = vpop.f32.mrb[0].mxu0
  %v174 = vadd.f32 0.0, %v173
  %v175 = vpop.f32.mrb[0].mxu0
  %176 = vdwg.mxu0
  %vm177 = vcmask 1048064
  %178 = vrot.lane.b32.xlu0 %v171, 64
  %v179 = vpop.permute.xlu0 %178
  %v180 = vsel %vm177, %v179, %v171
  %181 = vrot.lane.b32.xlu0 %v174, 64
  %v182 = vpop.permute.xlu0 %181
  %v183 = vsel %vm177, %v182, %v174
  %184 = vrot.lane.b32.xlu0 %v180, 64
  %v185 = vpop.permute.xlu0 %184
  %186 = vrot.lane.b32.xlu0 %v183, 64
  %v187 = vpop.permute.xlu0 %186
  %v188 = vsel %vm177, %v185, %v171
  %v189 = vsel %vm177, %v187, %v174
  %v190 = vmul.f32 %v171, %v61
  %v191 = vmul.f32 %v174, %v62
  %194 = vrot.lane.b32.xlu0 %v63, 1
  %v195 = vpop.permute.xlu0 %194
  %196 = vrot.lane.b32.xlu0 %v64, 1
  %v197 = vpop.permute.xlu0 %196
  %v200 = vmul.f32 %v188, %v195
  %v201 = vmul.f32 %v189, %v197
  %204 = vrot.lane.b32.xlu0 %v200, 127
  %v205 = vpop.permute.xlu0 %204
  %206 = vrot.lane.b32.xlu0 %v201, 127
  %v207 = vpop.permute.xlu0 %206
  %v210 = vadd.f32 %v190, %v205
  %v211 = vadd.f32 %v191, %v207
  %214 = vrot.lane.b32.xlu0 %v65, 63
  %v215 = vpop.permute.xlu0 %214
  %216 = vrot.lane.b32.xlu0 %v66, 63
  %v217 = vpop.permute.xlu0 %216
  %v220 = vmul.f32 %v188, %v215
  %v221 = vmul.f32 %v189, %v217
  %224 = vrot.lane.b32.xlu0 %v220, 65
  %v225 = vpop.permute.xlu0 %224
  %226 = vrot.lane.b32.xlu0 %v221, 65
  %v227 = vpop.permute.xlu0 %226
  %v230 = vadd.f32 %v210, %v225
  %v231 = vadd.f32 %v211, %v227
  %234 = vrot.lane.b32.xlu0 %v171, 64
  %v235 = vpop.permute.xlu0 %234
  %236 = vrot.lane.b32.xlu0 %v174, 64
  %v237 = vpop.permute.xlu0 %236
  %vm240 = vcmask 1047808
  %241 = vrot.lane.b32.xlu0 %v235, 32
  %v242 = vpop.permute.xlu0 %241
  %v243 = vsel %vm240, %v242, %v235
  %244 = vrot.lane.b32.xlu0 %v237, 32
  %v245 = vpop.permute.xlu0 %244
  %v246 = vsel %vm240, %v245, %v237
  %247 = vrot.lane.b32.xlu0 %v243, 32
  %v248 = vpop.permute.xlu0 %247
  %249 = vrot.lane.b32.xlu0 %v246, 32
  %v250 = vpop.permute.xlu0 %249
  %v251 = vsel %vm240, %v248, %v235
  %v252 = vsel %vm240, %v250, %v237
  %255 = vrot.lane.b32.xlu0 %v67, 64
  %v256 = vpop.permute.xlu0 %255
  %257 = vrot.lane.b32.xlu0 %v68, 64
  %v258 = vpop.permute.xlu0 %257
  %v261 = vmul.f32 %v171, %v256
  %v262 = vmul.f32 %v174, %v258
  %265 = vrot.lane.b32.xlu0 %v69, 1
  %v266 = vpop.permute.xlu0 %265
  %267 = vrot.lane.b32.xlu0 %v70, 1
  %v268 = vpop.permute.xlu0 %267
  %v271 = vmul.f32 %v251, %v266
  %v272 = vmul.f32 %v252, %v268
  %275 = vrot.lane.b32.xlu0 %v271, 63
  %v276 = vpop.permute.xlu0 %275
  %277 = vrot.lane.b32.xlu0 %v272, 63
  %v278 = vpop.permute.xlu0 %277
  %v281 = vadd.f32 %v261, %v276
  %v282 = vadd.f32 %v262, %v278
  %285 = vrot.lane.b32.xlu0 %v71, 31
  %v286 = vpop.permute.xlu0 %285
  %287 = vrot.lane.b32.xlu0 %v72, 31
  %v288 = vpop.permute.xlu0 %287
  %v291 = vmul.f32 %v251, %v286
  %v292 = vmul.f32 %v252, %v288
  %295 = vrot.lane.b32.xlu0 %v291, 33
  %v296 = vpop.permute.xlu0 %295
  %297 = vrot.lane.b32.xlu0 %v292, 33
  %v298 = vpop.permute.xlu0 %297
  %v301 = vadd.f32 %v281, %v296
  %v302 = vadd.f32 %v282, %v298
  %v303 = vpack.c.bf16 %v231, %v230
  %v304 = vpack.c.bf16 %v302, %v301
  %v305 = vpack.c.bf16 %v174, %v171
  %307 = vrot.lane.b32.xlu0 %v304, 64
  %v308 = vpop.permute.xlu0 %307
  %vm309 = vcmask 130048
  %v311 = vsel %vm309, %v303, 0
  %v314 = vsel %vm309, %v308, 0
  %316 = vmatprep.subr.bf16.mxu0 0
  %317 = vmatpush1.bf16.xpose.msra.mxu0 %v314
  %318 = vmatprep.subr.bf16.mxu0 0
  %319 = vmatpush1.bf16.xpose.msra.mxu0 0
  %320 = vmatprep.subr.bf16.mxu0 0
  %321 = vmatpush1.bf16.xpose.msra.mxu0 0
  %322 = vmatprep.subr.bf16.mxu0 0
  %323 = vmatpush1.bf16.xpose.msra.mxu0 0
  %324 = vmatprep.subr.bf16.mxu0 0
  %325 = vmatpush1.bf16.xpose.msra.mxu0 0
  %326 = vmatprep.subr.bf16.mxu0 0
  %327 = vmatpush1.bf16.xpose.msra.mxu0 0
  %328 = vmatprep.subr.bf16.mxu0 0
  %329 = vmatpush1.bf16.xpose.msra.mxu0 0
  %330 = vmatprep.subr.bf16.mxu0 0
  %331 = vmatpush1.bf16.xpose.msra.mxu0 0
  %332 = vmatprep.subr.bf16.mxu0 0
  %333 = vmatpush1.bf16.xpose.msra.mxu0 0
  %334 = vmatprep.subr.bf16.mxu0 0
  %335 = vmatpush1.bf16.xpose.msra.mxu0 0
  %336 = vmatprep.subr.bf16.mxu0 0
  %337 = vmatpush1.bf16.xpose.msra.mxu0 0
  %338 = vmatprep.subr.bf16.mxu0 0
  %339 = vmatpush1.bf16.xpose.msra.mxu0 0
  %340 = vmatprep.subr.bf16.mxu0 0
  %341 = vmatpush1.bf16.xpose.msra.mxu0 0
  %342 = vmatprep.subr.bf16.mxu0 0
  %343 = vmatpush1.bf16.xpose.msra.mxu0 0
  %344 = vmatprep.subr.bf16.mxu0 0
  %345 = vmatpush1.bf16.xpose.msra.mxu0 0
  %346 = vmatprep.subr.bf16.mxu0 0
  %347 = vmatpush1.bf16.xpose.msra.mxu0 0
  %348 = vmatprep.mubr.bf16.mxu0 0
  %349 = vmatmul.mubr.bf16.gmra.mrb[0].mxu0 %v311
  %v350 = vpop.f32.mrb[0].mxu0
  %v351 = vadd.f32 %v59, %v350
  %v352 = vpop.f32.mrb[0].mxu0
  %v353 = vpop.f32.mrb[0].mxu0
  %v354 = vadd.f32 %v60, %v353
  %v355 = vpop.f32.mrb[0].mxu0
  %356 = vdwg.mxu0
  %v357 = vsel %vm309, %v351, -inf
  %358 = vmax.xlane.f32.xlu0 %v357
  %v359 = vpop.xlane.xlu0 %358
  %v360 = vsel %vm309, %v354, -inf
  %361 = vmax.xlane.f32.xlu0 %v360
  %v362 = vpop.xlane.xlu0 %361
  %v363 = vsub.f32 %v351, %v359
  %v364 = vsub.f32 %v354, %v362
  %v365 = vmul.f32 %v363, 1.442695
  %v366 = vpow.pop %v365
  %v367 = vmul.f32 %v364, 1.442695
  %v368 = vpow.pop %v367
  %v369 = vsel %vm309, %v366, 0.0
  %370 = vadd.xlane.f32.xlu0 %v369
  %v371 = vpop.xlane.xlu0 %370
  %v372 = vsel %vm309, %v368, 0.0
  %373 = vadd.xlane.f32.xlu0 %v372
  %v374 = vpop.xlane.xlu0 %373
  %v375 = vrcp.pop %v371
  %v376 = vrcp.pop %v374
  %v377 = vmul.f32 %v366, %v375
  %v378 = vmul.f32 %v368, %v376
  %v379 = vpack.c.bf16 %v378, %v377
  %381 = vrot.lane.b32.xlu0 %v305, 32
  %v382 = vpop.permute.xlu0 %381
  %v385 = vsel %vm309, %v379, 0
  %387 = vmatprep.subr.bf16.mxu0 0
  %388 = vmatpush1.bf16.msra.mxu0 %v382
  %389 = vmatprep.subr.bf16.mxu0 0
  %390 = vmatpush1.bf16.msra.mxu0 0
  %391 = vmatprep.subr.bf16.mxu0 0
  %392 = vmatpush1.bf16.msra.mxu0 0
  %393 = vmatprep.subr.bf16.mxu0 0
  %394 = vmatpush1.bf16.msra.mxu0 0
  %395 = vmatprep.subr.bf16.mxu0 0
  %396 = vmatpush1.bf16.msra.mxu0 0
  %397 = vmatprep.subr.bf16.mxu0 0
  %398 = vmatpush1.bf16.msra.mxu0 0
  %399 = vmatprep.subr.bf16.mxu0 0
  %400 = vmatpush1.bf16.msra.mxu0 0
  %401 = vmatprep.subr.bf16.mxu0 0
  %402 = vmatpush1.bf16.msra.mxu0 0
  %403 = vmatprep.subr.bf16.mxu0 0
  %404 = vmatpush1.bf16.msra.mxu0 0
  %405 = vmatprep.subr.bf16.mxu0 0
  %406 = vmatpush1.bf16.msra.mxu0 0
  %407 = vmatprep.subr.bf16.mxu0 0
  %408 = vmatpush1.bf16.msra.mxu0 0
  %409 = vmatprep.subr.bf16.mxu0 0
  %410 = vmatpush1.bf16.msra.mxu0 0
  %411 = vmatprep.subr.bf16.mxu0 0
  %412 = vmatpush1.bf16.msra.mxu0 0
  %413 = vmatprep.subr.bf16.mxu0 0
  %414 = vmatpush1.bf16.msra.mxu0 0
  %415 = vmatprep.subr.bf16.mxu0 0
  %416 = vmatpush1.bf16.msra.mxu0 0
  %417 = vmatprep.subr.bf16.mxu0 0
  %418 = vmatpush1.bf16.msra.mxu0 0
  %419 = vmatprep.mubr.bf16.mxu0 0
  %420 = vmatmul.mubr.bf16.gmra.mrb[0].mxu0 %v385
  %v421 = vpop.f32.mrb[0].mxu0
  %v422 = vadd.f32 0.0, %v421
  %v423 = vpop.f32.mrb[0].mxu0
  %v424 = vpop.f32.mrb[0].mxu0
  %v425 = vadd.f32 0.0, %v424
  %v426 = vpop.f32.mrb[0].mxu0
  %427 = vdwg.mxu0
  %429 = vrot.lane.b32.xlu0 %v303, 112
  %v430 = vpop.permute.xlu0 %429
  %v432 = vsel %vm309, %v430, 0
  %434 = vmatprep.subr.bf16.mxu0 0
  %435 = vmatpush1.bf16.xpose.msra.mxu0 %v314
  %436 = vmatprep.subr.bf16.mxu0 0
  %437 = vmatpush1.bf16.xpose.msra.mxu0 0
  %438 = vmatprep.subr.bf16.mxu0 0
  %439 = vmatpush1.bf16.xpose.msra.mxu0 0
  %440 = vmatprep.subr.bf16.mxu0 0
  %441 = vmatpush1.bf16.xpose.msra.mxu0 0
  %442 = vmatprep.subr.bf16.mxu0 0
  %443 = vmatpush1.bf16.xpose.msra.mxu0 0
  %444 = vmatprep.subr.bf16.mxu0 0
  %445 = vmatpush1.bf16.xpose.msra.mxu0 0
  %446 = vmatprep.subr.bf16.mxu0 0
  %447 = vmatpush1.bf16.xpose.msra.mxu0 0
  %448 = vmatprep.subr.bf16.mxu0 0
  %449 = vmatpush1.bf16.xpose.msra.mxu0 0
  %450 = vmatprep.subr.bf16.mxu0 0
  %451 = vmatpush1.bf16.xpose.msra.mxu0 0
  %452 = vmatprep.subr.bf16.mxu0 0
  %453 = vmatpush1.bf16.xpose.msra.mxu0 0
  %454 = vmatprep.subr.bf16.mxu0 0
  %455 = vmatpush1.bf16.xpose.msra.mxu0 0
  %456 = vmatprep.subr.bf16.mxu0 0
  %457 = vmatpush1.bf16.xpose.msra.mxu0 0
  %458 = vmatprep.subr.bf16.mxu0 0
  %459 = vmatpush1.bf16.xpose.msra.mxu0 0
  %460 = vmatprep.subr.bf16.mxu0 0
  %461 = vmatpush1.bf16.xpose.msra.mxu0 0
  %462 = vmatprep.subr.bf16.mxu0 0
  %463 = vmatpush1.bf16.xpose.msra.mxu0 0
  %464 = vmatprep.subr.bf16.mxu0 0
  %465 = vmatpush1.bf16.xpose.msra.mxu0 0
  %466 = vmatprep.mubr.bf16.mxu0 0
  %467 = vmatmul.mubr.bf16.gmra.mrb[0].mxu0 %v432
  %v468 = vpop.f32.mrb[0].mxu0
  %v469 = vadd.f32 %v59, %v468
  %v470 = vpop.f32.mrb[0].mxu0
  %v471 = vpop.f32.mrb[0].mxu0
  %v472 = vadd.f32 %v60, %v471
  %v473 = vpop.f32.mrb[0].mxu0
  %474 = vdwg.mxu0
  %v475 = vsel %vm309, %v469, -inf
  %476 = vmax.xlane.f32.xlu0 %v475
  %v477 = vpop.xlane.xlu0 %476
  %v478 = vsel %vm309, %v472, -inf
  %479 = vmax.xlane.f32.xlu0 %v478
  %v480 = vpop.xlane.xlu0 %479
  %v481 = vsub.f32 %v469, %v477
  %v482 = vsub.f32 %v472, %v480
  %v483 = vmul.f32 %v481, 1.442695
  %v484 = vpow.pop %v483
  %v485 = vmul.f32 %v482, 1.442695
  %v486 = vpow.pop %v485
  %v487 = vsel %vm309, %v484, 0.0
  %488 = vadd.xlane.f32.xlu0 %v487
  %v489 = vpop.xlane.xlu0 %488
  %v490 = vsel %vm309, %v486, 0.0
  %491 = vadd.xlane.f32.xlu0 %v490
  %v492 = vpop.xlane.xlu0 %491
  %v493 = vrcp.pop %v489
  %v494 = vrcp.pop %v492
  %v495 = vmul.f32 %v484, %v493
  %v496 = vmul.f32 %v486, %v494
  %v497 = vpack.c.bf16 %v496, %v495
  %v499 = vsel %vm309, %v497, 0
  %501 = vmatprep.subr.bf16.mxu0 0
  %502 = vmatpush1.bf16.msra.mxu0 %v382
  %503 = vmatprep.subr.bf16.mxu0 0
  %504 = vmatpush1.bf16.msra.mxu0 0
  %505 = vmatprep.subr.bf16.mxu0 0
  %506 = vmatpush1.bf16.msra.mxu0 0
  %507 = vmatprep.subr.bf16.mxu0 0
  %508 = vmatpush1.bf16.msra.mxu0 0
  %509 = vmatprep.subr.bf16.mxu0 0
  %510 = vmatpush1.bf16.msra.mxu0 0
  %511 = vmatprep.subr.bf16.mxu0 0
  %512 = vmatpush1.bf16.msra.mxu0 0
  %513 = vmatprep.subr.bf16.mxu0 0
  %514 = vmatpush1.bf16.msra.mxu0 0
  %515 = vmatprep.subr.bf16.mxu0 0
  %516 = vmatpush1.bf16.msra.mxu0 0
  %517 = vmatprep.subr.bf16.mxu0 0
  %518 = vmatpush1.bf16.msra.mxu0 0
  %519 = vmatprep.subr.bf16.mxu0 0
  %520 = vmatpush1.bf16.msra.mxu0 0
  %521 = vmatprep.subr.bf16.mxu0 0
  %522 = vmatpush1.bf16.msra.mxu0 0
  %523 = vmatprep.subr.bf16.mxu0 0
  %524 = vmatpush1.bf16.msra.mxu0 0
  %525 = vmatprep.subr.bf16.mxu0 0
  %526 = vmatpush1.bf16.msra.mxu0 0
  %527 = vmatprep.subr.bf16.mxu0 0
  %528 = vmatpush1.bf16.msra.mxu0 0
  %529 = vmatprep.subr.bf16.mxu0 0
  %530 = vmatpush1.bf16.msra.mxu0 0
  %531 = vmatprep.subr.bf16.mxu0 0
  %532 = vmatpush1.bf16.msra.mxu0 0
  %533 = vmatprep.mubr.bf16.mxu0 0
  %534 = vmatmul.mubr.bf16.gmra.mrb[0].mxu0 %v499
  %v535 = vpop.f32.mrb[0].mxu0
  %v536 = vadd.f32 0.0, %v535
  %v537 = vpop.f32.mrb[0].mxu0
  %v538 = vpop.f32.mrb[0].mxu0
  %v539 = vadd.f32 0.0, %v538
  %v540 = vpop.f32.mrb[0].mxu0
  %541 = vdwg.mxu0
  %542 = vrot.lane.b32.xlu0 %v303, 96
  %v543 = vpop.permute.xlu0 %542
  %544 = vrot.lane.b32.xlu0 %v304, 48
  %v545 = vpop.permute.xlu0 %544
  %v547 = vsel %vm309, %v543, 0
  %v550 = vsel %vm309, %v545, 0
  %552 = vmatprep.subr.bf16.mxu0 0
  %553 = vmatpush1.bf16.xpose.msra.mxu0 %v550
  %554 = vmatprep.subr.bf16.mxu0 0
  %555 = vmatpush1.bf16.xpose.msra.mxu0 0
  %556 = vmatprep.subr.bf16.mxu0 0
  %557 = vmatpush1.bf16.xpose.msra.mxu0 0
  %558 = vmatprep.subr.bf16.mxu0 0
  %559 = vmatpush1.bf16.xpose.msra.mxu0 0
  %560 = vmatprep.subr.bf16.mxu0 0
  %561 = vmatpush1.bf16.xpose.msra.mxu0 0
  %562 = vmatprep.subr.bf16.mxu0 0
  %563 = vmatpush1.bf16.xpose.msra.mxu0 0
  %564 = vmatprep.subr.bf16.mxu0 0
  %565 = vmatpush1.bf16.xpose.msra.mxu0 0
  %566 = vmatprep.subr.bf16.mxu0 0
  %567 = vmatpush1.bf16.xpose.msra.mxu0 0
  %568 = vmatprep.subr.bf16.mxu0 0
  %569 = vmatpush1.bf16.xpose.msra.mxu0 0
  %570 = vmatprep.subr.bf16.mxu0 0
  %571 = vmatpush1.bf16.xpose.msra.mxu0 0
  %572 = vmatprep.subr.bf16.mxu0 0
  %573 = vmatpush1.bf16.xpose.msra.mxu0 0
  %574 = vmatprep.subr.bf16.mxu0 0
  %575 = vmatpush1.bf16.xpose.msra.mxu0 0
  %576 = vmatprep.subr.bf16.mxu0 0
  %577 = vmatpush1.bf16.xpose.msra.mxu0 0
  %578 = vmatprep.subr.bf16.mxu0 0
  %579 = vmatpush1.bf16.xpose.msra.mxu0 0
  %580 = vmatprep.subr.bf16.mxu0 0
  %581 = vmatpush1.bf16.xpose.msra.mxu0 0
  %582 = vmatprep.subr.bf16.mxu0 0
  %583 = vmatpush1.bf16.xpose.msra.mxu0 0
  %584 = vmatprep.mubr.bf16.mxu0 0
  %585 = vmatmul.mubr.bf16.gmra.mrb[0].mxu0 %v547
  %v586 = vpop.f32.mrb[0].mxu0
  %v587 = vadd.f32 %v59, %v586
  %v588 = vpop.f32.mrb[0].mxu0
  %v589 = vpop.f32.mrb[0].mxu0
  %v590 = vadd.f32 %v60, %v589
  %v591 = vpop.f32.mrb[0].mxu0
  %592 = vdwg.mxu0
  %v593 = vsel %vm309, %v587, -inf
  %594 = vmax.xlane.f32.xlu0 %v593
  %v595 = vpop.xlane.xlu0 %594
  %v596 = vsel %vm309, %v590, -inf
  %597 = vmax.xlane.f32.xlu0 %v596
  %v598 = vpop.xlane.xlu0 %597
  %v599 = vsub.f32 %v587, %v595
  %v600 = vsub.f32 %v590, %v598
  %v601 = vmul.f32 %v599, 1.442695
  %v602 = vpow.pop %v601
  %v603 = vmul.f32 %v600, 1.442695
  %v604 = vpow.pop %v603
  %v605 = vsel %vm309, %v602, 0.0
  %606 = vadd.xlane.f32.xlu0 %v605
  %v607 = vpop.xlane.xlu0 %606
  %v608 = vsel %vm309, %v604, 0.0
  %609 = vadd.xlane.f32.xlu0 %v608
  %v610 = vpop.xlane.xlu0 %609
  %v611 = vrcp.pop %v607
  %v612 = vrcp.pop %v610
  %v613 = vmul.f32 %v602, %v611
  %v614 = vmul.f32 %v604, %v612
  %v615 = vpack.c.bf16 %v614, %v613
  %616 = vrot.lane.b32.xlu0 %v305, 16
  %v617 = vpop.permute.xlu0 %616
  %v620 = vsel %vm309, %v615, 0
  %622 = vmatprep.subr.bf16.mxu0 0
  %623 = vmatpush1.bf16.msra.mxu0 %v617
  %624 = vmatprep.subr.bf16.mxu0 0
  %625 = vmatpush1.bf16.msra.mxu0 0
  %626 = vmatprep.subr.bf16.mxu0 0
  %627 = vmatpush1.bf16.msra.mxu0 0
  %628 = vmatprep.subr.bf16.mxu0 0
  %629 = vmatpush1.bf16.msra.mxu0 0
  %630 = vmatprep.subr.bf16.mxu0 0
  %631 = vmatpush1.bf16.msra.mxu0 0
  %632 = vmatprep.subr.bf16.mxu0 0
  %633 = vmatpush1.bf16.msra.mxu0 0
  %634 = vmatprep.subr.bf16.mxu0 0
  %635 = vmatpush1.bf16.msra.mxu0 0
  %636 = vmatprep.subr.bf16.mxu0 0
  %637 = vmatpush1.bf16.msra.mxu0 0
  %638 = vmatprep.subr.bf16.mxu0 0
  %639 = vmatpush1.bf16.msra.mxu0 0
  %640 = vmatprep.subr.bf16.mxu0 0
  %641 = vmatpush1.bf16.msra.mxu0 0
  %642 = vmatprep.subr.bf16.mxu0 0
  %643 = vmatpush1.bf16.msra.mxu0 0
  %644 = vmatprep.subr.bf16.mxu0 0
  %645 = vmatpush1.bf16.msra.mxu0 0
  %646 = vmatprep.subr.bf16.mxu0 0
  %647 = vmatpush1.bf16.msra.mxu0 0
  %648 = vmatprep.subr.bf16.mxu0 0
  %649 = vmatpush1.bf16.msra.mxu0 0
  %650 = vmatprep.subr.bf16.mxu0 0
  %651 = vmatpush1.bf16.msra.mxu0 0
  %652 = vmatprep.subr.bf16.mxu0 0
  %653 = vmatpush1.bf16.msra.mxu0 0
  %654 = vmatprep.mubr.bf16.mxu0 0
  %655 = vmatmul.mubr.bf16.gmra.mrb[0].mxu0 %v620
  %v656 = vpop.f32.mrb[0].mxu0
  %v657 = vadd.f32 0.0, %v656
  %v658 = vpop.f32.mrb[0].mxu0
  %v659 = vpop.f32.mrb[0].mxu0
  %v660 = vadd.f32 0.0, %v659
  %v661 = vpop.f32.mrb[0].mxu0
  %662 = vdwg.mxu0
  %663 = vrot.lane.b32.xlu0 %v303, 80
  %v664 = vpop.permute.xlu0 %663
  %v666 = vsel %vm309, %v664, 0
  %668 = vmatprep.subr.bf16.mxu0 0
  %669 = vmatpush1.bf16.xpose.msra.mxu0 %v550
  %670 = vmatprep.subr.bf16.mxu0 0
  %671 = vmatpush1.bf16.xpose.msra.mxu0 0
  %672 = vmatprep.subr.bf16.mxu0 0
  %673 = vmatpush1.bf16.xpose.msra.mxu0 0
  %674 = vmatprep.subr.bf16.mxu0 0
  %675 = vmatpush1.bf16.xpose.msra.mxu0 0
  %676 = vmatprep.subr.bf16.mxu0 0
  %677 = vmatpush1.bf16.xpose.msra.mxu0 0
  %678 = vmatprep.subr.bf16.mxu0 0
  %679 = vmatpush1.bf16.xpose.msra.mxu0 0
  %680 = vmatprep.subr.bf16.mxu0 0
  %681 = vmatpush1.bf16.xpose.msra.mxu0 0
  %682 = vmatprep.subr.bf16.mxu0 0
  %683 = vmatpush1.bf16.xpose.msra.mxu0 0
  %684 = vmatprep.subr.bf16.mxu0 0
  %685 = vmatpush1.bf16.xpose.msra.mxu0 0
  %686 = vmatprep.subr.bf16.mxu0 0
  %687 = vmatpush1.bf16.xpose.msra.mxu0 0
  %688 = vmatprep.subr.bf16.mxu0 0
  %689 = vmatpush1.bf16.xpose.msra.mxu0 0
  %690 = vmatprep.subr.bf16.mxu0 0
  %691 = vmatpush1.bf16.xpose.msra.mxu0 0
  %692 = vmatprep.subr.bf16.mxu0 0
  %693 = vmatpush1.bf16.xpose.msra.mxu0 0
  %694 = vmatprep.subr.bf16.mxu0 0
  %695 = vmatpush1.bf16.xpose.msra.mxu0 0
  %696 = vmatprep.subr.bf16.mxu0 0
  %697 = vmatpush1.bf16.xpose.msra.mxu0 0
  %698 = vmatprep.subr.bf16.mxu0 0
  %699 = vmatpush1.bf16.xpose.msra.mxu0 0
  %700 = vmatprep.mubr.bf16.mxu0 0
  %701 = vmatmul.mubr.bf16.gmra.mrb[0].mxu0 %v666
  %v702 = vpop.f32.mrb[0].mxu0
  %v703 = vadd.f32 %v59, %v702
  %v704 = vpop.f32.mrb[0].mxu0
  %v705 = vpop.f32.mrb[0].mxu0
  %v706 = vadd.f32 %v60, %v705
  %v707 = vpop.f32.mrb[0].mxu0
  %708 = vdwg.mxu0
  %v709 = vsel %vm309, %v703, -inf
  %710 = vmax.xlane.f32.xlu0 %v709
  %v711 = vpop.xlane.xlu0 %710
  %v712 = vsel %vm309, %v706, -inf
  %713 = vmax.xlane.f32.xlu0 %v712
  %v714 = vpop.xlane.xlu0 %713
  %v715 = vsub.f32 %v703, %v711
  %v716 = vsub.f32 %v706, %v714
  %v717 = vmul.f32 %v715, 1.442695
  %v718 = vpow.pop %v717
  %v719 = vmul.f32 %v716, 1.442695
  %v720 = vpow.pop %v719
  %v721 = vsel %vm309, %v718, 0.0
  %722 = vadd.xlane.f32.xlu0 %v721
  %v723 = vpop.xlane.xlu0 %722
  %v724 = vsel %vm309, %v720, 0.0
  %725 = vadd.xlane.f32.xlu0 %v724
  %v726 = vpop.xlane.xlu0 %725
  %v727 = vrcp.pop %v723
  %v728 = vrcp.pop %v726
  %v729 = vmul.f32 %v718, %v727
  %v730 = vmul.f32 %v720, %v728
  %v731 = vpack.c.bf16 %v730, %v729
  %v733 = vsel %vm309, %v731, 0
  %735 = vmatprep.subr.bf16.mxu0 0
  %736 = vmatpush1.bf16.msra.mxu0 %v617
  %737 = vmatprep.subr.bf16.mxu0 0
  %738 = vmatpush1.bf16.msra.mxu0 0
  %739 = vmatprep.subr.bf16.mxu0 0
  %740 = vmatpush1.bf16.msra.mxu0 0
  %741 = vmatprep.subr.bf16.mxu0 0
  %742 = vmatpush1.bf16.msra.mxu0 0
  %743 = vmatprep.subr.bf16.mxu0 0
  %744 = vmatpush1.bf16.msra.mxu0 0
  %745 = vmatprep.subr.bf16.mxu0 0
  %746 = vmatpush1.bf16.msra.mxu0 0
  %747 = vmatprep.subr.bf16.mxu0 0
  %748 = vmatpush1.bf16.msra.mxu0 0
  %749 = vmatprep.subr.bf16.mxu0 0
  %750 = vmatpush1.bf16.msra.mxu0 0
  %751 = vmatprep.subr.bf16.mxu0 0
  %752 = vmatpush1.bf16.msra.mxu0 0
  %753 = vmatprep.subr.bf16.mxu0 0
  %754 = vmatpush1.bf16.msra.mxu0 0
  %755 = vmatprep.subr.bf16.mxu0 0
  %756 = vmatpush1.bf16.msra.mxu0 0
  %757 = vmatprep.subr.bf16.mxu0 0
  %758 = vmatpush1.bf16.msra.mxu0 0
  %759 = vmatprep.subr.bf16.mxu0 0
  %760 = vmatpush1.bf16.msra.mxu0 0
  %761 = vmatprep.subr.bf16.mxu0 0
  %762 = vmatpush1.bf16.msra.mxu0 0
  %763 = vmatprep.subr.bf16.mxu0 0
  %764 = vmatpush1.bf16.msra.mxu0 0
  %765 = vmatprep.subr.bf16.mxu0 0
  %766 = vmatpush1.bf16.msra.mxu0 0
  %767 = vmatprep.mubr.bf16.mxu0 0
  %768 = vmatmul.mubr.bf16.gmra.mrb[0].mxu0 %v733
  %v769 = vpop.f32.mrb[0].mxu0
  %v770 = vadd.f32 0.0, %v769
  %v771 = vpop.f32.mrb[0].mxu0
  %v772 = vpop.f32.mrb[0].mxu0
  %v773 = vadd.f32 0.0, %v772
  %v774 = vpop.f32.mrb[0].mxu0
  %775 = vdwg.mxu0
  %778 = vrot.lane.b32.xlu0 %v536, 16
  %v779 = vpop.permute.xlu0 %778
  %780 = vrot.lane.b32.xlu0 %v539, 16
  %v781 = vpop.permute.xlu0 %780
  %786 = vrot.lane.b32.xlu0 %v657, 32
  %v787 = vpop.permute.xlu0 %786
  %788 = vrot.lane.b32.xlu0 %v660, 32
  %v789 = vpop.permute.xlu0 %788
  %794 = vrot.lane.b32.xlu0 %v770, 48
  %v795 = vpop.permute.xlu0 %794
  %796 = vrot.lane.b32.xlu0 %v773, 48
  %v797 = vpop.permute.xlu0 %796
  %v800 = vsel %vm309, %v422, %v779
  %v801 = vsel %vm309, %v425, %v781
  %vm802 = vcmask 261120
  %v803 = vsel %vm802, %v800, %v787
  %v804 = vsel %vm802, %v801, %v789
  %vm805 = vcmask 392192
  %v806 = vsel %vm805, %v803, %v795
  %v807 = vsel %vm805, %v804, %v797
  %v808 = vpack.c.bf16 %v807, %v806
  %v809 = vld [vmem:[%s10] sm:$0xf]
  %v810 = vld [vmem:[%s10 + $0x4] sm:$0xf]
  %v811 = vld [vmem:[%s10 + $0x8] sm:$0xf]
  %v812 = vld [vmem:[%s10 + $0xc] sm:$0xf]
  %v813 = vld [vmem:[%s10 + $0x10] sm:$0xf]
  %v814 = vld [vmem:[%s10 + $0x14] sm:$0xf]
  %v815 = vld [vmem:[%s10 + $0x18] sm:$0xf]
  %v816 = vld [vmem:[%s10 + $0x1c] sm:$0xf]
  %v825 = vunpack.c.l.b16 %v809
  %v826 = vunpack.c.l.b16 %v810
  %v827 = vunpack.c.l.b16 %v811
  %v828 = vunpack.c.l.b16 %v812
  %v829 = vunpack.c.l.b16 %v813
  %v830 = vunpack.c.l.b16 %v814
  %v831 = vunpack.c.l.b16 %v815
  %v832 = vunpack.c.l.b16 %v816
  %v833 = vpack.c.b16 %v826, %v825
  %v834 = vpack.c.b16 %v828, %v827
  %v835 = vpack.c.b16 %v830, %v829
  %v836 = vpack.c.b16 %v832, %v831
  %v842 = vsel %vm76, %v808, 0
  %844 = vmatprep.subr.bf16.mxu0 0
  %845 = vmatpush1.bf16.msra.mxu0 %v833
  %846 = vmatprep.subr.bf16.mxu0 0
  %847 = vmatpush1.bf16.msra.mxu0 %v834
  %848 = vmatprep.subr.bf16.mxu0 0
  %849 = vmatpush1.bf16.msra.mxu0 %v835
  %850 = vmatprep.subr.bf16.mxu0 0
  %851 = vmatpush1.bf16.msra.mxu0 %v836
  %852 = vmatprep.subr.bf16.mxu0 0
  %853 = vmatpush1.bf16.msra.mxu0 0
  %854 = vmatprep.subr.bf16.mxu0 0
  %855 = vmatpush1.bf16.msra.mxu0 0
  %856 = vmatprep.subr.bf16.mxu0 0
  %857 = vmatpush1.bf16.msra.mxu0 0
  %858 = vmatprep.subr.bf16.mxu0 0
  %859 = vmatpush1.bf16.msra.mxu0 0
  %860 = vmatprep.subr.bf16.mxu0 0
  %861 = vmatpush1.bf16.msra.mxu0 0
  %862 = vmatprep.subr.bf16.mxu0 0
  %863 = vmatpush1.bf16.msra.mxu0 0
  %864 = vmatprep.subr.bf16.mxu0 0
  %865 = vmatpush1.bf16.msra.mxu0 0
  %866 = vmatprep.subr.bf16.mxu0 0
  %867 = vmatpush1.bf16.msra.mxu0 0
  %868 = vmatprep.subr.bf16.mxu0 0
  %869 = vmatpush1.bf16.msra.mxu0 0
  %870 = vmatprep.subr.bf16.mxu0 0
  %871 = vmatpush1.bf16.msra.mxu0 0
  %872 = vmatprep.subr.bf16.mxu0 0
  %873 = vmatpush1.bf16.msra.mxu0 0
  %874 = vmatprep.subr.bf16.mxu0 0
  %875 = vmatpush1.bf16.msra.mxu0 0
  %876 = vmatprep.mubr.bf16.mxu0 0
  %877 = vmatmul.mubr.bf16.gmra.mrb[0].mxu0 %v842
  %v878 = vpop.f32.mrb[0].mxu0
  %v879 = vadd.f32 0.0, %v878
  %v880 = vpop.f32.mrb[0].mxu0
  %v881 = vpop.f32.mrb[0].mxu0
  %v882 = vadd.f32 0.0, %v881
  %v883 = vpop.f32.mrb[0].mxu0
  %884 = vdwg.mxu0
  %v885 = vadd.f32 %v57, %v879
  %v886 = vadd.f32 %v58, %v882
  %v887 = vld [vmem:[%s11] sm:$0x1]
  %v888 = vmul.f32 %v885, %v885
  %v889 = vmul.f32 %v886, %v886
  %v890 = vsel %vm76, %v888, 0.0
  %891 = vadd.xlane.f32.xlu0 %v890
  %v892 = vpop.xlane.xlu0 %891
  %v893 = vsel %vm76, %v889, 0.0
  %894 = vadd.xlane.f32.xlu0 %v893
  %v895 = vpop.xlane.xlu0 %894
  %v896 = vmul.f32 %v892, %v83
  %v897 = vmul.f32 %v895, %v83
  %v898 = vadd.f32 %v896, 1e-05
  %v899 = vadd.f32 %v897, 1e-05
  %v900 = vrsqrt.pop %v898
  %v901 = vrsqrt.pop %v899
  %v902 = vmul.f32 %v885, %v900
  %v903 = vmul.f32 %v886, %v901
  %v905 = vlaneseq
  %v906 = vshrl.u32 %v905, 7
  %v907 = vsub.s32 0, %v906
  %v908 = vrot.slane %v887, %v907
  %v910 = vmul.f32 %v902, %v908
  %v911 = vmul.f32 %v903, %v908
  %v912 = vpack.c.bf16 %v911, %v910
  %v913 = vld [vmem:[%s12] sm:$0xff]
  %v914 = vld [vmem:[%s12 + $0x8] sm:$0xff]
  %v915 = vld [vmem:[%s12 + $0x10] sm:$0xff]
  %v916 = vld [vmem:[%s12 + $0x18] sm:$0xff]
  %v917 = vld [vmem:[%s12 + $0x20] sm:$0xff]
  %v918 = vld [vmem:[%s12 + $0x28] sm:$0xff]
  %v919 = vld [vmem:[%s12 + $0x30] sm:$0xff]
  %v920 = vld [vmem:[%s12 + $0x38] sm:$0xff]
  %v929 = vunpack.c.l.b16 %v913
  %v930 = vunpack.c.h.b16 %v913
  %v931 = vunpack.c.l.b16 %v914
  %v932 = vunpack.c.h.b16 %v914
  %v933 = vunpack.c.l.b16 %v915
  %v934 = vunpack.c.h.b16 %v915
  %v935 = vunpack.c.l.b16 %v916
  %v936 = vunpack.c.h.b16 %v916
  %v937 = vunpack.c.l.b16 %v917
  %v938 = vunpack.c.h.b16 %v917
  %v939 = vunpack.c.l.b16 %v918
  %v940 = vunpack.c.h.b16 %v918
  %v941 = vunpack.c.l.b16 %v919
  %v942 = vunpack.c.h.b16 %v919
  %v943 = vunpack.c.l.b16 %v920
  %v944 = vunpack.c.h.b16 %v920
  %v945 = vpack.c.b16 %v931, %v929
  %v946 = vpack.c.b16 %v932, %v930
  %v947 = vpack.c.b16 %v935, %v933
  %v948 = vpack.c.b16 %v936, %v934
  %v949 = vpack.c.b16 %v939, %v937
  %v950 = vpack.c.b16 %v940, %v938
  %v951 = vpack.c.b16 %v943, %v941
  %v952 = vpack.c.b16 %v944, %v942
  %v962 = vsel %vm76, %v912, 0
  %964 = vmatprep.subr.bf16.mxu0 %v946
  %965 = vmatpush1.bf16.msra.mxu0 %v945
  %966 = vmatprep.subr.bf16.mxu0 %v948
  %967 = vmatpush1.bf16.msra.mxu0 %v947
  %968 = vmatprep.subr.bf16.mxu0 %v950
  %969 = vmatpush1.bf16.msra.mxu0 %v949
  %970 = vmatprep.subr.bf16.mxu0 %v952
  %971 = vmatpush1.bf16.msra.mxu0 %v951
  %972 = vmatprep.subr.bf16.mxu0 0
  %973 = vmatpush1.bf16.msra.mxu0 0
  %974 = vmatprep.subr.bf16.mxu0 0
  %975 = vmatpush1.bf16.msra.mxu0 0
  %976 = vmatprep.subr.bf16.mxu0 0
  %977 = vmatpush1.bf16.msra.mxu0 0
  %978 = vmatprep.subr.bf16.mxu0 0
  %979 = vmatpush1.bf16.msra.mxu0 0
  %980 = vmatprep.subr.bf16.mxu0 0
  %981 = vmatpush1.bf16.msra.mxu0 0
  %982 = vmatprep.subr.bf16.mxu0 0
  %983 = vmatpush1.bf16.msra.mxu0 0
  %984 = vmatprep.subr.bf16.mxu0 0
  %985 = vmatpush1.bf16.msra.mxu0 0
  %986 = vmatprep.subr.bf16.mxu0 0
  %987 = vmatpush1.bf16.msra.mxu0 0
  %988 = vmatprep.subr.bf16.mxu0 0
  %989 = vmatpush1.bf16.msra.mxu0 0
  %990 = vmatprep.subr.bf16.mxu0 0
  %991 = vmatpush1.bf16.msra.mxu0 0
  %992 = vmatprep.subr.bf16.mxu0 0
  %993 = vmatpush1.bf16.msra.mxu0 0
  %994 = vmatprep.subr.bf16.mxu0 0
  %995 = vmatpush1.bf16.msra.mxu0 0
  %996 = vmatprep.mubr.bf16.mxu0 0
  %997 = vmatmul.mubr.bf16.gmra.mrb[0].mxu0 %v962
  %v998 = vpop.f32.mrb[0].mxu0
  %v999 = vadd.f32 0.0, %v998
  %v1000 = vpop.f32.mrb[0].mxu0
  %v1001 = vadd.f32 0.0, %v1000
  %v1002 = vpop.f32.mrb[0].mxu0
  %v1003 = vadd.f32 0.0, %v1002
  %v1004 = vpop.f32.mrb[0].mxu0
  %v1005 = vadd.f32 0.0, %v1004
  %1006 = vdwg.mxu0
  %v1007 = vld [vmem:[%s14] sm:$0xff]
  %v1008 = vld [vmem:[%s14 + $0x8] sm:$0xff]
  %v1009 = vld [vmem:[%s14 + $0x10] sm:$0xff]
  %v1010 = vld [vmem:[%s14 + $0x18] sm:$0xff]
  %v1011 = vld [vmem:[%s14 + $0x20] sm:$0xff]
  %v1012 = vld [vmem:[%s14 + $0x28] sm:$0xff]
  %v1013 = vld [vmem:[%s14 + $0x30] sm:$0xff]
  %v1014 = vld [vmem:[%s14 + $0x38] sm:$0xff]
  %v1023 = vunpack.c.l.b16 %v1007
  %v1024 = vunpack.c.h.b16 %v1007
  %v1025 = vunpack.c.l.b16 %v1008
  %v1026 = vunpack.c.h.b16 %v1008
  %v1027 = vunpack.c.l.b16 %v1009
  %v1028 = vunpack.c.h.b16 %v1009
  %v1029 = vunpack.c.l.b16 %v1010
  %v1030 = vunpack.c.h.b16 %v1010
  %v1031 = vunpack.c.l.b16 %v1011
  %v1032 = vunpack.c.h.b16 %v1011
  %v1033 = vunpack.c.l.b16 %v1012
  %v1034 = vunpack.c.h.b16 %v1012
  %v1035 = vunpack.c.l.b16 %v1013
  %v1036 = vunpack.c.h.b16 %v1013
  %v1037 = vunpack.c.l.b16 %v1014
  %v1038 = vunpack.c.h.b16 %v1014
  %v1039 = vpack.c.b16 %v1025, %v1023
  %v1040 = vpack.c.b16 %v1026, %v1024
  %v1041 = vpack.c.b16 %v1029, %v1027
  %v1042 = vpack.c.b16 %v1030, %v1028
  %v1043 = vpack.c.b16 %v1033, %v1031
  %v1044 = vpack.c.b16 %v1034, %v1032
  %v1045 = vpack.c.b16 %v1037, %v1035
  %v1046 = vpack.c.b16 %v1038, %v1036
  %1055 = vmatprep.subr.bf16.mxu0 %v1040
  %1056 = vmatpush1.bf16.msra.mxu0 %v1039
  %1057 = vmatprep.subr.bf16.mxu0 %v1042
  %1058 = vmatpush1.bf16.msra.mxu0 %v1041
  %1059 = vmatprep.subr.bf16.mxu0 %v1044
  %1060 = vmatpush1.bf16.msra.mxu0 %v1043
  %1061 = vmatprep.subr.bf16.mxu0 %v1046
  %1062 = vmatpush1.bf16.msra.mxu0 %v1045
  %1063 = vmatprep.subr.bf16.mxu0 0
  %1064 = vmatpush1.bf16.msra.mxu0 0
  %1065 = vmatprep.subr.bf16.mxu0 0
  %1066 = vmatpush1.bf16.msra.mxu0 0
  %1067 = vmatprep.subr.bf16.mxu0 0
  %1068 = vmatpush1.bf16.msra.mxu0 0
  %1069 = vmatprep.subr.bf16.mxu0 0
  %1070 = vmatpush1.bf16.msra.mxu0 0
  %1071 = vmatprep.subr.bf16.mxu0 0
  %1072 = vmatpush1.bf16.msra.mxu0 0
  %1073 = vmatprep.subr.bf16.mxu0 0
  %1074 = vmatpush1.bf16.msra.mxu0 0
  %1075 = vmatprep.subr.bf16.mxu0 0
  %1076 = vmatpush1.bf16.msra.mxu0 0
  %1077 = vmatprep.subr.bf16.mxu0 0
  %1078 = vmatpush1.bf16.msra.mxu0 0
  %1079 = vmatprep.subr.bf16.mxu0 0
  %1080 = vmatpush1.bf16.msra.mxu0 0
  %1081 = vmatprep.subr.bf16.mxu0 0
  %1082 = vmatpush1.bf16.msra.mxu0 0
  %1083 = vmatprep.subr.bf16.mxu0 0
  %1084 = vmatpush1.bf16.msra.mxu0 0
  %1085 = vmatprep.subr.bf16.mxu0 0
  %1086 = vmatpush1.bf16.msra.mxu0 0
  %1087 = vmatprep.mubr.bf16.mxu0 0
  %1088 = vmatmul.mubr.bf16.gmra.mrb[0].mxu0 %v962
  %v1089 = vpop.f32.mrb[0].mxu0
  %v1090 = vadd.f32 0.0, %v1089
  %v1091 = vpop.f32.mrb[0].mxu0
  %v1092 = vadd.f32 0.0, %v1091
  %v1093 = vpop.f32.mrb[0].mxu0
  %v1094 = vadd.f32 0.0, %v1093
  %v1095 = vpop.f32.mrb[0].mxu0
  %v1096 = vadd.f32 0.0, %v1095
  %1097 = vdwg.mxu0
  %v1098 = vxor.u32 %v999, 2147483648
  %v1099 = vxor.u32 %v1001, 2147483648
  %v1100 = vxor.u32 %v1003, 2147483648
  %v1101 = vxor.u32 %v1005, 2147483648
  %v1102 = vmul.f32 %v1098, 1.442695
  %v1103 = vpow.pop %v1102
  %v1104 = vmul.f32 %v1099, 1.442695
  %v1105 = vpow.pop %v1104
  %v1106 = vmul.f32 %v1100, 1.442695
  %v1107 = vpow.pop %v1106
  %v1108 = vmul.f32 %v1101, 1.442695
  %v1109 = vpow.pop %v1108
  %v1110 = vadd.f32 %v1103, 1.0
  %v1111 = vadd.f32 %v1105, 1.0
  %v1112 = vadd.f32 %v1107, 1.0
  %v1113 = vadd.f32 %v1109, 1.0
  %v1114 = vrcp.pop %v1110
  %v1115 = vmul.f32 1.0, %v1114
  %v1116 = vrcp.pop %v1111
  %v1117 = vmul.f32 1.0, %v1116
  %v1118 = vrcp.pop %v1112
  %v1119 = vmul.f32 1.0, %v1118
  %v1120 = vrcp.pop %v1113
  %v1121 = vmul.f32 1.0, %v1120
  %v1122 = vmul.f32 %v999, %v1115
  %v1123 = vmul.f32 %v1001, %v1117
  %v1124 = vmul.f32 %v1003, %v1119
  %v1125 = vmul.f32 %v1005, %v1121
  %v1126 = vmul.f32 %v1122, %v1090
  %v1127 = vmul.f32 %v1123, %v1092
  %v1128 = vmul.f32 %v1124, %v1094
  %v1129 = vmul.f32 %v1125, %v1096
  %v1130 = vpack.c.bf16 %v1128, %v1126
  %v1131 = vpack.c.bf16 %v1129, %v1127
  %v1132 = vld [vmem:[%s13] sm:$0xf]
  %v1133 = vld [vmem:[%s13 + $0x4] sm:$0xf]
  %v1134 = vld [vmem:[%s13 + $0x8] sm:$0xf]
  %v1135 = vld [vmem:[%s13 + $0xc] sm:$0xf]
  %v1136 = vld [vmem:[%s13 + $0x10] sm:$0xf]
  %v1137 = vld [vmem:[%s13 + $0x14] sm:$0xf]
  %v1138 = vld [vmem:[%s13 + $0x18] sm:$0xf]
  %v1139 = vld [vmem:[%s13 + $0x1c] sm:$0xf]
  %v1140 = vld [vmem:[%s13 + $0x20] sm:$0xf]
  %v1141 = vld [vmem:[%s13 + $0x24] sm:$0xf]
  %v1142 = vld [vmem:[%s13 + $0x28] sm:$0xf]
  %v1143 = vld [vmem:[%s13 + $0x2c] sm:$0xf]
  %v1144 = vld [vmem:[%s13 + $0x30] sm:$0xf]
  %v1145 = vld [vmem:[%s13 + $0x34] sm:$0xf]
  %v1146 = vld [vmem:[%s13 + $0x38] sm:$0xf]
  %v1147 = vld [vmem:[%s13 + $0x3c] sm:$0xf]
  %v1148 = vld [vmem:[%s13 + $0x40] sm:$0xf]
  %v1149 = vld [vmem:[%s13 + $0x44] sm:$0xf]
  %v1150 = vld [vmem:[%s13 + $0x48] sm:$0xf]
  %v1151 = vld [vmem:[%s13 + $0x4c] sm:$0xf]
  %v1152 = vld [vmem:[%s13 + $0x50] sm:$0xf]
  %v1153 = vld [vmem:[%s13 + $0x54] sm:$0xf]
  %v1154 = vld [vmem:[%s13 + $0x58] sm:$0xf]
  %v1155 = vld [vmem:[%s13 + $0x5c] sm:$0xf]
  %v1180 = vunpack.c.l.b16 %v1132
  %v1181 = vunpack.c.l.b16 %v1133
  %v1182 = vunpack.c.l.b16 %v1134
  %v1183 = vunpack.c.l.b16 %v1135
  %v1184 = vunpack.c.l.b16 %v1136
  %v1185 = vunpack.c.l.b16 %v1137
  %v1186 = vunpack.c.l.b16 %v1138
  %v1187 = vunpack.c.l.b16 %v1139
  %v1188 = vunpack.c.l.b16 %v1140
  %v1189 = vunpack.c.l.b16 %v1141
  %v1190 = vunpack.c.l.b16 %v1142
  %v1191 = vunpack.c.l.b16 %v1143
  %v1192 = vunpack.c.l.b16 %v1144
  %v1193 = vunpack.c.l.b16 %v1145
  %v1194 = vunpack.c.l.b16 %v1146
  %v1195 = vunpack.c.l.b16 %v1147
  %v1196 = vunpack.c.l.b16 %v1148
  %v1197 = vunpack.c.l.b16 %v1149
  %v1198 = vunpack.c.l.b16 %v1150
  %v1199 = vunpack.c.l.b16 %v1151
  %v1200 = vunpack.c.l.b16 %v1152
  %v1201 = vunpack.c.l.b16 %v1153
  %v1202 = vunpack.c.l.b16 %v1154
  %v1203 = vunpack.c.l.b16 %v1155
  %v1204 = vpack.c.b16 %v1181, %v1180
  %v1205 = vpack.c.b16 %v1183, %v1182
  %v1206 = vpack.c.b16 %v1185, %v1184
  %v1207 = vpack.c.b16 %v1187, %v1186
  %v1208 = vpack.c.b16 %v1189, %v1188
  %v1209 = vpack.c.b16 %v1191, %v1190
  %v1210 = vpack.c.b16 %v1193, %v1192
  %v1211 = vpack.c.b16 %v1195, %v1194
  %v1212 = vpack.c.b16 %v1197, %v1196
  %v1213 = vpack.c.b16 %v1199, %v1198
  %v1214 = vpack.c.b16 %v1201, %v1200
  %v1215 = vpack.c.b16 %v1203, %v1202
  %v1229 = vsel %vm76, %v1131, 0
  %1231 = vmatprep.subr.bf16.mxu0 0
  %1232 = vmatpush1.bf16.msra.mxu0 %v1204
  %1233 = vmatprep.subr.bf16.mxu0 0
  %1234 = vmatpush1.bf16.msra.mxu0 %v1205
  %1235 = vmatprep.subr.bf16.mxu0 0
  %1236 = vmatpush1.bf16.msra.mxu0 %v1206
  %1237 = vmatprep.subr.bf16.mxu0 0
  %1238 = vmatpush1.bf16.msra.mxu0 %v1207
  %1239 = vmatprep.subr.bf16.mxu0 0
  %1240 = vmatpush1.bf16.msra.mxu0 %v1208
  %1241 = vmatprep.subr.bf16.mxu0 0
  %1242 = vmatpush1.bf16.msra.mxu0 %v1209
  %1243 = vmatprep.subr.bf16.mxu0 0
  %1244 = vmatpush1.bf16.msra.mxu0 %v1210
  %1245 = vmatprep.subr.bf16.mxu0 0
  %1246 = vmatpush1.bf16.msra.mxu0 %v1211
  %1247 = vmatprep.subr.bf16.mxu0 0
  %1248 = vmatpush1.bf16.msra.mxu0 %v1212
  %1249 = vmatprep.subr.bf16.mxu0 0
  %1250 = vmatpush1.bf16.msra.mxu0 %v1213
  %1251 = vmatprep.subr.bf16.mxu0 0
  %1252 = vmatpush1.bf16.msra.mxu0 %v1214
  %1253 = vmatprep.subr.bf16.mxu0 0
  %1254 = vmatpush1.bf16.msra.mxu0 %v1215
  %1255 = vmatprep.subr.bf16.mxu0 0
  %1256 = vmatpush1.bf16.msra.mxu0 0
  %1257 = vmatprep.subr.bf16.mxu0 0
  %1258 = vmatpush1.bf16.msra.mxu0 0
  %1259 = vmatprep.subr.bf16.mxu0 0
  %1260 = vmatpush1.bf16.msra.mxu0 0
  %1261 = vmatprep.subr.bf16.mxu0 0
  %1262 = vmatpush1.bf16.msra.mxu0 0
  %1263 = vmatprep.mubr.bf16.mxu0 %v1229
  %1264 = vmatmul.mubr.bf16.gmra.mrb[0].mxu0 %v1130
  %v1265 = vpop.f32.mrb[0].mxu0
  %v1266 = vadd.f32 0.0, %v1265
  %v1267 = vpop.f32.mrb[0].mxu0
  %v1268 = vpop.f32.mrb[0].mxu0
  %v1269 = vadd.f32 0.0, %v1268
  %v1270 = vpop.f32.mrb[0].mxu0
  %1271 = vdwg.mxu0
  %v1272 = vadd.f32 %v885, %v1266
  %v1273 = vadd.f32 %v886, %v1269
  %s1274 = scalar_lea.vmem %s8, 1
  %v1275 = vld [vmem:[%s1274] sm:$0x1]
  %v1276 = vmul.f32 %v1272, %v1272
  %v1277 = vmul.f32 %v1273, %v1273
  %v1278 = vsel %vm76, %v1276, 0.0
  %1279 = vadd.xlane.f32.xlu0 %v1278
  %v1280 = vpop.xlane.xlu0 %1279
  %v1281 = vsel %vm76, %v1277, 0.0
  %1282 = vadd.xlane.f32.xlu0 %v1281
  %v1283 = vpop.xlane.xlu0 %1282
  %v1284 = vmul.f32 %v1280, %v83
  %v1285 = vmul.f32 %v1283, %v83
  %v1286 = vadd.f32 %v1284, 1e-05
  %v1287 = vadd.f32 %v1285, 1e-05
  %v1288 = vrsqrt.pop %v1286
  %v1289 = vrsqrt.pop %v1287
  %v1290 = vmul.f32 %v1272, %v1288
  %v1291 = vmul.f32 %v1273, %v1289
  %v1293 = vlaneseq
  %v1294 = vshrl.u32 %v1293, 7
  %v1295 = vsub.s32 0, %v1294
  %v1296 = vrot.slane %v1275, %v1295
  %v1298 = vmul.f32 %v1290, %v1296
  %v1299 = vmul.f32 %v1291, %v1296
  %v1300 = vpack.c.bf16 %v1299, %v1298
  %s1301 = scalar_lea.vmem %s9, 32
  %v1302 = vld [vmem:[%s1301] sm:$0xf]
  %v1303 = vld [vmem:[%s1301 + $0x4] sm:$0xf]
  %v1304 = vld [vmem:[%s1301 + $0x8] sm:$0xf]
  %v1305 = vld [vmem:[%s1301 + $0xc] sm:$0xf]
  %v1306 = vld [vmem:[%s1301 + $0x10] sm:$0xf]
  %v1307 = vld [vmem:[%s1301 + $0x14] sm:$0xf]
  %v1308 = vld [vmem:[%s1301 + $0x18] sm:$0xf]
  %v1309 = vld [vmem:[%s1301 + $0x1c] sm:$0xf]
  %v1318 = vunpack.c.l.b16 %v1302
  %v1319 = vunpack.c.l.b16 %v1303
  %v1320 = vunpack.c.l.b16 %v1304
  %v1321 = vunpack.c.l.b16 %v1305
  %v1322 = vunpack.c.l.b16 %v1306
  %v1323 = vunpack.c.l.b16 %v1307
  %v1324 = vunpack.c.l.b16 %v1308
  %v1325 = vunpack.c.l.b16 %v1309
  %v1326 = vpack.c.b16 %v1319, %v1318
  %v1327 = vpack.c.b16 %v1321, %v1320
  %v1328 = vpack.c.b16 %v1323, %v1322
  %v1329 = vpack.c.b16 %v1325, %v1324
  %v1335 = vsel %vm76, %v1300, 0
  %1337 = vmatprep.subr.bf16.mxu0 0
  %1338 = vmatpush1.bf16.msra.mxu0 %v1326
  %1339 = vmatprep.subr.bf16.mxu0 0
  %1340 = vmatpush1.bf16.msra.mxu0 %v1327
  %1341 = vmatprep.subr.bf16.mxu0 0
  %1342 = vmatpush1.bf16.msra.mxu0 %v1328
  %1343 = vmatprep.subr.bf16.mxu0 0
  %1344 = vmatpush1.bf16.msra.mxu0 %v1329
  %1345 = vmatprep.subr.bf16.mxu0 0
  %1346 = vmatpush1.bf16.msra.mxu0 0
  %1347 = vmatprep.subr.bf16.mxu0 0
  %1348 = vmatpush1.bf16.msra.mxu0 0
  %1349 = vmatprep.subr.bf16.mxu0 0
  %1350 = vmatpush1.bf16.msra.mxu0 0
  %1351 = vmatprep.subr.bf16.mxu0 0
  %1352 = vmatpush1.bf16.msra.mxu0 0
  %1353 = vmatprep.subr.bf16.mxu0 0
  %1354 = vmatpush1.bf16.msra.mxu0 0
  %1355 = vmatprep.subr.bf16.mxu0 0
  %1356 = vmatpush1.bf16.msra.mxu0 0
  %1357 = vmatprep.subr.bf16.mxu0 0
  %1358 = vmatpush1.bf16.msra.mxu0 0
  %1359 = vmatprep.subr.bf16.mxu0 0
  %1360 = vmatpush1.bf16.msra.mxu0 0
  %1361 = vmatprep.subr.bf16.mxu0 0
  %1362 = vmatpush1.bf16.msra.mxu0 0
  %1363 = vmatprep.subr.bf16.mxu0 0
  %1364 = vmatpush1.bf16.msra.mxu0 0
  %1365 = vmatprep.subr.bf16.mxu0 0
  %1366 = vmatpush1.bf16.msra.mxu0 0
  %1367 = vmatprep.subr.bf16.mxu0 0
  %1368 = vmatpush1.bf16.msra.mxu0 0
  %1369 = vmatprep.mubr.bf16.mxu0 0
  %1370 = vmatmul.mubr.bf16.gmra.mrb[0].mxu0 %v1335
  %v1371 = vpop.f32.mrb[0].mxu0
  %v1372 = vadd.f32 0.0, %v1371
  %v1373 = vpop.f32.mrb[0].mxu0
  %v1374 = vpop.f32.mrb[0].mxu0
  %v1375 = vadd.f32 0.0, %v1374
  %v1376 = vpop.f32.mrb[0].mxu0
  %1377 = vdwg.mxu0
  %1378 = vrot.lane.b32.xlu0 %v1372, 64
  %v1379 = vpop.permute.xlu0 %1378
  %v1380 = vsel %vm177, %v1379, %v1372
  %1381 = vrot.lane.b32.xlu0 %v1375, 64
  %v1382 = vpop.permute.xlu0 %1381
  %v1383 = vsel %vm177, %v1382, %v1375
  %1384 = vrot.lane.b32.xlu0 %v1380, 64
  %v1385 = vpop.permute.xlu0 %1384
  %1386 = vrot.lane.b32.xlu0 %v1383, 64
  %v1387 = vpop.permute.xlu0 %1386
  %v1388 = vsel %vm177, %v1385, %v1372
  %v1389 = vsel %vm177, %v1387, %v1375
  %v1390 = vmul.f32 %v1372, %v61
  %v1391 = vmul.f32 %v1375, %v62
  %v1392 = vmul.f32 %v1388, %v195
  %v1393 = vmul.f32 %v1389, %v197
  %1396 = vrot.lane.b32.xlu0 %v1392, 127
  %v1397 = vpop.permute.xlu0 %1396
  %1398 = vrot.lane.b32.xlu0 %v1393, 127
  %v1399 = vpop.permute.xlu0 %1398
  %v1402 = vadd.f32 %v1390, %v1397
  %v1403 = vadd.f32 %v1391, %v1399
  %v1404 = vmul.f32 %v1388, %v215
  %v1405 = vmul.f32 %v1389, %v217
  %1408 = vrot.lane.b32.xlu0 %v1404, 65
  %v1409 = vpop.permute.xlu0 %1408
  %1410 = vrot.lane.b32.xlu0 %v1405, 65
  %v1411 = vpop.permute.xlu0 %1410
  %v1414 = vadd.f32 %v1402, %v1409
  %v1415 = vadd.f32 %v1403, %v1411
  %1418 = vrot.lane.b32.xlu0 %v1372, 64
  %v1419 = vpop.permute.xlu0 %1418
  %1420 = vrot.lane.b32.xlu0 %v1375, 64
  %v1421 = vpop.permute.xlu0 %1420
  %1424 = vrot.lane.b32.xlu0 %v1419, 32
  %v1425 = vpop.permute.xlu0 %1424
  %v1426 = vsel %vm240, %v1425, %v1419
  %1427 = vrot.lane.b32.xlu0 %v1421, 32
  %v1428 = vpop.permute.xlu0 %1427
  %v1429 = vsel %vm240, %v1428, %v1421
  %1430 = vrot.lane.b32.xlu0 %v1426, 32
  %v1431 = vpop.permute.xlu0 %1430
  %1432 = vrot.lane.b32.xlu0 %v1429, 32
  %v1433 = vpop.permute.xlu0 %1432
  %v1434 = vsel %vm240, %v1431, %v1419
  %v1435 = vsel %vm240, %v1433, %v1421
  %v1436 = vmul.f32 %v1372, %v256
  %v1437 = vmul.f32 %v1375, %v258
  %v1438 = vmul.f32 %v1434, %v266
  %v1439 = vmul.f32 %v1435, %v268
  %1442 = vrot.lane.b32.xlu0 %v1438, 63
  %v1443 = vpop.permute.xlu0 %1442
  %1444 = vrot.lane.b32.xlu0 %v1439, 63
  %v1445 = vpop.permute.xlu0 %1444
  %v1448 = vadd.f32 %v1436, %v1443
  %v1449 = vadd.f32 %v1437, %v1445
  %v1450 = vmul.f32 %v1434, %v286
  %v1451 = vmul.f32 %v1435, %v288
  %1454 = vrot.lane.b32.xlu0 %v1450, 33
  %v1455 = vpop.permute.xlu0 %1454
  %1456 = vrot.lane.b32.xlu0 %v1451, 33
  %v1457 = vpop.permute.xlu0 %1456
  %v1460 = vadd.f32 %v1448, %v1455
  %v1461 = vadd.f32 %v1449, %v1457
  %v1462 = vpack.c.bf16 %v1415, %v1414
  %v1463 = vpack.c.bf16 %v1461, %v1460
  %v1464 = vpack.c.bf16 %v1375, %v1372
  %1466 = vrot.lane.b32.xlu0 %v1463, 64
  %v1467 = vpop.permute.xlu0 %1466
  %v1469 = vsel %vm309, %v1462, 0
  %v1472 = vsel %vm309, %v1467, 0
  %1474 = vmatprep.subr.bf16.mxu0 0
  %1475 = vmatpush1.bf16.xpose.msra.mxu0 %v1472
  %1476 = vmatprep.subr.bf16.mxu0 0
  %1477 = vmatpush1.bf16.xpose.msra.mxu0 0
  %1478 = vmatprep.subr.bf16.mxu0 0
  %1479 = vmatpush1.bf16.xpose.msra.mxu0 0
  %1480 = vmatprep.subr.bf16.mxu0 0
  %1481 = vmatpush1.bf16.xpose.msra.mxu0 0
  %1482 = vmatprep.subr.bf16.mxu0 0
  %1483 = vmatpush1.bf16.xpose.msra.mxu0 0
  %1484 = vmatprep.subr.bf16.mxu0 0
  %1485 = vmatpush1.bf16.xpose.msra.mxu0 0
  %1486 = vmatprep.subr.bf16.mxu0 0
  %1487 = vmatpush1.bf16.xpose.msra.mxu0 0
  %1488 = vmatprep.subr.bf16.mxu0 0
  %1489 = vmatpush1.bf16.xpose.msra.mxu0 0
  %1490 = vmatprep.subr.bf16.mxu0 0
  %1491 = vmatpush1.bf16.xpose.msra.mxu0 0
  %1492 = vmatprep.subr.bf16.mxu0 0
  %1493 = vmatpush1.bf16.xpose.msra.mxu0 0
  %1494 = vmatprep.subr.bf16.mxu0 0
  %1495 = vmatpush1.bf16.xpose.msra.mxu0 0
  %1496 = vmatprep.subr.bf16.mxu0 0
  %1497 = vmatpush1.bf16.xpose.msra.mxu0 0
  %1498 = vmatprep.subr.bf16.mxu0 0
  %1499 = vmatpush1.bf16.xpose.msra.mxu0 0
  %1500 = vmatprep.subr.bf16.mxu0 0
  %1501 = vmatpush1.bf16.xpose.msra.mxu0 0
  %1502 = vmatprep.subr.bf16.mxu0 0
  %1503 = vmatpush1.bf16.xpose.msra.mxu0 0
  %1504 = vmatprep.subr.bf16.mxu0 0
  %1505 = vmatpush1.bf16.xpose.msra.mxu0 0
  %1506 = vmatprep.mubr.bf16.mxu0 0
  %1507 = vmatmul.mubr.bf16.gmra.mrb[0].mxu0 %v1469
  %v1508 = vpop.f32.mrb[0].mxu0
  %v1509 = vadd.f32 %v59, %v1508
  %v1510 = vpop.f32.mrb[0].mxu0
  %v1511 = vpop.f32.mrb[0].mxu0
  %v1512 = vadd.f32 %v60, %v1511
  %v1513 = vpop.f32.mrb[0].mxu0
  %1514 = vdwg.mxu0
  %v1515 = vsel %vm309, %v1509, -inf
  %1516 = vmax.xlane.f32.xlu0 %v1515
  %v1517 = vpop.xlane.xlu0 %1516
  %v1518 = vsel %vm309, %v1512, -inf
  %1519 = vmax.xlane.f32.xlu0 %v1518
  %v1520 = vpop.xlane.xlu0 %1519
  %v1521 = vsub.f32 %v1509, %v1517
  %v1522 = vsub.f32 %v1512, %v1520
  %v1523 = vmul.f32 %v1521, 1.442695
  %v1524 = vpow.pop %v1523
  %v1525 = vmul.f32 %v1522, 1.442695
  %v1526 = vpow.pop %v1525
  %v1527 = vsel %vm309, %v1524, 0.0
  %1528 = vadd.xlane.f32.xlu0 %v1527
  %v1529 = vpop.xlane.xlu0 %1528
  %v1530 = vsel %vm309, %v1526, 0.0
  %1531 = vadd.xlane.f32.xlu0 %v1530
  %v1532 = vpop.xlane.xlu0 %1531
  %v1533 = vrcp.pop %v1529
  %v1534 = vrcp.pop %v1532
  %v1535 = vmul.f32 %v1524, %v1533
  %v1536 = vmul.f32 %v1526, %v1534
  %v1537 = vpack.c.bf16 %v1536, %v1535
  %1539 = vrot.lane.b32.xlu0 %v1464, 32
  %v1540 = vpop.permute.xlu0 %1539
  %v1543 = vsel %vm309, %v1537, 0
  %1545 = vmatprep.subr.bf16.mxu0 0
  %1546 = vmatpush1.bf16.msra.mxu0 %v1540
  %1547 = vmatprep.subr.bf16.mxu0 0
  %1548 = vmatpush1.bf16.msra.mxu0 0
  %1549 = vmatprep.subr.bf16.mxu0 0
  %1550 = vmatpush1.bf16.msra.mxu0 0
  %1551 = vmatprep.subr.bf16.mxu0 0
  %1552 = vmatpush1.bf16.msra.mxu0 0
  %1553 = vmatprep.subr.bf16.mxu0 0
  %1554 = vmatpush1.bf16.msra.mxu0 0
  %1555 = vmatprep.subr.bf16.mxu0 0
  %1556 = vmatpush1.bf16.msra.mxu0 0
  %1557 = vmatprep.subr.bf16.mxu0 0
  %1558 = vmatpush1.bf16.msra.mxu0 0
  %1559 = vmatprep.subr.bf16.mxu0 0
  %1560 = vmatpush1.bf16.msra.mxu0 0
  %1561 = vmatprep.subr.bf16.mxu0 0
  %1562 = vmatpush1.bf16.msra.mxu0 0
  %1563 = vmatprep.subr.bf16.mxu0 0
  %1564 = vmatpush1.bf16.msra.mxu0 0
  %1565 = vmatprep.subr.bf16.mxu0 0
  %1566 = vmatpush1.bf16.msra.mxu0 0
  %1567 = vmatprep.subr.bf16.mxu0 0
  %1568 = vmatpush1.bf16.msra.mxu0 0
  %1569 = vmatprep.subr.bf16.mxu0 0
  %1570 = vmatpush1.bf16.msra.mxu0 0
  %1571 = vmatprep.subr.bf16.mxu0 0
  %1572 = vmatpush1.bf16.msra.mxu0 0
  %1573 = vmatprep.subr.bf16.mxu0 0
  %1574 = vmatpush1.bf16.msra.mxu0 0
  %1575 = vmatprep.subr.bf16.mxu0 0
  %1576 = vmatpush1.bf16.msra.mxu0 0
  %1577 = vmatprep.mubr.bf16.mxu0 0
  %1578 = vmatmul.mubr.bf16.gmra.mrb[0].mxu0 %v1543
  %v1579 = vpop.f32.mrb[0].mxu0
  %v1580 = vadd.f32 0.0, %v1579
  %v1581 = vpop.f32.mrb[0].mxu0
  %v1582 = vpop.f32.mrb[0].mxu0
  %v1583 = vadd.f32 0.0, %v1582
  %v1584 = vpop.f32.mrb[0].mxu0
  %1585 = vdwg.mxu0
  %1587 = vrot.lane.b32.xlu0 %v1462, 112
  %v1588 = vpop.permute.xlu0 %1587
  %v1590 = vsel %vm309, %v1588, 0
  %1592 = vmatprep.subr.bf16.mxu0 0
  %1593 = vmatpush1.bf16.xpose.msra.mxu0 %v1472
  %1594 = vmatprep.subr.bf16.mxu0 0
  %1595 = vmatpush1.bf16.xpose.msra.mxu0 0
  %1596 = vmatprep.subr.bf16.mxu0 0
  %1597 = vmatpush1.bf16.xpose.msra.mxu0 0
  %1598 = vmatprep.subr.bf16.mxu0 0
  %1599 = vmatpush1.bf16.xpose.msra.mxu0 0
  %1600 = vmatprep.subr.bf16.mxu0 0
  %1601 = vmatpush1.bf16.xpose.msra.mxu0 0
  %1602 = vmatprep.subr.bf16.mxu0 0
  %1603 = vmatpush1.bf16.xpose.msra.mxu0 0
  %1604 = vmatprep.subr.bf16.mxu0 0
  %1605 = vmatpush1.bf16.xpose.msra.mxu0 0
  %1606 = vmatprep.subr.bf16.mxu0 0
  %1607 = vmatpush1.bf16.xpose.msra.mxu0 0
  %1608 = vmatprep.subr.bf16.mxu0 0
  %1609 = vmatpush1.bf16.xpose.msra.mxu0 0
  %1610 = vmatprep.subr.bf16.mxu0 0
  %1611 = vmatpush1.bf16.xpose.msra.mxu0 0
  %1612 = vmatprep.subr.bf16.mxu0 0
  %1613 = vmatpush1.bf16.xpose.msra.mxu0 0
  %1614 = vmatprep.subr.bf16.mxu0 0
  %1615 = vmatpush1.bf16.xpose.msra.mxu0 0
  %1616 = vmatprep.subr.bf16.mxu0 0
  %1617 = vmatpush1.bf16.xpose.msra.mxu0 0
  %1618 = vmatprep.subr.bf16.mxu0 0
  %1619 = vmatpush1.bf16.xpose.msra.mxu0 0
  %1620 = vmatprep.subr.bf16.mxu0 0
  %1621 = vmatpush1.bf16.xpose.msra.mxu0 0
  %1622 = vmatprep.subr.bf16.mxu0 0
  %1623 = vmatpush1.bf16.xpose.msra.mxu0 0
  %1624 = vmatprep.mubr.bf16.mxu0 0
  %1625 = vmatmul.mubr.bf16.gmra.mrb[0].mxu0 %v1590
  %v1626 = vpop.f32.mrb[0].mxu0
  %v1627 = vadd.f32 %v59, %v1626
  %v1628 = vpop.f32.mrb[0].mxu0
  %v1629 = vpop.f32.mrb[0].mxu0
  %v1630 = vadd.f32 %v60, %v1629
  %v1631 = vpop.f32.mrb[0].mxu0
  %1632 = vdwg.mxu0
  %v1633 = vsel %vm309, %v1627, -inf
  %1634 = vmax.xlane.f32.xlu0 %v1633
  %v1635 = vpop.xlane.xlu0 %1634
  %v1636 = vsel %vm309, %v1630, -inf
  %1637 = vmax.xlane.f32.xlu0 %v1636
  %v1638 = vpop.xlane.xlu0 %1637
  %v1639 = vsub.f32 %v1627, %v1635
  %v1640 = vsub.f32 %v1630, %v1638
  %v1641 = vmul.f32 %v1639, 1.442695
  %v1642 = vpow.pop %v1641
  %v1643 = vmul.f32 %v1640, 1.442695
  %v1644 = vpow.pop %v1643
  %v1645 = vsel %vm309, %v1642, 0.0
  %1646 = vadd.xlane.f32.xlu0 %v1645
  %v1647 = vpop.xlane.xlu0 %1646
  %v1648 = vsel %vm309, %v1644, 0.0
  %1649 = vadd.xlane.f32.xlu0 %v1648
  %v1650 = vpop.xlane.xlu0 %1649
  %v1651 = vrcp.pop %v1647
  %v1652 = vrcp.pop %v1650
  %v1653 = vmul.f32 %v1642, %v1651
  %v1654 = vmul.f32 %v1644, %v1652
  %v1655 = vpack.c.bf16 %v1654, %v1653
  %v1657 = vsel %vm309, %v1655, 0
  %1659 = vmatprep.subr.bf16.mxu0 0
  %1660 = vmatpush1.bf16.msra.mxu0 %v1540
  %1661 = vmatprep.subr.bf16.mxu0 0
  %1662 = vmatpush1.bf16.msra.mxu0 0
  %1663 = vmatprep.subr.bf16.mxu0 0
  %1664 = vmatpush1.bf16.msra.mxu0 0
  %1665 = vmatprep.subr.bf16.mxu0 0
  %1666 = vmatpush1.bf16.msra.mxu0 0
  %1667 = vmatprep.subr.bf16.mxu0 0
  %1668 = vmatpush1.bf16.msra.mxu0 0
  %1669 = vmatprep.subr.bf16.mxu0 0
  %1670 = vmatpush1.bf16.msra.mxu0 0
  %1671 = vmatprep.subr.bf16.mxu0 0
  %1672 = vmatpush1.bf16.msra.mxu0 0
  %1673 = vmatprep.subr.bf16.mxu0 0
  %1674 = vmatpush1.bf16.msra.mxu0 0
  %1675 = vmatprep.subr.bf16.mxu0 0
  %1676 = vmatpush1.bf16.msra.mxu0 0
  %1677 = vmatprep.subr.bf16.mxu0 0
  %1678 = vmatpush1.bf16.msra.mxu0 0
  %1679 = vmatprep.subr.bf16.mxu0 0
  %1680 = vmatpush1.bf16.msra.mxu0 0
  %1681 = vmatprep.subr.bf16.mxu0 0
  %1682 = vmatpush1.bf16.msra.mxu0 0
  %1683 = vmatprep.subr.bf16.mxu0 0
  %1684 = vmatpush1.bf16.msra.mxu0 0
  %1685 = vmatprep.subr.bf16.mxu0 0
  %1686 = vmatpush1.bf16.msra.mxu0 0
  %1687 = vmatprep.subr.bf16.mxu0 0
  %1688 = vmatpush1.bf16.msra.mxu0 0
  %1689 = vmatprep.subr.bf16.mxu0 0
  %1690 = vmatpush1.bf16.msra.mxu0 0
  %1691 = vmatprep.mubr.bf16.mxu0 0
  %1692 = vmatmul.mubr.bf16.gmra.mrb[0].mxu0 %v1657
  %v1693 = vpop.f32.mrb[0].mxu0
  %v1694 = vadd.f32 0.0, %v1693
  %v1695 = vpop.f32.mrb[0].mxu0
  %v1696 = vpop.f32.mrb[0].mxu0
  %v1697 = vadd.f32 0.0, %v1696
  %v1698 = vpop.f32.mrb[0].mxu0
  %1699 = vdwg.mxu0
  %1700 = vrot.lane.b32.xlu0 %v1462, 96
  %v1701 = vpop.permute.xlu0 %1700
  %1702 = vrot.lane.b32.xlu0 %v1463, 48
  %v1703 = vpop.permute.xlu0 %1702
  %v1705 = vsel %vm309, %v1701, 0
  %v1708 = vsel %vm309, %v1703, 0
  %1710 = vmatprep.subr.bf16.mxu0 0
  %1711 = vmatpush1.bf16.xpose.msra.mxu0 %v1708
  %1712 = vmatprep.subr.bf16.mxu0 0
  %1713 = vmatpush1.bf16.xpose.msra.mxu0 0
  %1714 = vmatprep.subr.bf16.mxu0 0
  %1715 = vmatpush1.bf16.xpose.msra.mxu0 0
  %1716 = vmatprep.subr.bf16.mxu0 0
  %1717 = vmatpush1.bf16.xpose.msra.mxu0 0
  %1718 = vmatprep.subr.bf16.mxu0 0
  %1719 = vmatpush1.bf16.xpose.msra.mxu0 0
  %1720 = vmatprep.subr.bf16.mxu0 0
  %1721 = vmatpush1.bf16.xpose.msra.mxu0 0
  %1722 = vmatprep.subr.bf16.mxu0 0
  %1723 = vmatpush1.bf16.xpose.msra.mxu0 0
  %1724 = vmatprep.subr.bf16.mxu0 0
  %1725 = vmatpush1.bf16.xpose.msra.mxu0 0
  %1726 = vmatprep.subr.bf16.mxu0 0
  %1727 = vmatpush1.bf16.xpose.msra.mxu0 0
  %1728 = vmatprep.subr.bf16.mxu0 0
  %1729 = vmatpush1.bf16.xpose.msra.mxu0 0
  %1730 = vmatprep.subr.bf16.mxu0 0
  %1731 = vmatpush1.bf16.xpose.msra.mxu0 0
  %1732 = vmatprep.subr.bf16.mxu0 0
  %1733 = vmatpush1.bf16.xpose.msra.mxu0 0
  %1734 = vmatprep.subr.bf16.mxu0 0
  %1735 = vmatpush1.bf16.xpose.msra.mxu0 0
  %1736 = vmatprep.subr.bf16.mxu0 0
  %1737 = vmatpush1.bf16.xpose.msra.mxu0 0
  %1738 = vmatprep.subr.bf16.mxu0 0
  %1739 = vmatpush1.bf16.xpose.msra.mxu0 0
  %1740 = vmatprep.subr.bf16.mxu0 0
  %1741 = vmatpush1.bf16.xpose.msra.mxu0 0
  %1742 = vmatprep.mubr.bf16.mxu0 0
  %1743 = vmatmul.mubr.bf16.gmra.mrb[0].mxu0 %v1705
  %v1744 = vpop.f32.mrb[0].mxu0
  %v1745 = vadd.f32 %v59, %v1744
  %v1746 = vpop.f32.mrb[0].mxu0
  %v1747 = vpop.f32.mrb[0].mxu0
  %v1748 = vadd.f32 %v60, %v1747
  %v1749 = vpop.f32.mrb[0].mxu0
  %1750 = vdwg.mxu0
  %v1751 = vsel %vm309, %v1745, -inf
  %1752 = vmax.xlane.f32.xlu0 %v1751
  %v1753 = vpop.xlane.xlu0 %1752
  %v1754 = vsel %vm309, %v1748, -inf
  %1755 = vmax.xlane.f32.xlu0 %v1754
  %v1756 = vpop.xlane.xlu0 %1755
  %v1757 = vsub.f32 %v1745, %v1753
  %v1758 = vsub.f32 %v1748, %v1756
  %v1759 = vmul.f32 %v1757, 1.442695
  %v1760 = vpow.pop %v1759
  %v1761 = vmul.f32 %v1758, 1.442695
  %v1762 = vpow.pop %v1761
  %v1763 = vsel %vm309, %v1760, 0.0
  %1764 = vadd.xlane.f32.xlu0 %v1763
  %v1765 = vpop.xlane.xlu0 %1764
  %v1766 = vsel %vm309, %v1762, 0.0
  %1767 = vadd.xlane.f32.xlu0 %v1766
  %v1768 = vpop.xlane.xlu0 %1767
  %v1769 = vrcp.pop %v1765
  %v1770 = vrcp.pop %v1768
  %v1771 = vmul.f32 %v1760, %v1769
  %v1772 = vmul.f32 %v1762, %v1770
  %v1773 = vpack.c.bf16 %v1772, %v1771
  %1774 = vrot.lane.b32.xlu0 %v1464, 16
  %v1775 = vpop.permute.xlu0 %1774
  %v1778 = vsel %vm309, %v1773, 0
  %1780 = vmatprep.subr.bf16.mxu0 0
  %1781 = vmatpush1.bf16.msra.mxu0 %v1775
  %1782 = vmatprep.subr.bf16.mxu0 0
  %1783 = vmatpush1.bf16.msra.mxu0 0
  %1784 = vmatprep.subr.bf16.mxu0 0
  %1785 = vmatpush1.bf16.msra.mxu0 0
  %1786 = vmatprep.subr.bf16.mxu0 0
  %1787 = vmatpush1.bf16.msra.mxu0 0
  %1788 = vmatprep.subr.bf16.mxu0 0
  %1789 = vmatpush1.bf16.msra.mxu0 0
  %1790 = vmatprep.subr.bf16.mxu0 0
  %1791 = vmatpush1.bf16.msra.mxu0 0
  %1792 = vmatprep.subr.bf16.mxu0 0
  %1793 = vmatpush1.bf16.msra.mxu0 0
  %1794 = vmatprep.subr.bf16.mxu0 0
  %1795 = vmatpush1.bf16.msra.mxu0 0
  %1796 = vmatprep.subr.bf16.mxu0 0
  %1797 = vmatpush1.bf16.msra.mxu0 0
  %1798 = vmatprep.subr.bf16.mxu0 0
  %1799 = vmatpush1.bf16.msra.mxu0 0
  %1800 = vmatprep.subr.bf16.mxu0 0
  %1801 = vmatpush1.bf16.msra.mxu0 0
  %1802 = vmatprep.subr.bf16.mxu0 0
  %1803 = vmatpush1.bf16.msra.mxu0 0
  %1804 = vmatprep.subr.bf16.mxu0 0
  %1805 = vmatpush1.bf16.msra.mxu0 0
  %1806 = vmatprep.subr.bf16.mxu0 0
  %1807 = vmatpush1.bf16.msra.mxu0 0
  %1808 = vmatprep.subr.bf16.mxu0 0
  %1809 = vmatpush1.bf16.msra.mxu0 0
  %1810 = vmatprep.subr.bf16.mxu0 0
  %1811 = vmatpush1.bf16.msra.mxu0 0
  %1812 = vmatprep.mubr.bf16.mxu0 0
  %1813 = vmatmul.mubr.bf16.gmra.mrb[0].mxu0 %v1778
  %v1814 = vpop.f32.mrb[0].mxu0
  %v1815 = vadd.f32 0.0, %v1814
  %v1816 = vpop.f32.mrb[0].mxu0
  %v1817 = vpop.f32.mrb[0].mxu0
  %v1818 = vadd.f32 0.0, %v1817
  %v1819 = vpop.f32.mrb[0].mxu0
  %1820 = vdwg.mxu0
  %1821 = vrot.lane.b32.xlu0 %v1462, 80
  %v1822 = vpop.permute.xlu0 %1821
  %v1824 = vsel %vm309, %v1822, 0
  %1826 = vmatprep.subr.bf16.mxu0 0
  %1827 = vmatpush1.bf16.xpose.msra.mxu0 %v1708
  %1828 = vmatprep.subr.bf16.mxu0 0
  %1829 = vmatpush1.bf16.xpose.msra.mxu0 0
  %1830 = vmatprep.subr.bf16.mxu0 0
  %1831 = vmatpush1.bf16.xpose.msra.mxu0 0
  %1832 = vmatprep.subr.bf16.mxu0 0
  %1833 = vmatpush1.bf16.xpose.msra.mxu0 0
  %1834 = vmatprep.subr.bf16.mxu0 0
  %1835 = vmatpush1.bf16.xpose.msra.mxu0 0
  %1836 = vmatprep.subr.bf16.mxu0 0
  %1837 = vmatpush1.bf16.xpose.msra.mxu0 0
  %1838 = vmatprep.subr.bf16.mxu0 0
  %1839 = vmatpush1.bf16.xpose.msra.mxu0 0
  %1840 = vmatprep.subr.bf16.mxu0 0
  %1841 = vmatpush1.bf16.xpose.msra.mxu0 0
  %1842 = vmatprep.subr.bf16.mxu0 0
  %1843 = vmatpush1.bf16.xpose.msra.mxu0 0
  %1844 = vmatprep.subr.bf16.mxu0 0
  %1845 = vmatpush1.bf16.xpose.msra.mxu0 0
  %1846 = vmatprep.subr.bf16.mxu0 0
  %1847 = vmatpush1.bf16.xpose.msra.mxu0 0
  %1848 = vmatprep.subr.bf16.mxu0 0
  %1849 = vmatpush1.bf16.xpose.msra.mxu0 0
  %1850 = vmatprep.subr.bf16.mxu0 0
  %1851 = vmatpush1.bf16.xpose.msra.mxu0 0
  %1852 = vmatprep.subr.bf16.mxu0 0
  %1853 = vmatpush1.bf16.xpose.msra.mxu0 0
  %1854 = vmatprep.subr.bf16.mxu0 0
  %1855 = vmatpush1.bf16.xpose.msra.mxu0 0
  %1856 = vmatprep.subr.bf16.mxu0 0
  %1857 = vmatpush1.bf16.xpose.msra.mxu0 0
  %1858 = vmatprep.mubr.bf16.mxu0 0
  %1859 = vmatmul.mubr.bf16.gmra.mrb[0].mxu0 %v1824
  %v1860 = vpop.f32.mrb[0].mxu0
  %v1861 = vadd.f32 %v59, %v1860
  %v1862 = vpop.f32.mrb[0].mxu0
  %v1863 = vpop.f32.mrb[0].mxu0
  %v1864 = vadd.f32 %v60, %v1863
  %v1865 = vpop.f32.mrb[0].mxu0
  %1866 = vdwg.mxu0
  %v1867 = vsel %vm309, %v1861, -inf
  %1868 = vmax.xlane.f32.xlu0 %v1867
  %v1869 = vpop.xlane.xlu0 %1868
  %v1870 = vsel %vm309, %v1864, -inf
  %1871 = vmax.xlane.f32.xlu0 %v1870
  %v1872 = vpop.xlane.xlu0 %1871
  %v1873 = vsub.f32 %v1861, %v1869
  %v1874 = vsub.f32 %v1864, %v1872
  %v1875 = vmul.f32 %v1873, 1.442695
  %v1876 = vpow.pop %v1875
  %v1877 = vmul.f32 %v1874, 1.442695
  %v1878 = vpow.pop %v1877
  %v1879 = vsel %vm309, %v1876, 0.0
  %1880 = vadd.xlane.f32.xlu0 %v1879
  %v1881 = vpop.xlane.xlu0 %1880
  %v1882 = vsel %vm309, %v1878, 0.0
  %1883 = vadd.xlane.f32.xlu0 %v1882
  %v1884 = vpop.xlane.xlu0 %1883
  %v1885 = vrcp.pop %v1881
  %v1886 = vrcp.pop %v1884
  %v1887 = vmul.f32 %v1876, %v1885
  %v1888 = vmul.f32 %v1878, %v1886
  %v1889 = vpack.c.bf16 %v1888, %v1887
  %v1891 = vsel %vm309, %v1889, 0
  %1893 = vmatprep.subr.bf16.mxu0 0
  %1894 = vmatpush1.bf16.msra.mxu0 %v1775
  %1895 = vmatprep.subr.bf16.mxu0 0
  %1896 = vmatpush1.bf16.msra.mxu0 0
  %1897 = vmatprep.subr.bf16.mxu0 0
  %1898 = vmatpush1.bf16.msra.mxu0 0
  %1899 = vmatprep.subr.bf16.mxu0 0
  %1900 = vmatpush1.bf16.msra.mxu0 0
  %1901 = vmatprep.subr.bf16.mxu0 0
  %1902 = vmatpush1.bf16.msra.mxu0 0
  %1903 = vmatprep.subr.bf16.mxu0 0
  %1904 = vmatpush1.bf16.msra.mxu0 0
  %1905 = vmatprep.subr.bf16.mxu0 0
  %1906 = vmatpush1.bf16.msra.mxu0 0
  %1907 = vmatprep.subr.bf16.mxu0 0
  %1908 = vmatpush1.bf16.msra.mxu0 0
  %1909 = vmatprep.subr.bf16.mxu0 0
  %1910 = vmatpush1.bf16.msra.mxu0 0
  %1911 = vmatprep.subr.bf16.mxu0 0
  %1912 = vmatpush1.bf16.msra.mxu0 0
  %1913 = vmatprep.subr.bf16.mxu0 0
  %1914 = vmatpush1.bf16.msra.mxu0 0
  %1915 = vmatprep.subr.bf16.mxu0 0
  %1916 = vmatpush1.bf16.msra.mxu0 0
  %1917 = vmatprep.subr.bf16.mxu0 0
  %1918 = vmatpush1.bf16.msra.mxu0 0
  %1919 = vmatprep.subr.bf16.mxu0 0
  %1920 = vmatpush1.bf16.msra.mxu0 0
  %1921 = vmatprep.subr.bf16.mxu0 0
  %1922 = vmatpush1.bf16.msra.mxu0 0
  %1923 = vmatprep.subr.bf16.mxu0 0
  %1924 = vmatpush1.bf16.msra.mxu0 0
  %1925 = vmatprep.mubr.bf16.mxu0 0
  %1926 = vmatmul.mubr.bf16.gmra.mrb[0].mxu0 %v1891
  %v1927 = vpop.f32.mrb[0].mxu0
  %v1928 = vadd.f32 0.0, %v1927
  %v1929 = vpop.f32.mrb[0].mxu0
  %v1930 = vpop.f32.mrb[0].mxu0
  %v1931 = vadd.f32 0.0, %v1930
  %v1932 = vpop.f32.mrb[0].mxu0
  %1933 = vdwg.mxu0
  %1936 = vrot.lane.b32.xlu0 %v1694, 16
  %v1937 = vpop.permute.xlu0 %1936
  %1938 = vrot.lane.b32.xlu0 %v1697, 16
  %v1939 = vpop.permute.xlu0 %1938
  %1944 = vrot.lane.b32.xlu0 %v1815, 32
  %v1945 = vpop.permute.xlu0 %1944
  %1946 = vrot.lane.b32.xlu0 %v1818, 32
  %v1947 = vpop.permute.xlu0 %1946
  %1952 = vrot.lane.b32.xlu0 %v1928, 48
  %v1953 = vpop.permute.xlu0 %1952
  %1954 = vrot.lane.b32.xlu0 %v1931, 48
  %v1955 = vpop.permute.xlu0 %1954
  %v1958 = vsel %vm309, %v1580, %v1937
  %v1959 = vsel %vm309, %v1583, %v1939
  %v1960 = vsel %vm802, %v1958, %v1945
  %v1961 = vsel %vm802, %v1959, %v1947
  %v1962 = vsel %vm805, %v1960, %v1953
  %v1963 = vsel %vm805, %v1961, %v1955
  %v1964 = vpack.c.bf16 %v1963, %v1962
  %s1965 = scalar_lea.vmem %s10, 32
  %v1966 = vld [vmem:[%s1965] sm:$0xf]
  %v1967 = vld [vmem:[%s1965 + $0x4] sm:$0xf]
  %v1968 = vld [vmem:[%s1965 + $0x8] sm:$0xf]
  %v1969 = vld [vmem:[%s1965 + $0xc] sm:$0xf]
  %v1970 = vld [vmem:[%s1965 + $0x10] sm:$0xf]
  %v1971 = vld [vmem:[%s1965 + $0x14] sm:$0xf]
  %v1972 = vld [vmem:[%s1965 + $0x18] sm:$0xf]
  %v1973 = vld [vmem:[%s1965 + $0x1c] sm:$0xf]
  %v1982 = vunpack.c.l.b16 %v1966
  %v1983 = vunpack.c.l.b16 %v1967
  %v1984 = vunpack.c.l.b16 %v1968
  %v1985 = vunpack.c.l.b16 %v1969
  %v1986 = vunpack.c.l.b16 %v1970
  %v1987 = vunpack.c.l.b16 %v1971
  %v1988 = vunpack.c.l.b16 %v1972
  %v1989 = vunpack.c.l.b16 %v1973
  %v1990 = vpack.c.b16 %v1983, %v1982
  %v1991 = vpack.c.b16 %v1985, %v1984
  %v1992 = vpack.c.b16 %v1987, %v1986
  %v1993 = vpack.c.b16 %v1989, %v1988
  %v1999 = vsel %vm76, %v1964, 0
  %2001 = vmatprep.subr.bf16.mxu0 0
  %2002 = vmatpush1.bf16.msra.mxu0 %v1990
  %2003 = vmatprep.subr.bf16.mxu0 0
  %2004 = vmatpush1.bf16.msra.mxu0 %v1991
  %2005 = vmatprep.subr.bf16.mxu0 0
  %2006 = vmatpush1.bf16.msra.mxu0 %v1992
  %2007 = vmatprep.subr.bf16.mxu0 0
  %2008 = vmatpush1.bf16.msra.mxu0 %v1993
  %2009 = vmatprep.subr.bf16.mxu0 0
  %2010 = vmatpush1.bf16.msra.mxu0 0
  %2011 = vmatprep.subr.bf16.mxu0 0
  %2012 = vmatpush1.bf16.msra.mxu0 0
  %2013 = vmatprep.subr.bf16.mxu0 0
  %2014 = vmatpush1.bf16.msra.mxu0 0
  %2015 = vmatprep.subr.bf16.mxu0 0
  %2016 = vmatpush1.bf16.msra.mxu0 0
  %2017 = vmatprep.subr.bf16.mxu0 0
  %2018 = vmatpush1.bf16.msra.mxu0 0
  %2019 = vmatprep.subr.bf16.mxu0 0
  %2020 = vmatpush1.bf16.msra.mxu0 0
  %2021 = vmatprep.subr.bf16.mxu0 0
  %2022 = vmatpush1.bf16.msra.mxu0 0
  %2023 = vmatprep.subr.bf16.mxu0 0
  %2024 = vmatpush1.bf16.msra.mxu0 0
  %2025 = vmatprep.subr.bf16.mxu0 0
  %2026 = vmatpush1.bf16.msra.mxu0 0
  %2027 = vmatprep.subr.bf16.mxu0 0
  %2028 = vmatpush1.bf16.msra.mxu0 0
  %2029 = vmatprep.subr.bf16.mxu0 0
  %2030 = vmatpush1.bf16.msra.mxu0 0
  %2031 = vmatprep.subr.bf16.mxu0 0
  %2032 = vmatpush1.bf16.msra.mxu0 0
  %2033 = vmatprep.mubr.bf16.mxu0 0
  %2034 = vmatmul.mubr.bf16.gmra.mrb[0].mxu0 %v1999
  %v2035 = vpop.f32.mrb[0].mxu0
  %v2036 = vadd.f32 0.0, %v2035
  %v2037 = vpop.f32.mrb[0].mxu0
  %v2038 = vpop.f32.mrb[0].mxu0
  %v2039 = vadd.f32 0.0, %v2038
  %v2040 = vpop.f32.mrb[0].mxu0
  %2041 = vdwg.mxu0
  %v2042 = vadd.f32 %v1272, %v2036
  %v2043 = vadd.f32 %v1273, %v2039
  %s2044 = scalar_lea.vmem %s11, 1
  %v2045 = vld [vmem:[%s2044] sm:$0x1]
  %v2046 = vmul.f32 %v2042, %v2042
  %v2047 = vmul.f32 %v2043, %v2043
  %v2048 = vsel %vm76, %v2046, 0.0
  %2049 = vadd.xlane.f32.xlu0 %v2048
  %v2050 = vpop.xlane.xlu0 %2049
  %v2051 = vsel %vm76, %v2047, 0.0
  %2052 = vadd.xlane.f32.xlu0 %v2051
  %v2053 = vpop.xlane.xlu0 %2052
  %v2054 = vmul.f32 %v2050, %v83
  %v2055 = vmul.f32 %v2053, %v83
  %v2056 = vadd.f32 %v2054, 1e-05
  %v2057 = vadd.f32 %v2055, 1e-05
  %v2058 = vrsqrt.pop %v2056
  %v2059 = vrsqrt.pop %v2057
  %v2060 = vmul.f32 %v2042, %v2058
  %v2061 = vmul.f32 %v2043, %v2059
  %v2063 = vlaneseq
  %v2064 = vshrl.u32 %v2063, 7
  %v2065 = vsub.s32 0, %v2064
  %v2066 = vrot.slane %v2045, %v2065
  %v2068 = vmul.f32 %v2060, %v2066
  %v2069 = vmul.f32 %v2061, %v2066
  %v2070 = vpack.c.bf16 %v2069, %v2068
  %s2071 = scalar_lea.vmem %s12, 64
  %v2072 = vld [vmem:[%s2071] sm:$0xff]
  %v2073 = vld [vmem:[%s2071 + $0x8] sm:$0xff]
  %v2074 = vld [vmem:[%s2071 + $0x10] sm:$0xff]
  %v2075 = vld [vmem:[%s2071 + $0x18] sm:$0xff]
  %v2076 = vld [vmem:[%s2071 + $0x20] sm:$0xff]
  %v2077 = vld [vmem:[%s2071 + $0x28] sm:$0xff]
  %v2078 = vld [vmem:[%s2071 + $0x30] sm:$0xff]
  %v2079 = vld [vmem:[%s2071 + $0x38] sm:$0xff]
  %v2088 = vunpack.c.l.b16 %v2072
  %v2089 = vunpack.c.h.b16 %v2072
  %v2090 = vunpack.c.l.b16 %v2073
  %v2091 = vunpack.c.h.b16 %v2073
  %v2092 = vunpack.c.l.b16 %v2074
  %v2093 = vunpack.c.h.b16 %v2074
  %v2094 = vunpack.c.l.b16 %v2075
  %v2095 = vunpack.c.h.b16 %v2075
  %v2096 = vunpack.c.l.b16 %v2076
  %v2097 = vunpack.c.h.b16 %v2076
  %v2098 = vunpack.c.l.b16 %v2077
  %v2099 = vunpack.c.h.b16 %v2077
  %v2100 = vunpack.c.l.b16 %v2078
  %v2101 = vunpack.c.h.b16 %v2078
  %v2102 = vunpack.c.l.b16 %v2079
  %v2103 = vunpack.c.h.b16 %v2079
  %v2104 = vpack.c.b16 %v2090, %v2088
  %v2105 = vpack.c.b16 %v2091, %v2089
  %v2106 = vpack.c.b16 %v2094, %v2092
  %v2107 = vpack.c.b16 %v2095, %v2093
  %v2108 = vpack.c.b16 %v2098, %v2096
  %v2109 = vpack.c.b16 %v2099, %v2097
  %v2110 = vpack.c.b16 %v2102, %v2100
  %v2111 = vpack.c.b16 %v2103, %v2101
  %v2121 = vsel %vm76, %v2070, 0
  %2123 = vmatprep.subr.bf16.mxu0 %v2105
  %2124 = vmatpush1.bf16.msra.mxu0 %v2104
  %2125 = vmatprep.subr.bf16.mxu0 %v2107
  %2126 = vmatpush1.bf16.msra.mxu0 %v2106
  %2127 = vmatprep.subr.bf16.mxu0 %v2109
  %2128 = vmatpush1.bf16.msra.mxu0 %v2108
  %2129 = vmatprep.subr.bf16.mxu0 %v2111
  %2130 = vmatpush1.bf16.msra.mxu0 %v2110
  %2131 = vmatprep.subr.bf16.mxu0 0
  %2132 = vmatpush1.bf16.msra.mxu0 0
  %2133 = vmatprep.subr.bf16.mxu0 0
  %2134 = vmatpush1.bf16.msra.mxu0 0
  %2135 = vmatprep.subr.bf16.mxu0 0
  %2136 = vmatpush1.bf16.msra.mxu0 0
  %2137 = vmatprep.subr.bf16.mxu0 0
  %2138 = vmatpush1.bf16.msra.mxu0 0
  %2139 = vmatprep.subr.bf16.mxu0 0
  %2140 = vmatpush1.bf16.msra.mxu0 0
  %2141 = vmatprep.subr.bf16.mxu0 0
  %2142 = vmatpush1.bf16.msra.mxu0 0
  %2143 = vmatprep.subr.bf16.mxu0 0
  %2144 = vmatpush1.bf16.msra.mxu0 0
  %2145 = vmatprep.subr.bf16.mxu0 0
  %2146 = vmatpush1.bf16.msra.mxu0 0
  %2147 = vmatprep.subr.bf16.mxu0 0
  %2148 = vmatpush1.bf16.msra.mxu0 0
  %2149 = vmatprep.subr.bf16.mxu0 0
  %2150 = vmatpush1.bf16.msra.mxu0 0
  %2151 = vmatprep.subr.bf16.mxu0 0
  %2152 = vmatpush1.bf16.msra.mxu0 0
  %2153 = vmatprep.subr.bf16.mxu0 0
  %2154 = vmatpush1.bf16.msra.mxu0 0
  %2155 = vmatprep.mubr.bf16.mxu0 0
  %2156 = vmatmul.mubr.bf16.gmra.mrb[0].mxu0 %v2121
  %v2157 = vpop.f32.mrb[0].mxu0
  %v2158 = vadd.f32 0.0, %v2157
  %v2159 = vpop.f32.mrb[0].mxu0
  %v2160 = vadd.f32 0.0, %v2159
  %v2161 = vpop.f32.mrb[0].mxu0
  %v2162 = vadd.f32 0.0, %v2161
  %v2163 = vpop.f32.mrb[0].mxu0
  %v2164 = vadd.f32 0.0, %v2163
  %2165 = vdwg.mxu0
  %s2166 = scalar_lea.vmem %s14, 64
  %v2167 = vld [vmem:[%s2166] sm:$0xff]
  %v2168 = vld [vmem:[%s2166 + $0x8] sm:$0xff]
  %v2169 = vld [vmem:[%s2166 + $0x10] sm:$0xff]
  %v2170 = vld [vmem:[%s2166 + $0x18] sm:$0xff]
  %v2171 = vld [vmem:[%s2166 + $0x20] sm:$0xff]
  %v2172 = vld [vmem:[%s2166 + $0x28] sm:$0xff]
  %v2173 = vld [vmem:[%s2166 + $0x30] sm:$0xff]
  %v2174 = vld [vmem:[%s2166 + $0x38] sm:$0xff]
  %v2183 = vunpack.c.l.b16 %v2167
  %v2184 = vunpack.c.h.b16 %v2167
  %v2185 = vunpack.c.l.b16 %v2168
  %v2186 = vunpack.c.h.b16 %v2168
  %v2187 = vunpack.c.l.b16 %v2169
  %v2188 = vunpack.c.h.b16 %v2169
  %v2189 = vunpack.c.l.b16 %v2170
  %v2190 = vunpack.c.h.b16 %v2170
  %v2191 = vunpack.c.l.b16 %v2171
  %v2192 = vunpack.c.h.b16 %v2171
  %v2193 = vunpack.c.l.b16 %v2172
  %v2194 = vunpack.c.h.b16 %v2172
  %v2195 = vunpack.c.l.b16 %v2173
  %v2196 = vunpack.c.h.b16 %v2173
  %v2197 = vunpack.c.l.b16 %v2174
  %v2198 = vunpack.c.h.b16 %v2174
  %v2199 = vpack.c.b16 %v2185, %v2183
  %v2200 = vpack.c.b16 %v2186, %v2184
  %v2201 = vpack.c.b16 %v2189, %v2187
  %v2202 = vpack.c.b16 %v2190, %v2188
  %v2203 = vpack.c.b16 %v2193, %v2191
  %v2204 = vpack.c.b16 %v2194, %v2192
  %v2205 = vpack.c.b16 %v2197, %v2195
  %v2206 = vpack.c.b16 %v2198, %v2196
  %2215 = vmatprep.subr.bf16.mxu0 %v2200
  %2216 = vmatpush1.bf16.msra.mxu0 %v2199
  %2217 = vmatprep.subr.bf16.mxu0 %v2202
  %2218 = vmatpush1.bf16.msra.mxu0 %v2201
  %2219 = vmatprep.subr.bf16.mxu0 %v2204
  %2220 = vmatpush1.bf16.msra.mxu0 %v2203
  %2221 = vmatprep.subr.bf16.mxu0 %v2206
  %2222 = vmatpush1.bf16.msra.mxu0 %v2205
  %2223 = vmatprep.subr.bf16.mxu0 0
  %2224 = vmatpush1.bf16.msra.mxu0 0
  %2225 = vmatprep.subr.bf16.mxu0 0
  %2226 = vmatpush1.bf16.msra.mxu0 0
  %2227 = vmatprep.subr.bf16.mxu0 0
  %2228 = vmatpush1.bf16.msra.mxu0 0
  %2229 = vmatprep.subr.bf16.mxu0 0
  %2230 = vmatpush1.bf16.msra.mxu0 0
  %2231 = vmatprep.subr.bf16.mxu0 0
  %2232 = vmatpush1.bf16.msra.mxu0 0
  %2233 = vmatprep.subr.bf16.mxu0 0
  %2234 = vmatpush1.bf16.msra.mxu0 0
  %2235 = vmatprep.subr.bf16.mxu0 0
  %2236 = vmatpush1.bf16.msra.mxu0 0
  %2237 = vmatprep.subr.bf16.mxu0 0
  %2238 = vmatpush1.bf16.msra.mxu0 0
  %2239 = vmatprep.subr.bf16.mxu0 0
  %2240 = vmatpush1.bf16.msra.mxu0 0
  %2241 = vmatprep.subr.bf16.mxu0 0
  %2242 = vmatpush1.bf16.msra.mxu0 0
  %2243 = vmatprep.subr.bf16.mxu0 0
  %2244 = vmatpush1.bf16.msra.mxu0 0
  %2245 = vmatprep.subr.bf16.mxu0 0
  %2246 = vmatpush1.bf16.msra.mxu0 0
  %2247 = vmatprep.mubr.bf16.mxu0 0
  %2248 = vmatmul.mubr.bf16.gmra.mrb[0].mxu0 %v2121
  %v2249 = vpop.f32.mrb[0].mxu0
  %v2250 = vadd.f32 0.0, %v2249
  %v2251 = vpop.f32.mrb[0].mxu0
  %v2252 = vadd.f32 0.0, %v2251
  %v2253 = vpop.f32.mrb[0].mxu0
  %v2254 = vadd.f32 0.0, %v2253
  %v2255 = vpop.f32.mrb[0].mxu0
  %v2256 = vadd.f32 0.0, %v2255
  %2257 = vdwg.mxu0
  %v2258 = vxor.u32 %v2158, 2147483648
  %v2259 = vxor.u32 %v2160, 2147483648
  %v2260 = vxor.u32 %v2162, 2147483648
  %v2261 = vxor.u32 %v2164, 2147483648
  %v2262 = vmul.f32 %v2258, 1.442695
  %v2263 = vpow.pop %v2262
  %v2264 = vmul.f32 %v2259, 1.442695
  %v2265 = vpow.pop %v2264
  %v2266 = vmul.f32 %v2260, 1.442695
  %v2267 = vpow.pop %v2266
  %v2268 = vmul.f32 %v2261, 1.442695
  %v2269 = vpow.pop %v2268
  %v2270 = vadd.f32 %v2263, 1.0
  %v2271 = vadd.f32 %v2265, 1.0
  %v2272 = vadd.f32 %v2267, 1.0
  %v2273 = vadd.f32 %v2269, 1.0
  %v2274 = vrcp.pop %v2270
  %v2275 = vmul.f32 1.0, %v2274
  %v2276 = vrcp.pop %v2271
  %v2277 = vmul.f32 1.0, %v2276
  %v2278 = vrcp.pop %v2272
  %v2279 = vmul.f32 1.0, %v2278
  %v2280 = vrcp.pop %v2273
  %v2281 = vmul.f32 1.0, %v2280
  %v2282 = vmul.f32 %v2158, %v2275
  %v2283 = vmul.f32 %v2160, %v2277
  %v2284 = vmul.f32 %v2162, %v2279
  %v2285 = vmul.f32 %v2164, %v2281
  %v2286 = vmul.f32 %v2282, %v2250
  %v2287 = vmul.f32 %v2283, %v2252
  %v2288 = vmul.f32 %v2284, %v2254
  %v2289 = vmul.f32 %v2285, %v2256
  %v2290 = vpack.c.bf16 %v2288, %v2286
  %v2291 = vpack.c.bf16 %v2289, %v2287
  %s2292 = scalar_lea.vmem %s13, 96
  %v2293 = vld [vmem:[%s2292] sm:$0xf]
  %v2294 = vld [vmem:[%s2292 + $0x4] sm:$0xf]
  %v2295 = vld [vmem:[%s2292 + $0x8] sm:$0xf]
  %v2296 = vld [vmem:[%s2292 + $0xc] sm:$0xf]
  %v2297 = vld [vmem:[%s2292 + $0x10] sm:$0xf]
  %v2298 = vld [vmem:[%s2292 + $0x14] sm:$0xf]
  %v2299 = vld [vmem:[%s2292 + $0x18] sm:$0xf]
  %v2300 = vld [vmem:[%s2292 + $0x1c] sm:$0xf]
  %v2301 = vld [vmem:[%s2292 + $0x20] sm:$0xf]
  %v2302 = vld [vmem:[%s2292 + $0x24] sm:$0xf]
  %v2303 = vld [vmem:[%s2292 + $0x28] sm:$0xf]
  %v2304 = vld [vmem:[%s2292 + $0x2c] sm:$0xf]
  %v2305 = vld [vmem:[%s2292 + $0x30] sm:$0xf]
  %v2306 = vld [vmem:[%s2292 + $0x34] sm:$0xf]
  %v2307 = vld [vmem:[%s2292 + $0x38] sm:$0xf]
  %v2308 = vld [vmem:[%s2292 + $0x3c] sm:$0xf]
  %v2309 = vld [vmem:[%s2292 + $0x40] sm:$0xf]
  %v2310 = vld [vmem:[%s2292 + $0x44] sm:$0xf]
  %v2311 = vld [vmem:[%s2292 + $0x48] sm:$0xf]
  %v2312 = vld [vmem:[%s2292 + $0x4c] sm:$0xf]
  %v2313 = vld [vmem:[%s2292 + $0x50] sm:$0xf]
  %v2314 = vld [vmem:[%s2292 + $0x54] sm:$0xf]
  %v2315 = vld [vmem:[%s2292 + $0x58] sm:$0xf]
  %v2316 = vld [vmem:[%s2292 + $0x5c] sm:$0xf]
  %v2341 = vunpack.c.l.b16 %v2293
  %v2342 = vunpack.c.l.b16 %v2294
  %v2343 = vunpack.c.l.b16 %v2295
  %v2344 = vunpack.c.l.b16 %v2296
  %v2345 = vunpack.c.l.b16 %v2297
  %v2346 = vunpack.c.l.b16 %v2298
  %v2347 = vunpack.c.l.b16 %v2299
  %v2348 = vunpack.c.l.b16 %v2300
  %v2349 = vunpack.c.l.b16 %v2301
  %v2350 = vunpack.c.l.b16 %v2302
  %v2351 = vunpack.c.l.b16 %v2303
  %v2352 = vunpack.c.l.b16 %v2304
  %v2353 = vunpack.c.l.b16 %v2305
  %v2354 = vunpack.c.l.b16 %v2306
  %v2355 = vunpack.c.l.b16 %v2307
  %v2356 = vunpack.c.l.b16 %v2308
  %v2357 = vunpack.c.l.b16 %v2309
  %v2358 = vunpack.c.l.b16 %v2310
  %v2359 = vunpack.c.l.b16 %v2311
  %v2360 = vunpack.c.l.b16 %v2312
  %v2361 = vunpack.c.l.b16 %v2313
  %v2362 = vunpack.c.l.b16 %v2314
  %v2363 = vunpack.c.l.b16 %v2315
  %v2364 = vunpack.c.l.b16 %v2316
  %v2365 = vpack.c.b16 %v2342, %v2341
  %v2366 = vpack.c.b16 %v2344, %v2343
  %v2367 = vpack.c.b16 %v2346, %v2345
  %v2368 = vpack.c.b16 %v2348, %v2347
  %v2369 = vpack.c.b16 %v2350, %v2349
  %v2370 = vpack.c.b16 %v2352, %v2351
  %v2371 = vpack.c.b16 %v2354, %v2353
  %v2372 = vpack.c.b16 %v2356, %v2355
  %v2373 = vpack.c.b16 %v2358, %v2357
  %v2374 = vpack.c.b16 %v2360, %v2359
  %v2375 = vpack.c.b16 %v2362, %v2361
  %v2376 = vpack.c.b16 %v2364, %v2363
  %v2390 = vsel %vm76, %v2291, 0
  %2392 = vmatprep.subr.bf16.mxu0 0
  %2393 = vmatpush1.bf16.msra.mxu0 %v2365
  %2394 = vmatprep.subr.bf16.mxu0 0
  %2395 = vmatpush1.bf16.msra.mxu0 %v2366
  %2396 = vmatprep.subr.bf16.mxu0 0
  %2397 = vmatpush1.bf16.msra.mxu0 %v2367
  %2398 = vmatprep.subr.bf16.mxu0 0
  %2399 = vmatpush1.bf16.msra.mxu0 %v2368
  %2400 = vmatprep.subr.bf16.mxu0 0
  %2401 = vmatpush1.bf16.msra.mxu0 %v2369
  %2402 = vmatprep.subr.bf16.mxu0 0
  %2403 = vmatpush1.bf16.msra.mxu0 %v2370
  %2404 = vmatprep.subr.bf16.mxu0 0
  %2405 = vmatpush1.bf16.msra.mxu0 %v2371
  %2406 = vmatprep.subr.bf16.mxu0 0
  %2407 = vmatpush1.bf16.msra.mxu0 %v2372
  %2408 = vmatprep.subr.bf16.mxu0 0
  %2409 = vmatpush1.bf16.msra.mxu0 %v2373
  %2410 = vmatprep.subr.bf16.mxu0 0
  %2411 = vmatpush1.bf16.msra.mxu0 %v2374
  %2412 = vmatprep.subr.bf16.mxu0 0
  %2413 = vmatpush1.bf16.msra.mxu0 %v2375
  %2414 = vmatprep.subr.bf16.mxu0 0
  %2415 = vmatpush1.bf16.msra.mxu0 %v2376
  %2416 = vmatprep.subr.bf16.mxu0 0
  %2417 = vmatpush1.bf16.msra.mxu0 0
  %2418 = vmatprep.subr.bf16.mxu0 0
  %2419 = vmatpush1.bf16.msra.mxu0 0
  %2420 = vmatprep.subr.bf16.mxu0 0
  %2421 = vmatpush1.bf16.msra.mxu0 0
  %2422 = vmatprep.subr.bf16.mxu0 0
  %2423 = vmatpush1.bf16.msra.mxu0 0
  %2424 = vmatprep.mubr.bf16.mxu0 %v2390
  %2425 = vmatmul.mubr.bf16.gmra.mrb[0].mxu0 %v2290
  %v2426 = vpop.f32.mrb[0].mxu0
  %v2427 = vadd.f32 0.0, %v2426
  %v2428 = vpop.f32.mrb[0].mxu0
  %v2429 = vpop.f32.mrb[0].mxu0
  %v2430 = vadd.f32 0.0, %v2429
  %v2431 = vpop.f32.mrb[0].mxu0
  %2432 = vdwg.mxu0
  %v2433 = vadd.f32 %v2042, %v2427
  %v2434 = vadd.f32 %v2043, %v2430
  %v2436 = vrot.slane %v2433, 7
  %v2439 = vrot.slane %v2434, 6
  %vm2441 = vcmask 1040384
  %v2442 = vsel %vm2441, %v2436, %v2439
  %v2443 = vld [vmem:[%s15] sm:$0x1]
  %v2444 = vmul.f32 %v2442, %v2442
  %vm2445 = vcmask 517120
  %v2446 = vsel %vm2445, %v2444, 0.0
  %2447 = vadd.xlane.f32.xlu0 %v2446
  %v2448 = vpop.xlane.xlu0 %2447
  %v2449 = vmul.f32 %v2448, %v83
  %v2450 = vadd.f32 %v2449, 1e-05
  %v2451 = vrsqrt.pop %v2450
  %v2452 = vmul.f32 %v2442, %v2451
  %v2454 = vlaneseq
  %v2455 = vshrl.u32 %v2454, 7
  %v2456 = vsub.s32 0, %v2455
  %v2457 = vrot.slane %v2443, %v2456
  %v2459 = vmul.f32 %v2452, %v2457
  %v2460 = vpack.c.bf16 %v2459, %v2459
  %v2461 = vld [vmem:[%s16] sm:$0xff]
  %v2462 = vld [vmem:[%s16 + $0x8] sm:$0xff]
  %v2463 = vld [vmem:[%s16 + $0x10] sm:$0xff]
  %v2464 = vld [vmem:[%s16 + $0x18] sm:$0xff]
  %v2465 = vld [vmem:[%s16 + $0x20] sm:$0xff]
  %v2466 = vld [vmem:[%s16 + $0x28] sm:$0xff]
  %v2467 = vld [vmem:[%s16 + $0x30] sm:$0xff]
  %v2468 = vld [vmem:[%s16 + $0x38] sm:$0xff]
  %v2477 = vunpack.c.l.b16 %v2461
  %v2478 = vunpack.c.h.b16 %v2461
  %v2479 = vunpack.c.l.b16 %v2462
  %v2480 = vunpack.c.h.b16 %v2462
  %v2481 = vunpack.c.l.b16 %v2463
  %v2482 = vunpack.c.h.b16 %v2463
  %v2483 = vunpack.c.l.b16 %v2464
  %v2484 = vunpack.c.h.b16 %v2464
  %v2485 = vunpack.c.l.b16 %v2465
  %v2486 = vunpack.c.h.b16 %v2465
  %v2487 = vunpack.c.l.b16 %v2466
  %v2488 = vunpack.c.h.b16 %v2466
  %v2489 = vunpack.c.l.b16 %v2467
  %v2490 = vunpack.c.h.b16 %v2467
  %v2491 = vunpack.c.l.b16 %v2468
  %v2492 = vunpack.c.h.b16 %v2468
  %v2493 = vpack.c.b16 %v2479, %v2477
  %v2494 = vpack.c.b16 %v2480, %v2478
  %v2495 = vpack.c.b16 %v2483, %v2481
  %v2496 = vpack.c.b16 %v2484, %v2482
  %v2497 = vpack.c.b16 %v2487, %v2485
  %v2498 = vpack.c.b16 %v2488, %v2486
  %v2499 = vpack.c.b16 %v2491, %v2489
  %v2500 = vpack.c.b16 %v2492, %v2490
  %v2510 = vsel %vm76, %v2460, 0
  %2512 = vmatprep.subr.bf16.mxu0 %v2494
  %2513 = vmatpush1.bf16.msra.mxu0 %v2493
  %2514 = vmatprep.subr.bf16.mxu0 %v2496
  %2515 = vmatpush1.bf16.msra.mxu0 %v2495
  %2516 = vmatprep.subr.bf16.mxu0 %v2498
  %2517 = vmatpush1.bf16.msra.mxu0 %v2497
  %2518 = vmatprep.subr.bf16.mxu0 %v2500
  %2519 = vmatpush1.bf16.msra.mxu0 %v2499
  %2520 = vmatprep.subr.bf16.mxu0 0
  %2521 = vmatpush1.bf16.msra.mxu0 0
  %2522 = vmatprep.subr.bf16.mxu0 0
  %2523 = vmatpush1.bf16.msra.mxu0 0
  %2524 = vmatprep.subr.bf16.mxu0 0
  %2525 = vmatpush1.bf16.msra.mxu0 0
  %2526 = vmatprep.subr.bf16.mxu0 0
  %2527 = vmatpush1.bf16.msra.mxu0 0
  %2528 = vmatprep.subr.bf16.mxu0 0
  %2529 = vmatpush1.bf16.msra.mxu0 0
  %2530 = vmatprep.subr.bf16.mxu0 0
  %2531 = vmatpush1.bf16.msra.mxu0 0
  %2532 = vmatprep.subr.bf16.mxu0 0
  %2533 = vmatpush1.bf16.msra.mxu0 0
  %2534 = vmatprep.subr.bf16.mxu0 0
  %2535 = vmatpush1.bf16.msra.mxu0 0
  %2536 = vmatprep.subr.bf16.mxu0 0
  %2537 = vmatpush1.bf16.msra.mxu0 0
  %2538 = vmatprep.subr.bf16.mxu0 0
  %2539 = vmatpush1.bf16.msra.mxu0 0
  %2540 = vmatprep.subr.bf16.mxu0 0
  %2541 = vmatpush1.bf16.msra.mxu0 0
  %2542 = vmatprep.subr.bf16.mxu0 0
  %2543 = vmatpush1.bf16.msra.mxu0 0
  %2544 = vmatprep.mubr.bf16.mxu0 0
  %2545 = vmatmul.mubr.bf16.gmra.mrb[0].mxu0 %v2510
  %v2546 = vpop.f32.mrb[0].mxu0
  %v2547 = vadd.f32 0.0, %v2546
  %v2548 = vpop.f32.mrb[0].mxu0
  %v2549 = vadd.f32 0.0, %v2548
  %v2550 = vpop.f32.mrb[0].mxu0
  %v2551 = vpop.f32.mrb[0].mxu0
  %2552 = vdwg.mxu0
  %v2555 = vcombine.low %v2547, %v2549
  %v2557 = vunpack.c.l.s4 1983009808
  %v2558 = vunpack.c.0.s8 %v2557
  %v2559 = vlaneseq
  %v2560 = vshrl.u32 %v2559, 7
  %v2561 = vsub.s32 %v2558, %v2560
  %v2562 = vrot.slane %v2555, %v2561
  %2564 = vst [vmem:[%s17] sm:$0xf] %v2562
  // Predicated region
  $region70: #{transformer_forward.1} parent=0 // pred_check
    _
  $region71: #{transformer_forward.1} parent=0 // pred_check_branch
    %2566 = sbr.rel (0) target = $region73
  $region72: #{transformer_forward.1} parent=0 // pred_region
    _
  $region73: #{transformer_forward.1} parent=0 // pred_fallthru
    _
  // Predicated region
  $region74: #{transformer_forward.1} parent=0 // pred_check
    _
  $region75: #{transformer_forward.1} parent=0 // pred_check_branch
    %2568 = sbr.rel (0) target = $region77
  $region76: #{transformer_forward.1} parent=0 // pred_region
    _
  $region77: #{transformer_forward.1} parent=0 // pred_fallthru
    _

</llo_original>
